<compile_context>
chip_gen: v7x
topology: tpu7x:2x2x1
jax: 0.10.0
libtpu: 0.0.40
codegen_flags: <defaults>
</compile_context>

<pallas_src>
import jax
import jax.numpy as jnp
from jax.experimental import pallas as pl
from jax.experimental.pallas import tpu as pltpu

# Matmul operand dtype. Keep f32 to match PyTorch numerics exactly; on v6e/v7x
# set to jnp.bfloat16 to roughly halve matmul cost (accumulation and all
# epilogue math stay f32 regardless).
MATMUL_DTYPE = jnp.float32


def _dot(a, b):
    return jnp.dot(a.astype(MATMUL_DTYPE), b.astype(MATMUL_DTYPE),
                   preferred_element_type=jnp.float32)


# ------------------------------- fused kernel -------------------------------

def down_block_kernel(x_ref, w_exp_ref, b_exp_ref, s_bn_ref, b_bn_ref,
                      w_norm_ref, b_norm_ref, w_zoom_ref, b_zoom_ref,
                      w_skip_ref, b_skip_ref, out_ref, pool_ref):
    _, H, W, Cout = out_ref.shape
    Cin = x_ref.shape[3]
    Ce = w_exp_ref.shape[1]

    xf = x_ref[0].astype(jnp.float32).reshape(H * W, Cin)

    # skip_conv first so xf's live range ends as early as possible.
    s = jnp.maximum(_dot(xf, w_skip_ref[...]) + b_skip_ref[...], 0.0)

    # expansion_conv (BN scale pre-folded into the weight) + ReLU, then the
    # standalone self.bn + ReLU6 fused into the same epilogue (no HBM pass).
    t = jnp.maximum(_dot(xf, w_exp_ref[...]) + b_exp_ref[...], 0.0)
    t = jnp.minimum(jnp.maximum(t * s_bn_ref[...] + b_bn_ref[...], 0.0), 6.0)

    # norm_conv: 3x3 conv, padding=1. Build the H-padded activation plus two
    # W-shifted copies (columns w-1 / w+1); concatenate along channels so the
    # nine taps become three matmuls (one per dy) with K = 3*Ce. dy slices are
    # leading-axis slices of a value -> no relayout.
    t3 = t.reshape(H, W, Ce)
    zrow = jnp.zeros((1, W, Ce), jnp.float32)
    xc = jnp.concatenate([zrow, t3, zrow], axis=0)             # (H+2, W, Ce)
    zcol = jnp.zeros((H + 2, 1, Ce), jnp.float32)
    xm = jnp.concatenate([zcol, xc[:, :W - 1, :]], axis=1)     # column w-1 (dx=0)
    xp = jnp.concatenate([xc[:, 1:, :], zcol], axis=1)         # column w+1 (dx=2)
    big = jnp.concatenate([xm, xc, xp], axis=-1)               # (H+2, W, 3*Ce)

    acc = jnp.zeros((H * W, Ce), jnp.float32)
    for dy in range(3):
        acc = acc + _dot(big[dy:dy + H].reshape(H * W, 3 * Ce), w_norm_ref[dy])
    nrm = jnp.maximum(acc + b_norm_ref[...], 0.0)

    # zoom_conv (1x1 + folded BN + ReLU) and residual skip add.
    z = jnp.maximum(_dot(nrm, w_zoom_ref[...]) + b_zoom_ref[...], 0.0)
    full = (z + s).reshape(H, W, Cout)
    out_ref[0] = full.astype(out_ref.dtype)

    # MaxPool2d(2, 2) straight from the in-register f32 value: no re-read of
    # out_ref (its writeback DMA can start immediately), no strided ref reads.
    f4 = full.reshape(H // 2, 2, W, Cout)
    hmax = jnp.maximum(f4[:, 0], f4[:, 1])                     # (H/2, W, C)
    h4 = hmax.reshape(H // 2, W // 2, 2, Cout)
    pool_ref[0] = jnp.maximum(h4[:, :, 0, :], h4[:, :, 1, :]).astype(pool_ref.dtype)


# ------------------------------ module forward ------------------------------

def down_forward(x_nchw, p):
    """Down.forward: returns (RecombinationBlock(x), MaxPool2d(2,2)(...)), NCHW."""
    N, Cin, H, W = x_nchw.shape
    assert H % 2 == 0 and W % 2 == 0, "MaxPool2d(2,2) here requires even H, W"
    Ce = p['w_exp'].shape[1]
    Cout = p['w_zoom'].shape[1]

    # TODO(synk): keep NHWC end-to-end in a larger graph (and/or emit NCHW
    # inside the kernel) to delete these boundary transpose passes.
    x = jnp.transpose(x_nchw, (0, 2, 3, 1))      # NCHW -> NHWC

    img = lambda i: (i, 0, 0, 0)
    c2 = lambda i: (0, 0)
    c3 = lambda i: (0, 0, 0)

    out_nhwc, pool_nhwc = pl.pallas_call(
        down_block_kernel,
        out_shape=(jax.ShapeDtypeStruct((N, H, W, Cout), x.dtype),
                   jax.ShapeDtypeStruct((N, H // 2, W // 2, Cout), x.dtype)),
        grid=(N,),
        in_specs=[
            pl.BlockSpec((1, H, W, Cin), img),
            pl.BlockSpec((Cin, Ce), c2), pl.BlockSpec((1, Ce), c2),
            pl.BlockSpec((1, Ce), c2), pl.BlockSpec((1, Ce), c2),
            pl.BlockSpec((3, 3 * Ce, Ce), c3), pl.BlockSpec((1, Ce), c2),
            pl.BlockSpec((Ce, Cout), c2), pl.BlockSpec((1, Cout), c2),
            pl.BlockSpec((Cin, Cout), c2), pl.BlockSpec((1, Cout), c2),
        ],
        out_specs=(pl.BlockSpec((1, H, W, Cout), img),
                   pl.BlockSpec((1, H // 2, W // 2, Cout), img)),
        compiler_params=pltpu.CompilerParams(
            dimension_semantics=("parallel",),      # N>=2 -> both v7x TCs busy
            vmem_limit_bytes=64 * 1024 * 1024),     # raise to ~100 MiB on v5e/v6e
    )(x, p['w_exp'], p['b_exp'], p['s_bn'], p['b_bn'],
      p['w_norm'], p['b_norm'], p['w_zoom'], p['b_zoom'],
      p['w_skip'], p['b_skip'])

    return (jnp.transpose(out_nhwc, (0, 3, 1, 2)),
            jnp.transpose(pool_nhwc, (0, 3, 1, 2)))


# --------------------------- pure-JAX reference -----------------------------

def down_ref(x_nchw, p):
    x = jnp.transpose(x_nchw, (0, 2, 3, 1))
    N, H, W, _ = x.shape
    ce = p['w_exp'].shape[1]

    def cbr(v, w, b):                    # 1x1 conv (BN scale pre-folded) + ReLU
        return jnp.maximum(jnp.einsum('nhwc,cd->nhwd', v, w) + b, 0.0)

    e = cbr(x, p['w_exp'], p['b_exp'])
    e = jnp.clip(e * p['s_bn'] + p['b_bn'], 0.0, 6.0)
    ep = jnp.pad(e, ((0, 0), (1, 1), (1, 1), (0, 0)))
    acc = 0.0
    for dy in range(3):
        for dx in range(3):
            wblk = p['w_norm'][dy, dx * ce:(dx + 1) * ce, :]
            acc = acc + jnp.einsum('nhwc,cd->nhwd',
                                   ep[:, dy:dy + H, dx:dx + W, :], wblk)
    nrm = jnp.maximum(acc + p['b_norm'], 0.0)
    out = cbr(nrm, p['w_zoom'], p['b_zoom']) + cbr(x, p['w_skip'], p['b_skip'])
    pooled = out.reshape(N, H // 2, 2, W // 2, 2, -1).max(axis=(2, 4))
    return (jnp.transpose(out, (0, 3, 1, 2)),
            jnp.transpose(pooled, (0, 3, 1, 2)))


# ------------------------- deterministic parameters -------------------------

def init_params(key, cin, cout, eps=1e-5):
    ce = cout * 2  # expan_channels = out_channels * rate(=2)
    keys = iter(jax.random.split(key, 32))

    def nrm(shape, s=0.2):
        return s * jax.random.normal(next(keys), shape, dtype=jnp.float32)

    def bn(c):
        gamma = 1.0 + 0.1 * jax.random.normal(next(keys), (c,), jnp.float32)
        beta = 0.1 * jax.random.normal(next(keys), (c,), jnp.float32)
        mean = 0.1 * jax.random.normal(next(keys), (c,), jnp.float32)
        var = 1.0 + 0.1 * jnp.abs(jax.random.normal(next(keys), (c,), jnp.float32))
        return gamma, beta, mean, var

    def fold(bias, bnp):
        gamma, beta, mean, var = bnp
        scale = gamma / jnp.sqrt(var + eps)
        shift = beta + scale * (bias - mean)
        return scale[None, :], shift[None, :]

    p = {}
    # expansion_conv: Conv2d(cin, ce, 1) + BN(ce) + ReLU (scale folded into w)
    w, b = nrm((ce, cin, 1, 1)), nrm((ce,), 0.1)
    s, sh = fold(b, bn(ce))
    p['w_exp'] = jnp.transpose(w[:, :, 0, 0], (1, 0)) * s
    p['b_exp'] = sh
    # standalone self.bn = BN(ce)  (kept as scale/shift: sits between two ReLUs)
    gamma, beta, mean, var = bn(ce)
    scale = gamma / jnp.sqrt(var + eps)
    p['s_bn'] = scale[None, :]
    p['b_bn'] = (beta - scale * mean)[None, :]
    # norm_conv: Conv2d(ce, ce, 3, padding=1) + BN(ce) + ReLU
    # weight layout (dy, dx*ce + ci, co) to match the dx-concatenated taps.
    w, b = nrm((ce, ce, 3, 3)), nrm((ce,), 0.1)
    s, sh = fold(b, bn(ce))
    p['w_norm'] = jnp.transpose(w, (2, 3, 1, 0)).reshape(3, 3 * ce, ce) * s
    p['b_norm'] = sh
    # zoom_conv: Conv2d(ce, cout, 1) + BN(cout) + ReLU
    w, b = nrm((cout, ce, 1, 1)), nrm((cout,), 0.1)
    s, sh = fold(b, bn(cout))
    p['w_zoom'] = jnp.transpose(w[:, :, 0, 0], (1, 0)) * s
    p['b_zoom'] = sh
    # skip_conv: Conv2d(cin, cout, 1) + BN(cout) + ReLU
    w, b = nrm((cout, cin, 1, 1)), nrm((cout,), 0.1)
    s, sh = fold(b, bn(cout))
    p['w_skip'] = jnp.transpose(w[:, :, 0, 0], (1, 0)) * s
    p['b_skip'] = sh
    return p


if __name__ == "__main__":
    key = jax.random.PRNGKey(0)
    kx, kp = jax.random.split(key)
    N, Cin, H, W = 2, 4, 16, 16
    Cout = 8

    x = jax.random.normal(kx, (N, Cin, H, W), dtype=jnp.float32)
    params = init_params(kp, Cin, Cout)

    fwd = jax.jit(lambda a: down_forward(a, params))
    x_full, pooled = fwd(x)
    jax.block_until_ready((x_full, pooled))

    assert x_full.shape == (N, Cout, H, W), x_full.shape
    assert pooled.shape == (N, Cout, H // 2, W // 2), pooled.shape
    assert x_full.dtype == jnp.float32 and pooled.dtype == jnp.float32

    # validate against a pure-JAX reference of the same folded-BN math
    r_full, r_pool = jax.jit(lambda a: down_ref(a, params))(x)
    assert jnp.allclose(x_full, r_full, rtol=1e-3, atol=1e-3), \
        float(jnp.max(jnp.abs(x_full - r_full)))
    assert jnp.allclose(pooled, r_pool, rtol=1e-3, atol=1e-3), \
        float(jnp.max(jnp.abs(pooled - r_pool)))

    print("KERNEL_OK")
</pallas_src>

<mosaic_0001>
module attributes {stable_mosaic.version = 11 : i64} {
  func.func @down_block_kernel(%arg0: i32, %arg1: memref<1x16x16x4xf32, #tpu.memory_space<vmem>>, %arg2: memref<4x16xf32, #tpu.memory_space<vmem>>, %arg3: memref<1x16xf32, #tpu.memory_space<vmem>>, %arg4: memref<1x16xf32, #tpu.memory_space<vmem>>, %arg5: memref<1x16xf32, #tpu.memory_space<vmem>>, %arg6: memref<3x48x16xf32, #tpu.memory_space<vmem>>, %arg7: memref<1x16xf32, #tpu.memory_space<vmem>>, %arg8: memref<16x8xf32, #tpu.memory_space<vmem>>, %arg9: memref<1x8xf32, #tpu.memory_space<vmem>>, %arg10: memref<4x8xf32, #tpu.memory_space<vmem>>, %arg11: memref<1x8xf32, #tpu.memory_space<vmem>>, %arg12: memref<1x16x16x8xf32, #tpu.memory_space<vmem>>, %arg13: memref<1x8x8x8xf32, #tpu.memory_space<vmem>>) attributes {dimension_semantics = [#tpu.dimension_semantics<parallel>], iteration_bounds = array<i64: 2>, scalar_prefetch = 0 : i64, scratch_operands = 0 : i64, tpu.core_type = #tpu.core_type<tc>, window_params = [{transform_indices = @transform_0, window_bounds = array<i64: 1, 16, 16, 4>}, {pipeline_mode = #tpu.pipeline_mode<synchronous>, transform_indices = @transform_1, window_bounds = array<i64: 4, 16>}, {pipeline_mode = #tpu.pipeline_mode<synchronous>, transform_indices = @transform_2, window_bounds = array<i64: 1, 16>}, {pipeline_mode = #tpu.pipeline_mode<synchronous>, transform_indices = @transform_3, window_bounds = array<i64: 1, 16>}, {pipeline_mode = #tpu.pipeline_mode<synchronous>, transform_indices = @transform_4, window_bounds = array<i64: 1, 16>}, {pipeline_mode = #tpu.pipeline_mode<synchronous>, transform_indices = @transform_5, window_bounds = array<i64: 3, 48, 16>}, {pipeline_mode = #tpu.pipeline_mode<synchronous>, transform_indices = @transform_6, window_bounds = array<i64: 1, 16>}, {pipeline_mode = #tpu.pipeline_mode<synchronous>, transform_indices = @transform_7, window_bounds = array<i64: 16, 8>}, {pipeline_mode = #tpu.pipeline_mode<synchronous>, transform_indices = @transform_8, window_bounds = array<i64: 1, 8>}, {pipeline_mode = #tpu.pipeline_mode<synchronous>, transform_indices = @transform_9, window_bounds = array<i64: 4, 8>}, {pipeline_mode = #tpu.pipeline_mode<synchronous>, transform_indices = @transform_10, window_bounds = array<i64: 1, 8>}, {transform_indices = @transform_11, window_bounds = array<i64: 1, 16, 16, 8>}, {transform_indices = @transform_12, window_bounds = array<i64: 1, 8, 8, 8>}]} {
    %c0 = arith.constant 0 : index
    %c0_0 = arith.constant 0 : index
    %c0_1 = arith.constant 0 : index
    %c0_2 = arith.constant 0 : index
    %0 = vector.load %arg1[%c0, %c0_0, %c0_1, %c0_2] : memref<1x16x16x4xf32, #tpu.memory_space<vmem>>, vector<1x16x16x4xf32>
    %1 = vector.shape_cast %0 : vector<1x16x16x4xf32> to vector<16x16x4xf32>
    %2 = vector.shape_cast %1 : vector<16x16x4xf32> to vector<256x4xf32>
    %c0_3 = arith.constant 0 : index
    %c0_4 = arith.constant 0 : index
    %3 = vector.load %arg10[%c0_3, %c0_4] : memref<4x8xf32, #tpu.memory_space<vmem>>, vector<4x8xf32>
    %cst = arith.constant dense<0.000000e+00> : vector<256x8xf32>
    %4 = tpu.matmul %2, %3, %cst {dimension_numbers = #tpu.dot_dimension_numbers<[1], [0], [0], [1], [0, 0, 1, 1], [], []>} : vector<256x4xf32>, vector<4x8xf32>, vector<256x8xf32> -> vector<256x8xf32>
    %c0_5 = arith.constant 0 : index
    %c0_6 = arith.constant 0 : index
    %5 = vector.load %arg11[%c0_5, %c0_6] : memref<1x8xf32, #tpu.memory_space<vmem>>, vector<1x8xf32>
    %6 = vector.broadcast %5 : vector<1x8xf32> to vector<256x8xf32>
    %7 = arith.addf %4, %6 : vector<256x8xf32>
    %cst_7 = arith.constant 0.000000e+00 : f32
    %8 = vector.broadcast %cst_7 : f32 to vector<256x8xf32>
    %9 = arith.maximumf %7, %8 : vector<256x8xf32>
    %c0_8 = arith.constant 0 : index
    %c0_9 = arith.constant 0 : index
    %10 = vector.load %arg2[%c0_8, %c0_9] : memref<4x16xf32, #tpu.memory_space<vmem>>, vector<4x16xf32>
    %cst_10 = arith.constant dense<0.000000e+00> : vector<256x16xf32>
    %11 = tpu.matmul %2, %10, %cst_10 {dimension_numbers = #tpu.dot_dimension_numbers<[1], [0], [0], [1], [0, 0, 1, 1], [], []>} : vector<256x4xf32>, vector<4x16xf32>, vector<256x16xf32> -> vector<256x16xf32>
    %c0_11 = arith.constant 0 : index
    %c0_12 = arith.constant 0 : index
    %12 = vector.load %arg3[%c0_11, %c0_12] : memref<1x16xf32, #tpu.memory_space<vmem>>, vector<1x16xf32>
    %13 = vector.broadcast %12 : vector<1x16xf32> to vector<256x16xf32>
    %14 = arith.addf %11, %13 : vector<256x16xf32>
    %cst_13 = arith.constant 0.000000e+00 : f32
    %15 = vector.broadcast %cst_13 : f32 to vector<256x16xf32>
    %16 = arith.maximumf %14, %15 : vector<256x16xf32>
    %c0_14 = arith.constant 0 : index
    %c0_15 = arith.constant 0 : index
    %17 = vector.load %arg4[%c0_14, %c0_15] : memref<1x16xf32, #tpu.memory_space<vmem>>, vector<1x16xf32>
    %18 = vector.broadcast %17 : vector<1x16xf32> to vector<256x16xf32>
    %19 = arith.mulf %16, %18 : vector<256x16xf32>
    %c0_16 = arith.constant 0 : index
    %c0_17 = arith.constant 0 : index
    %20 = vector.load %arg5[%c0_16, %c0_17] : memref<1x16xf32, #tpu.memory_space<vmem>>, vector<1x16xf32>
    %21 = vector.broadcast %20 : vector<1x16xf32> to vector<256x16xf32>
    %22 = arith.addf %19, %21 : vector<256x16xf32>
    %cst_18 = arith.constant 0.000000e+00 : f32
    %23 = vector.broadcast %cst_18 : f32 to vector<256x16xf32>
    %24 = arith.maximumf %22, %23 : vector<256x16xf32>
    %cst_19 = arith.constant 6.000000e+00 : f32
    %25 = vector.broadcast %cst_19 : f32 to vector<256x16xf32>
    %26 = arith.minimumf %24, %25 : vector<256x16xf32>
    %27 = vector.shape_cast %26 : vector<256x16xf32> to vector<16x16x16xf32>
    %cst_20 = arith.constant 0.000000e+00 : f32
    %28 = vector.broadcast %cst_20 : f32 to vector<1x16x16xf32>
    %29 = tpu.concatenate %28, %27, %28 in 0 : vector<1x16x16xf32>, vector<16x16x16xf32>, vector<1x16x16xf32> -> vector<18x16x16xf32>
    %cst_21 = arith.constant 0.000000e+00 : f32
    %30 = vector.broadcast %cst_21 : f32 to vector<18x1x16xf32>
    %31 = vector.extract_strided_slice %29 {offsets = [0, 0, 0], sizes = [18, 15, 16], strides = [1, 1, 1]} : vector<18x16x16xf32> to vector<18x15x16xf32>
    %32 = tpu.concatenate %30, %31 in 1 : vector<18x1x16xf32>, vector<18x15x16xf32> -> vector<18x16x16xf32>
    %33 = vector.extract_strided_slice %29 {offsets = [0, 1, 0], sizes = [18, 15, 16], strides = [1, 1, 1]} : vector<18x16x16xf32> to vector<18x15x16xf32>
    %34 = tpu.concatenate %33, %30 in 1 : vector<18x15x16xf32>, vector<18x1x16xf32> -> vector<18x16x16xf32>
    %35 = tpu.concatenate %32, %29, %34 in 2 : vector<18x16x16xf32>, vector<18x16x16xf32>, vector<18x16x16xf32> -> vector<18x16x48xf32>
    %cst_22 = arith.constant 0.000000e+00 : f32
    %36 = vector.broadcast %cst_22 : f32 to vector<256x16xf32>
    %37 = vector.extract_strided_slice %35 {offsets = [0, 0, 0], sizes = [16, 16, 48], strides = [1, 1, 1]} : vector<18x16x48xf32> to vector<16x16x48xf32>
    %38 = vector.shape_cast %37 : vector<16x16x48xf32> to vector<256x48xf32>
    %c0_23 = arith.constant 0 : index
    %c0_24 = arith.constant 0 : index
    %c0_25 = arith.constant 0 : index
    %39 = vector.load %arg6[%c0_23, %c0_24, %c0_25] : memref<3x48x16xf32, #tpu.memory_space<vmem>>, vector<1x48x16xf32>
    %40 = vector.shape_cast %39 : vector<1x48x16xf32> to vector<48x16xf32>
    %cst_26 = arith.constant dense<0.000000e+00> : vector<256x16xf32>
    %41 = tpu.matmul %38, %40, %cst_26 {dimension_numbers = #tpu.dot_dimension_numbers<[1], [0], [0], [1], [0, 0, 1, 1], [], []>} : vector<256x48xf32>, vector<48x16xf32>, vector<256x16xf32> -> vector<256x16xf32>
    %42 = arith.addf %36, %41 : vector<256x16xf32>
    %43 = vector.extract_strided_slice %35 {offsets = [1, 0, 0], sizes = [16, 16, 48], strides = [1, 1, 1]} : vector<18x16x48xf32> to vector<16x16x48xf32>
    %44 = vector.shape_cast %43 : vector<16x16x48xf32> to vector<256x48xf32>
    %c1 = arith.constant 1 : index
    %c0_27 = arith.constant 0 : index
    %c0_28 = arith.constant 0 : index
    %45 = vector.load %arg6[%c1, %c0_27, %c0_28] : memref<3x48x16xf32, #tpu.memory_space<vmem>>, vector<1x48x16xf32>
    %46 = vector.shape_cast %45 : vector<1x48x16xf32> to vector<48x16xf32>
    %cst_29 = arith.constant dense<0.000000e+00> : vector<256x16xf32>
    %47 = tpu.matmul %44, %46, %cst_29 {dimension_numbers = #tpu.dot_dimension_numbers<[1], [0], [0], [1], [0, 0, 1, 1], [], []>} : vector<256x48xf32>, vector<48x16xf32>, vector<256x16xf32> -> vector<256x16xf32>
    %48 = arith.addf %42, %47 : vector<256x16xf32>
    %49 = vector.extract_strided_slice %35 {offsets = [2, 0, 0], sizes = [16, 16, 48], strides = [1, 1, 1]} : vector<18x16x48xf32> to vector<16x16x48xf32>
    %50 = vector.shape_cast %49 : vector<16x16x48xf32> to vector<256x48xf32>
    %c2 = arith.constant 2 : index
    %c0_30 = arith.constant 0 : index
    %c0_31 = arith.constant 0 : index
    %51 = vector.load %arg6[%c2, %c0_30, %c0_31] : memref<3x48x16xf32, #tpu.memory_space<vmem>>, vector<1x48x16xf32>
    %52 = vector.shape_cast %51 : vector<1x48x16xf32> to vector<48x16xf32>
    %cst_32 = arith.constant dense<0.000000e+00> : vector<256x16xf32>
    %53 = tpu.matmul %50, %52, %cst_32 {dimension_numbers = #tpu.dot_dimension_numbers<[1], [0], [0], [1], [0, 0, 1, 1], [], []>} : vector<256x48xf32>, vector<48x16xf32>, vector<256x16xf32> -> vector<256x16xf32>
    %54 = arith.addf %48, %53 : vector<256x16xf32>
    %c0_33 = arith.constant 0 : index
    %c0_34 = arith.constant 0 : index
    %55 = vector.load %arg7[%c0_33, %c0_34] : memref<1x16xf32, #tpu.memory_space<vmem>>, vector<1x16xf32>
    %56 = vector.broadcast %55 : vector<1x16xf32> to vector<256x16xf32>
    %57 = arith.addf %54, %56 : vector<256x16xf32>
    %cst_35 = arith.constant 0.000000e+00 : f32
    %58 = vector.broadcast %cst_35 : f32 to vector<256x16xf32>
    %59 = arith.maximumf %57, %58 : vector<256x16xf32>
    %c0_36 = arith.constant 0 : index
    %c0_37 = arith.constant 0 : index
    %60 = vector.load %arg8[%c0_36, %c0_37] : memref<16x8xf32, #tpu.memory_space<vmem>>, vector<16x8xf32>
    %cst_38 = arith.constant dense<0.000000e+00> : vector<256x8xf32>
    %61 = tpu.matmul %59, %60, %cst_38 {dimension_numbers = #tpu.dot_dimension_numbers<[1], [0], [0], [1], [0, 0, 1, 1], [], []>} : vector<256x16xf32>, vector<16x8xf32>, vector<256x8xf32> -> vector<256x8xf32>
    %c0_39 = arith.constant 0 : index
    %c0_40 = arith.constant 0 : index
    %62 = vector.load %arg9[%c0_39, %c0_40] : memref<1x8xf32, #tpu.memory_space<vmem>>, vector<1x8xf32>
    %63 = vector.broadcast %62 : vector<1x8xf32> to vector<256x8xf32>
    %64 = arith.addf %61, %63 : vector<256x8xf32>
    %cst_41 = arith.constant 0.000000e+00 : f32
    %65 = vector.broadcast %cst_41 : f32 to vector<256x8xf32>
    %66 = arith.maximumf %64, %65 : vector<256x8xf32>
    %67 = arith.addf %66, %9 : vector<256x8xf32>
    %68 = vector.shape_cast %67 : vector<256x8xf32> to vector<16x16x8xf32>
    %c0_42 = arith.constant 0 : index
    %c0_43 = arith.constant 0 : index
    %c0_44 = arith.constant 0 : index
    %c0_45 = arith.constant 0 : index
    %69 = vector.load %arg12[%c0_42, %c0_43, %c0_44, %c0_45] : memref<1x16x16x8xf32, #tpu.memory_space<vmem>>, vector<1x16x16x8xf32>
    %70 = vector.shape_cast %69 : vector<1x16x16x8xf32> to vector<16x16x8xf32>
    %71 = vector.shape_cast %68 : vector<16x16x8xf32> to vector<1x16x16x8xf32>
    tpu.vector_store %arg12[%c0_42, %c0_43, %c0_44, %c0_45], %71 {strides = array<i32>} : memref<1x16x16x8xf32, #tpu.memory_space<vmem>>, vector<1x16x16x8xf32>,
    %72 = vector.shape_cast %68 : vector<16x16x8xf32> to vector<8x2x16x8xf32>
    %73 = vector.extract_strided_slice %72 {offsets = [0, 0, 0, 0], sizes = [8, 1, 16, 8], strides = [1, 1, 1, 1]} : vector<8x2x16x8xf32> to vector<8x1x16x8xf32>
    %74 = vector.shape_cast %73 : vector<8x1x16x8xf32> to vector<8x16x8xf32>
    %75 = vector.extract_strided_slice %72 {offsets = [0, 1, 0, 0], sizes = [8, 1, 16, 8], strides = [1, 1, 1, 1]} : vector<8x2x16x8xf32> to vector<8x1x16x8xf32>
    %76 = vector.shape_cast %75 : vector<8x1x16x8xf32> to vector<8x16x8xf32>
    %77 = arith.maximumf %74, %76 : vector<8x16x8xf32>
    %78 = vector.shape_cast %77 : vector<8x16x8xf32> to vector<8x8x2x8xf32>
    %79 = vector.extract_strided_slice %78 {offsets = [0, 0, 0, 0], sizes = [8, 8, 1, 8], strides = [1, 1, 1, 1]} : vector<8x8x2x8xf32> to vector<8x8x1x8xf32>
    %80 = vector.shape_cast %79 : vector<8x8x1x8xf32> to vector<8x8x8xf32>
    %81 = vector.extract_strided_slice %78 {offsets = [0, 0, 1, 0], sizes = [8, 8, 1, 8], strides = [1, 1, 1, 1]} : vector<8x8x2x8xf32> to vector<8x8x1x8xf32>
    %82 = vector.shape_cast %81 : vector<8x8x1x8xf32> to vector<8x8x8xf32>
    %83 = arith.maximumf %80, %82 : vector<8x8x8xf32>
    %c0_46 = arith.constant 0 : index
    %c0_47 = arith.constant 0 : index
    %c0_48 = arith.constant 0 : index
    %c0_49 = arith.constant 0 : index
    %84 = vector.load %arg13[%c0_46, %c0_47, %c0_48, %c0_49] : memref<1x8x8x8xf32, #tpu.memory_space<vmem>>, vector<1x8x8x8xf32>
    %85 = vector.shape_cast %84 : vector<1x8x8x8xf32> to vector<8x8x8xf32>
    %86 = vector.shape_cast %83 : vector<8x8x8xf32> to vector<1x8x8x8xf32>
    tpu.vector_store %arg13[%c0_46, %c0_47, %c0_48, %c0_49], %86 {strides = array<i32>} : memref<1x8x8x8xf32, #tpu.memory_space<vmem>>, vector<1x8x8x8xf32>,
    return
  }
  func.func @transform_0(%arg0: i32) -> (i32, i32, i32, i32) {
    %c0_i32 = arith.constant 0 : i32
    %c0_i32_0 = arith.constant 0 : i32
    %c0_i32_1 = arith.constant 0 : i32
    %c0_i32_2 = arith.constant 0 : i32
    return %arg0, %c0_i32, %c0_i32_0, %c0_i32_1 : i32, i32, i32, i32
  }
  func.func @transform_1(%arg0: i32) -> (i32, i32) {
    %c0_i32 = arith.constant 0 : i32
    %c0_i32_0 = arith.constant 0 : i32
    %c0_i32_1 = arith.constant 0 : i32
    return %c0_i32, %c0_i32_0 : i32, i32
  }
  func.func @transform_2(%arg0: i32) -> (i32, i32) {
    %c0_i32 = arith.constant 0 : i32
    %c0_i32_0 = arith.constant 0 : i32
    %c0_i32_1 = arith.constant 0 : i32
    return %c0_i32, %c0_i32_0 : i32, i32
  }
  func.func @transform_3(%arg0: i32) -> (i32, i32) {
    %c0_i32 = arith.constant 0 : i32
    %c0_i32_0 = arith.constant 0 : i32
    %c0_i32_1 = arith.constant 0 : i32
    return %c0_i32, %c0_i32_0 : i32, i32
  }
  func.func @transform_4(%arg0: i32) -> (i32, i32) {
    %c0_i32 = arith.constant 0 : i32
    %c0_i32_0 = arith.constant 0 : i32
    %c0_i32_1 = arith.constant 0 : i32
    return %c0_i32, %c0_i32_0 : i32, i32
  }
  func.func @transform_5(%arg0: i32) -> (i32, i32, i32) {
    %c0_i32 = arith.constant 0 : i32
    %c0_i32_0 = arith.constant 0 : i32
    %c0_i32_1 = arith.constant 0 : i32
    %c0_i32_2 = arith.constant 0 : i32
    return %c0_i32, %c0_i32_0, %c0_i32_1 : i32, i32, i32
  }
  func.func @transform_6(%arg0: i32) -> (i32, i32) {
    %c0_i32 = arith.constant 0 : i32
    %c0_i32_0 = arith.constant 0 : i32
    %c0_i32_1 = arith.constant 0 : i32
    return %c0_i32, %c0_i32_0 : i32, i32
  }
  func.func @transform_7(%arg0: i32) -> (i32, i32) {
    %c0_i32 = arith.constant 0 : i32
    %c0_i32_0 = arith.constant 0 : i32
    %c0_i32_1 = arith.constant 0 : i32
    return %c0_i32, %c0_i32_0 : i32, i32
  }
  func.func @transform_8(%arg0: i32) -> (i32, i32) {
    %c0_i32 = arith.constant 0 : i32
    %c0_i32_0 = arith.constant 0 : i32
    %c0_i32_1 = arith.constant 0 : i32
    return %c0_i32, %c0_i32_0 : i32, i32
  }
  func.func @transform_9(%arg0: i32) -> (i32, i32) {
    %c0_i32 = arith.constant 0 : i32
    %c0_i32_0 = arith.constant 0 : i32
    %c0_i32_1 = arith.constant 0 : i32
    return %c0_i32, %c0_i32_0 : i32, i32
  }
  func.func @transform_10(%arg0: i32) -> (i32, i32) {
    %c0_i32 = arith.constant 0 : i32
    %c0_i32_0 = arith.constant 0 : i32
    %c0_i32_1 = arith.constant 0 : i32
    return %c0_i32, %c0_i32_0 : i32, i32
  }
  func.func @transform_11(%arg0: i32) -> (i32, i32, i32, i32) {
    %c0_i32 = arith.constant 0 : i32
    %c0_i32_0 = arith.constant 0 : i32
    %c0_i32_1 = arith.constant 0 : i32
    %c0_i32_2 = arith.constant 0 : i32
    return %arg0, %c0_i32, %c0_i32_0, %c0_i32_1 : i32, i32, i32, i32
  }
  func.func @transform_12(%arg0: i32) -> (i32, i32, i32, i32) {
    %c0_i32 = arith.constant 0 : i32
    %c0_i32_0 = arith.constant 0 : i32
    %c0_i32_1 = arith.constant 0 : i32
    %c0_i32_2 = arith.constant 0 : i32
    return %arg0, %c0_i32, %c0_i32_0, %c0_i32_1 : i32, i32, i32, i32
  }
}

</mosaic_0001>

<llo_original>
// kernel: _lambda_.1
$region0: #{_lambda_.1}
  #allocation0 [shape = 'u32[]', space=smem, size = 0x4, offset = 0x4, fixed_abs, tag = 'smem constant byte address 0x4 - core index']
  #allocation1 [shape = 'u32[144,128]{1,0:T(1,128)}', space=vmem, size = 0x12000, scoped, tag = 'internal scratch']
  %s0 = inlined_call_operand.hbm [shape: f32[2,16,16,4], index: 0, kind: input, shape index: {}]
  %s1 = inlined_call_operand.hbm [shape: f32[4,16], index: 1, kind: input, shape index: {}]
  %s2 = inlined_call_operand.hbm [shape: f32[1,16], index: 2, kind: input, shape index: {}]
  %s3 = inlined_call_operand.hbm [shape: f32[1,16], index: 3, kind: input, shape index: {}]
  %s4 = inlined_call_operand.hbm [shape: f32[1,16], index: 4, kind: input, shape index: {}]
  %s5 = inlined_call_operand.hbm [shape: f32[3,48,16], index: 5, kind: input, shape index: {}]
  %s6 = inlined_call_operand.hbm [shape: f32[1,16], index: 6, kind: input, shape index: {}]
  %s7 = inlined_call_operand.hbm [shape: f32[16,8], index: 7, kind: input, shape index: {}]
  %s8 = inlined_call_operand.hbm [shape: f32[1,8], index: 8, kind: input, shape index: {}]
  %s9 = inlined_call_operand.hbm [shape: f32[4,8], index: 9, kind: input, shape index: {}]
  %s10 = inlined_call_operand.hbm [shape: f32[1,8], index: 10, kind: input, shape index: {}]
  %s11 = inlined_call_operand.hbm [shape: f32[2,16,16,8], index: 11, kind: output, shape index: {0}]
  %s12 = inlined_call_operand.hbm [shape: f32[2,8,8,8], index: 12, kind: output, shape index: {1}]
  %13 = xla_tuple %s11, %s12
  %s14 = sld [smem:[#allocation0]]
  $region129: #{_lambda_.1} parent=0
    _
  %s16 = ssub.s32 1, %s14
  %s17 = scalar_select 0, %s16, %s14
  $region1: #{_lambda_.1} parent=0
    #allocation2 [shape = 'u8[262144]{0}', space=vmem, size = 0x40000, scoped, tag = 'input window, operand 0']
    #allocation3 [shape = 's32[2]{0}', space=sflag, size = 0x8, scoped, tag = 'scoped memory for _lambda_.1']
    #allocation4 [shape = 's32[2]{0}', space=sflag, size = 0x8, scoped, tag = 'scoped memory for _lambda_.1']
    #allocation5 [shape = 'u8[2048]{0}', space=vmem, size = 0x800, scoped, tag = 'input window, operand 1, single buffered']
    #allocation6 [shape = 's32[1]{0}', space=sflag, size = 0x4, scoped, tag = 'scoped memory for _lambda_.1']
    #allocation7 [shape = 'u8[512]{0}', space=vmem, size = 0x400, scoped, tag = 'input window, operand 2, single buffered']
    #allocation8 [shape = 'u8[512]{0}', space=vmem, size = 0x400, scoped, tag = 'input window, operand 3, single buffered']
    #allocation9 [shape = 's32[1]{0}', space=sflag, size = 0x4, scoped, tag = 'scoped memory for _lambda_.1']
    #allocation10 [shape = 'u8[512]{0}', space=vmem, size = 0x400, scoped, tag = 'input window, operand 4, single buffered']
    #allocation11 [shape = 'u8[73728]{0}', space=vmem, size = 0x12000, scoped, tag = 'input window, operand 5, single buffered']
    #allocation12 [shape = 's32[1]{0}', space=sflag, size = 0x4, scoped, tag = 'scoped memory for _lambda_.1']
    #allocation13 [shape = 'u8[512]{0}', space=vmem, size = 0x400, scoped, tag = 'input window, operand 6, single buffered']
    #allocation14 [shape = 'u8[8192]{0}', space=vmem, size = 0x2000, scoped, tag = 'input window, operand 7, single buffered']
    #allocation15 [shape = 's32[1]{0}', space=sflag, size = 0x4, scoped, tag = 'scoped memory for _lambda_.1']
    #allocation16 [shape = 'u8[512]{0}', space=vmem, size = 0x400, scoped, tag = 'input window, operand 8, single buffered']
    #allocation17 [shape = 'u8[2048]{0}', space=vmem, size = 0x800, scoped, tag = 'input window, operand 9, single buffered']
    #allocation18 [shape = 's32[1]{0}', space=sflag, size = 0x4, scoped, tag = 'scoped memory for _lambda_.1']
    #allocation19 [shape = 'u8[512]{0}', space=vmem, size = 0x400, scoped, tag = 'input window, operand 10, single buffered']
    #allocation20 [shape = 'u8[262144]{0}', space=vmem, size = 0x40000, scoped, tag = 'output window, operand 0']
    #allocation21 [shape = 'u8[65536]{0}', space=vmem, size = 0x10000, scoped, tag = 'output window, operand 1']
    #allocation22 [shape = 's32[2]{0}', space=sflag, size = 0x8, scoped, tag = 'scoped memory for _lambda_.1']
    %18 = vsyncpa [#allocation3], 0
    %s19 = scalar_lea.sflag [#allocation3], 1
    %20 = vsyncpa %s19, 0
    %21 = vsyncpa [#allocation6], 0
    %22 = vsyncpa [#allocation9], 0
    %23 = vsyncpa [#allocation12], 0
    %24 = vsyncpa [#allocation15], 0
    %25 = vsyncpa [#allocation18], 0
    %26 = vsyncpa [#allocation4], 0
    %s27 = scalar_lea.sflag [#allocation4], 1
    %28 = vsyncpa %s27, 0
    %29 = vsyncpa [#allocation22], 0
    %s30 = scalar_lea.sflag [#allocation22], 1
    %31 = vsyncpa %s30, 0
    loop: start=0, step=1, limit=4
    $region2: #{_lambda_.1} parent=1 // loop_pre_header
      _
    $region3: #{_lambda_.1} parent=1 // loop_header
      %s33 = sphi 0, %s37
      %p34 = scmp.ge.s32.totalorder %s33, 4
      %s43 = sphi 0, %s45
      %s46 = sphi 0, %s43
      %s47 = sphi 0, %s46
      %s63 = sphi 0, %s47
      %s67 = sphi 0, %s67
      %s69 = sphi 0, %s67
      %s70 = sphi 0, %s69
      %s84 = sphi 0, %s70
      %s88 = sphi 0, %s88
      %s90 = sphi 0, %s88
      %s91 = sphi 0, %s90
      %s105 = sphi 0, %s91
      %s109 = sphi 0, %s109
      %s111 = sphi 0, %s109
      %s112 = sphi 0, %s111
      %s126 = sphi 0, %s112
      %s130 = sphi 0, %s130
      %s132 = sphi 0, %s130
      %s133 = sphi 0, %s132
      %s147 = sphi 0, %s133
      %s151 = sphi 0, %s151
      %s153 = sphi 0, %s151
      %s154 = sphi 0, %s153
      %s168 = sphi 0, %s154
      %s172 = sphi 0, %s172
      %s174 = sphi 0, %s172
      %s175 = sphi 0, %s174
      %s189 = sphi 0, %s175
      %s193 = sphi 0, %s193
      %s195 = sphi 0, %s193
      %s196 = sphi 0, %s195
      %s210 = sphi 0, %s196
      %s214 = sphi 0, %s214
      %s216 = sphi 0, %s214
      %s217 = sphi 0, %s216
      %s231 = sphi 0, %s217
      %s235 = sphi 0, %s235
      %s237 = sphi 0, %s235
      %s238 = sphi 0, %s237
      %s252 = sphi 0, %s238
      %s256 = sphi 0, %s256
      %s258 = sphi 0, %s256
      %s259 = sphi 0, %s258
      %s273 = sphi 0, %s259
      %s279 = sphi 0, %s281
      %s282 = sphi 0, %s279
      %s283 = sphi 0, %s282
      %s299 = sphi 0, %s283
      %s305 = sphi 0, %s307
      %s308 = sphi 0, %s305
      %s309 = sphi 0, %s308
      %s325 = sphi 0, %s309
    $region4: #{_lambda_.1} parent=1 // loop_header_branch
      %36 = sbr.rel (%p34) target = $region8
    $region5: #{_lambda_.1} parent=1 // loop_body
      %s38 = ssub.s32 %s33, 1
      %s39 = ssub.s32 %s33, 2
      %s40 = sadd.s32 %s33, 1
      %s41 = ssub.s32 %s33, %s40
      %p42 = scmp.eq.s32.totalorder %s41, 0
      %s44 = sadd.s32 %s43, 1
      %s45 = scalar_select %p42, %s43, %s44
      %p48 = pneg %p42
      %p49 = scmp.eq.s32.totalorder %s33, 1
      %p50 = por %p48, %p49
      %p51 = scmp.ne.s32.totalorder %s43, %s46
      %p52 = scmp.eq.s32.totalorder %s33, 0
      %p53 = por %p51, %p52
      %p54 = scmp.ne.s32.totalorder %s43, %s46
      %p55 = scmp.eq.s32.totalorder %s38, 1
      %p56 = por %p54, %p55
      %p57 = scmp.ne.s32.totalorder %s46, %s47
      %p58 = scmp.eq.s32.totalorder %s38, 0
      %p59 = por %p57, %p58
      %p60 = scmp.ne.s32.totalorder %s46, %s47
      %p61 = scmp.eq.s32.totalorder %s39, 1
      %p62 = por %p60, %p61
      %p64 = scmp.ne.s32.totalorder %s47, %s63
      %p65 = scmp.eq.s32.totalorder %s39, 0
      %p66 = por %p64, %p65
      %s68 = sadd.s32 %s67, 1
      %p71 = scmp.eq.s32.totalorder %s33, 1
      %p72 = scmp.ne.s32.totalorder %s67, %s69
      %p73 = scmp.eq.s32.totalorder %s33, 0
      %p74 = por %p72, %p73
      %p75 = scmp.ne.s32.totalorder %s67, %s69
      %p76 = scmp.eq.s32.totalorder %s38, 1
      %p77 = por %p75, %p76
      %p78 = scmp.ne.s32.totalorder %s69, %s70
      %p79 = scmp.eq.s32.totalorder %s38, 0
      %p80 = por %p78, %p79
      %p81 = scmp.ne.s32.totalorder %s69, %s70
      %p82 = scmp.eq.s32.totalorder %s39, 1
      %p83 = por %p81, %p82
      %p85 = scmp.ne.s32.totalorder %s70, %s84
      %p86 = scmp.eq.s32.totalorder %s39, 0
      %p87 = por %p85, %p86
      %s89 = sadd.s32 %s88, 1
      %p92 = scmp.eq.s32.totalorder %s33, 1
      %p93 = scmp.ne.s32.totalorder %s88, %s90
      %p94 = scmp.eq.s32.totalorder %s33, 0
      %p95 = por %p93, %p94
      %p96 = scmp.ne.s32.totalorder %s88, %s90
      %p97 = scmp.eq.s32.totalorder %s38, 1
      %p98 = por %p96, %p97
      %p99 = scmp.ne.s32.totalorder %s90, %s91
      %p100 = scmp.eq.s32.totalorder %s38, 0
      %p101 = por %p99, %p100
      %p102 = scmp.ne.s32.totalorder %s90, %s91
      %p103 = scmp.eq.s32.totalorder %s39, 1
      %p104 = por %p102, %p103
      %p106 = scmp.ne.s32.totalorder %s91, %s105
      %p107 = scmp.eq.s32.totalorder %s39, 0
      %p108 = por %p106, %p107
      %s110 = sadd.s32 %s109, 1
      %p113 = scmp.eq.s32.totalorder %s33, 1
      %p114 = scmp.ne.s32.totalorder %s109, %s111
      %p115 = scmp.eq.s32.totalorder %s33, 0
      %p116 = por %p114, %p115
      %p117 = scmp.ne.s32.totalorder %s109, %s111
      %p118 = scmp.eq.s32.totalorder %s38, 1
      %p119 = por %p117, %p118
      %p120 = scmp.ne.s32.totalorder %s111, %s112
      %p121 = scmp.eq.s32.totalorder %s38, 0
      %p122 = por %p120, %p121
      %p123 = scmp.ne.s32.totalorder %s111, %s112
      %p124 = scmp.eq.s32.totalorder %s39, 1
      %p125 = por %p123, %p124
      %p127 = scmp.ne.s32.totalorder %s112, %s126
      %p128 = scmp.eq.s32.totalorder %s39, 0
      %p129 = por %p127, %p128
      %s131 = sadd.s32 %s130, 1
      %p134 = scmp.eq.s32.totalorder %s33, 1
      %p135 = scmp.ne.s32.totalorder %s130, %s132
      %p136 = scmp.eq.s32.totalorder %s33, 0
      %p137 = por %p135, %p136
      %p138 = scmp.ne.s32.totalorder %s130, %s132
      %p139 = scmp.eq.s32.totalorder %s38, 1
      %p140 = por %p138, %p139
      %p141 = scmp.ne.s32.totalorder %s132, %s133
      %p142 = scmp.eq.s32.totalorder %s38, 0
      %p143 = por %p141, %p142
      %p144 = scmp.ne.s32.totalorder %s132, %s133
      %p145 = scmp.eq.s32.totalorder %s39, 1
      %p146 = por %p144, %p145
      %p148 = scmp.ne.s32.totalorder %s133, %s147
      %p149 = scmp.eq.s32.totalorder %s39, 0
      %p150 = por %p148, %p149
      %s152 = sadd.s32 %s151, 1
      %p155 = scmp.eq.s32.totalorder %s33, 1
      %p156 = scmp.ne.s32.totalorder %s151, %s153
      %p157 = scmp.eq.s32.totalorder %s33, 0
      %p158 = por %p156, %p157
      %p159 = scmp.ne.s32.totalorder %s151, %s153
      %p160 = scmp.eq.s32.totalorder %s38, 1
      %p161 = por %p159, %p160
      %p162 = scmp.ne.s32.totalorder %s153, %s154
      %p163 = scmp.eq.s32.totalorder %s38, 0
      %p164 = por %p162, %p163
      %p165 = scmp.ne.s32.totalorder %s153, %s154
      %p166 = scmp.eq.s32.totalorder %s39, 1
      %p167 = por %p165, %p166
      %p169 = scmp.ne.s32.totalorder %s154, %s168
      %p170 = scmp.eq.s32.totalorder %s39, 0
      %p171 = por %p169, %p170
      %s173 = sadd.s32 %s172, 1
      %p176 = scmp.eq.s32.totalorder %s33, 1
      %p177 = scmp.ne.s32.totalorder %s172, %s174
      %p178 = scmp.eq.s32.totalorder %s33, 0
      %p179 = por %p177, %p178
      %p180 = scmp.ne.s32.totalorder %s172, %s174
      %p181 = scmp.eq.s32.totalorder %s38, 1
      %p182 = por %p180, %p181
      %p183 = scmp.ne.s32.totalorder %s174, %s175
      %p184 = scmp.eq.s32.totalorder %s38, 0
      %p185 = por %p183, %p184
      %p186 = scmp.ne.s32.totalorder %s174, %s175
      %p187 = scmp.eq.s32.totalorder %s39, 1
      %p188 = por %p186, %p187
      %p190 = scmp.ne.s32.totalorder %s175, %s189
      %p191 = scmp.eq.s32.totalorder %s39, 0
      %p192 = por %p190, %p191
      %s194 = sadd.s32 %s193, 1
      %p197 = scmp.eq.s32.totalorder %s33, 1
      %p198 = scmp.ne.s32.totalorder %s193, %s195
      %p199 = scmp.eq.s32.totalorder %s33, 0
      %p200 = por %p198, %p199
      %p201 = scmp.ne.s32.totalorder %s193, %s195
      %p202 = scmp.eq.s32.totalorder %s38, 1
      %p203 = por %p201, %p202
      %p204 = scmp.ne.s32.totalorder %s195, %s196
      %p205 = scmp.eq.s32.totalorder %s38, 0
      %p206 = por %p204, %p205
      %p207 = scmp.ne.s32.totalorder %s195, %s196
      %p208 = scmp.eq.s32.totalorder %s39, 1
      %p209 = por %p207, %p208
      %p211 = scmp.ne.s32.totalorder %s196, %s210
      %p212 = scmp.eq.s32.totalorder %s39, 0
      %p213 = por %p211, %p212
      %s215 = sadd.s32 %s214, 1
      %p218 = scmp.eq.s32.totalorder %s33, 1
      %p219 = scmp.ne.s32.totalorder %s214, %s216
      %p220 = scmp.eq.s32.totalorder %s33, 0
      %p221 = por %p219, %p220
      %p222 = scmp.ne.s32.totalorder %s214, %s216
      %p223 = scmp.eq.s32.totalorder %s38, 1
      %p224 = por %p222, %p223
      %p225 = scmp.ne.s32.totalorder %s216, %s217
      %p226 = scmp.eq.s32.totalorder %s38, 0
      %p227 = por %p225, %p226
      %p228 = scmp.ne.s32.totalorder %s216, %s217
      %p229 = scmp.eq.s32.totalorder %s39, 1
      %p230 = por %p228, %p229
      %p232 = scmp.ne.s32.totalorder %s217, %s231
      %p233 = scmp.eq.s32.totalorder %s39, 0
      %p234 = por %p232, %p233
      %s236 = sadd.s32 %s235, 1
      %p239 = scmp.eq.s32.totalorder %s33, 1
      %p240 = scmp.ne.s32.totalorder %s235, %s237
      %p241 = scmp.eq.s32.totalorder %s33, 0
      %p242 = por %p240, %p241
      %p243 = scmp.ne.s32.totalorder %s235, %s237
      %p244 = scmp.eq.s32.totalorder %s38, 1
      %p245 = por %p243, %p244
      %p246 = scmp.ne.s32.totalorder %s237, %s238
      %p247 = scmp.eq.s32.totalorder %s38, 0
      %p248 = por %p246, %p247
      %p249 = scmp.ne.s32.totalorder %s237, %s238
      %p250 = scmp.eq.s32.totalorder %s39, 1
      %p251 = por %p249, %p250
      %p253 = scmp.ne.s32.totalorder %s238, %s252
      %p254 = scmp.eq.s32.totalorder %s39, 0
      %p255 = por %p253, %p254
      %s257 = sadd.s32 %s256, 1
      %p260 = scmp.eq.s32.totalorder %s33, 1
      %p261 = scmp.ne.s32.totalorder %s256, %s258
      %p262 = scmp.eq.s32.totalorder %s33, 0
      %p263 = por %p261, %p262
      %p264 = scmp.ne.s32.totalorder %s256, %s258
      %p265 = scmp.eq.s32.totalorder %s38, 1
      %p266 = por %p264, %p265
      %p267 = scmp.ne.s32.totalorder %s258, %s259
      %p268 = scmp.eq.s32.totalorder %s38, 0
      %p269 = por %p267, %p268
      %p270 = scmp.ne.s32.totalorder %s258, %s259
      %p271 = scmp.eq.s32.totalorder %s39, 1
      %p272 = por %p270, %p271
      %p274 = scmp.ne.s32.totalorder %s259, %s273
      %p275 = scmp.eq.s32.totalorder %s39, 0
      %p276 = por %p274, %p275
      %s277 = ssub.s32 %s33, %s40
      %p278 = scmp.eq.s32.totalorder %s277, 0
      %s280 = sadd.s32 %s279, 1
      %s281 = scalar_select %p278, %s279, %s280
      %p284 = pneg %p278
      %p285 = scmp.eq.s32.totalorder %s33, 1
      %p286 = por %p284, %p285
      %p287 = scmp.ne.s32.totalorder %s279, %s282
      %p288 = scmp.eq.s32.totalorder %s33, 0
      %p289 = por %p287, %p288
      %p290 = scmp.ne.s32.totalorder %s279, %s282
      %p291 = scmp.eq.s32.totalorder %s38, 1
      %p292 = por %p290, %p291
      %p293 = scmp.ne.s32.totalorder %s282, %s283
      %p294 = scmp.eq.s32.totalorder %s38, 0
      %p295 = por %p293, %p294
      %p296 = scmp.ne.s32.totalorder %s282, %s283
      %p297 = scmp.eq.s32.totalorder %s39, 1
      %p298 = por %p296, %p297
      %p300 = scmp.ne.s32.totalorder %s283, %s299
      %p301 = scmp.eq.s32.totalorder %s39, 0
      %p302 = por %p300, %p301
      %s303 = ssub.s32 %s33, %s40
      %p304 = scmp.eq.s32.totalorder %s303, 0
      %s306 = sadd.s32 %s305, 1
      %s307 = scalar_select %p304, %s305, %s306
      %p310 = pneg %p304
      %p311 = scmp.eq.s32.totalorder %s33, 1
      %p312 = por %p310, %p311
      %p313 = scmp.ne.s32.totalorder %s305, %s308
      %p314 = scmp.eq.s32.totalorder %s33, 0
      %p315 = por %p313, %p314
      %p316 = scmp.ne.s32.totalorder %s305, %s308
      %p317 = scmp.eq.s32.totalorder %s38, 1
      %p318 = por %p316, %p317
      %p319 = scmp.ne.s32.totalorder %s308, %s309
      %p320 = scmp.eq.s32.totalorder %s38, 0
      %p321 = por %p319, %p320
      %p322 = scmp.ne.s32.totalorder %s308, %s309
      %p323 = scmp.eq.s32.totalorder %s39, 1
      %p324 = por %p322, %p323
      %p326 = scmp.ne.s32.totalorder %s309, %s325
      %p327 = scmp.eq.s32.totalorder %s39, 0
      %p328 = por %p326, %p327
      %p329 = scmp.le.s32.totalorder 1, %s33
      %p330 = scmp.lt.s32.totalorder %s33, 3
      %p331 = pnand %p329, %p330
      %p332 = pneg %p331
      // Predicated region
      $region9: #{_lambda_.1} parent=5 // pred_check
        _
      $region10: #{_lambda_.1} parent=5 // pred_check_branch
        %334 = sbr.rel (%p331) target = $region12
      $region11: #{_lambda_.1} parent=5 // pred_region
        %s335 = ssub.s32 %s33, 1
        // Predicated region
        $region13: #{_lambda_.1} parent=11 // pred_check
          %p336 = pneg %p80
        $region14: #{_lambda_.1} parent=11 // pred_check_branch
          %338 = sbr.rel (%p336) target = $region16
        $region15: #{_lambda_.1} parent=11 // pred_region
          %s340 = ssub.s32 64, 64
          %341 = vsyncadd [#allocation6], %s340
          %s343 = sshll.u32 [#allocation5], 4
          %s344 = int_to_ptr.vmem [resolvable:$true] %s343
          %346 = dma.hbm_to_vmem [thread:$0]  %s1, 64, %s344, [#allocation6]
        $region16: #{_lambda_.1} parent=11 // pred_fallthru
          _
        // Predicated region
        $region17: #{_lambda_.1} parent=11 // pred_check
          %p347 = pneg %p101
        $region18: #{_lambda_.1} parent=11 // pred_check_branch
          %349 = sbr.rel (%p347) target = $region20
        $region19: #{_lambda_.1} parent=11 // pred_region
          %s351 = ssub.s32 16, 16
          %352 = vsyncadd [#allocation6], %s351
          %s354 = sshll.u32 [#allocation7], 4
          %s355 = int_to_ptr.vmem [resolvable:$true] %s354
          %357 = dma.hbm_to_vmem [thread:$0]  %s2, 16, %s355, [#allocation6]
        $region20: #{_lambda_.1} parent=11 // pred_fallthru
          _
        // Predicated region
        $region21: #{_lambda_.1} parent=11 // pred_check
          %p358 = pneg %p122
        $region22: #{_lambda_.1} parent=11 // pred_check_branch
          %360 = sbr.rel (%p358) target = $region24
        $region23: #{_lambda_.1} parent=11 // pred_region
          %s362 = ssub.s32 16, 16
          %363 = vsyncadd [#allocation9], %s362
          %s365 = sshll.u32 [#allocation8], 4
          %s366 = int_to_ptr.vmem [resolvable:$true] %s365
          %368 = dma.hbm_to_vmem [thread:$0]  %s3, 16, %s366, [#allocation9]
        $region24: #{_lambda_.1} parent=11 // pred_fallthru
          _
        // Predicated region
        $region25: #{_lambda_.1} parent=11 // pred_check
          %p369 = pneg %p143
        $region26: #{_lambda_.1} parent=11 // pred_check_branch
          %371 = sbr.rel (%p369) target = $region28
        $region27: #{_lambda_.1} parent=11 // pred_region
          %s373 = ssub.s32 16, 16
          %374 = vsyncadd [#allocation9], %s373
          %s376 = sshll.u32 [#allocation10], 4
          %s377 = int_to_ptr.vmem [resolvable:$true] %s376
          %379 = dma.hbm_to_vmem [thread:$0]  %s4, 16, %s377, [#allocation9]
        $region28: #{_lambda_.1} parent=11 // pred_fallthru
          _
        // Predicated region
        $region29: #{_lambda_.1} parent=11 // pred_check
          %p380 = pneg %p164
        $region30: #{_lambda_.1} parent=11 // pred_check_branch
          %382 = sbr.rel (%p380) target = $region32
        $region31: #{_lambda_.1} parent=11 // pred_region
          %s384 = ssub.s32 2304, 2304
          %385 = vsyncadd [#allocation12], %s384
          %s386 = sshll.u32 [#allocation11], 4
          %s387 = int_to_ptr.vmem [resolvable:$true] %s386
          %392 = dma.hbm_to_vmem [thread:$0]  %s5, 2304, %s387, [#allocation12], 128, 128, 8
        $region32: #{_lambda_.1} parent=11 // pred_fallthru
          _
        // Predicated region
        $region33: #{_lambda_.1} parent=11 // pred_check
          %p393 = pneg %p185
        $region34: #{_lambda_.1} parent=11 // pred_check_branch
          %395 = sbr.rel (%p393) target = $region36
        $region35: #{_lambda_.1} parent=11 // pred_region
          %s397 = ssub.s32 16, 16
          %398 = vsyncadd [#allocation12], %s397
          %s400 = sshll.u32 [#allocation13], 4
          %s401 = int_to_ptr.vmem [resolvable:$true] %s400
          %403 = dma.hbm_to_vmem [thread:$0]  %s6, 16, %s401, [#allocation12]
        $region36: #{_lambda_.1} parent=11 // pred_fallthru
          _
        // Predicated region
        $region37: #{_lambda_.1} parent=11 // pred_check
          %p404 = pneg %p206
        $region38: #{_lambda_.1} parent=11 // pred_check_branch
          %406 = sbr.rel (%p404) target = $region40
        $region39: #{_lambda_.1} parent=11 // pred_region
          %s408 = ssub.s32 256, 256
          %409 = vsyncadd [#allocation15], %s408
          %s410 = sshll.u32 [#allocation14], 4
          %s411 = int_to_ptr.vmem [resolvable:$true] %s410
          %416 = dma.hbm_to_vmem [thread:$0]  %s7, 256, %s411, [#allocation15], 128, 128, 8
        $region40: #{_lambda_.1} parent=11 // pred_fallthru
          _
        // Predicated region
        $region41: #{_lambda_.1} parent=11 // pred_check
          %p417 = pneg %p227
        $region42: #{_lambda_.1} parent=11 // pred_check_branch
          %419 = sbr.rel (%p417) target = $region44
        $region43: #{_lambda_.1} parent=11 // pred_region
          %s421 = ssub.s32 16, 16
          %422 = vsyncadd [#allocation15], %s421
          %s424 = sshll.u32 [#allocation16], 4
          %s425 = int_to_ptr.vmem [resolvable:$true] %s424
          %427 = dma.hbm_to_vmem [thread:$0]  %s8, 16, %s425, [#allocation15]
        $region44: #{_lambda_.1} parent=11 // pred_fallthru
          _
        // Predicated region
        $region45: #{_lambda_.1} parent=11 // pred_check
          %p428 = pneg %p248
        $region46: #{_lambda_.1} parent=11 // pred_check_branch
          %430 = sbr.rel (%p428) target = $region48
        $region47: #{_lambda_.1} parent=11 // pred_region
          %s432 = ssub.s32 64, 64
          %433 = vsyncadd [#allocation18], %s432
          %s435 = sshll.u32 [#allocation17], 4
          %s436 = int_to_ptr.vmem [resolvable:$true] %s435
          %438 = dma.hbm_to_vmem [thread:$0]  %s9, 64, %s436, [#allocation18]
        $region48: #{_lambda_.1} parent=11 // pred_fallthru
          _
        // Predicated region
        $region49: #{_lambda_.1} parent=11 // pred_check
          %p439 = pneg %p269
        $region50: #{_lambda_.1} parent=11 // pred_check_branch
          %441 = sbr.rel (%p439) target = $region52
        $region51: #{_lambda_.1} parent=11 // pred_region
          %s443 = ssub.s32 16, 16
          %444 = vsyncadd [#allocation18], %s443
          %s446 = sshll.u32 [#allocation19], 4
          %s447 = int_to_ptr.vmem [resolvable:$true] %s446
          %449 = dma.hbm_to_vmem [thread:$0]  %s10, 16, %s447, [#allocation18]
        $region52: #{_lambda_.1} parent=11 // pred_fallthru
          _
      $region12: #{_lambda_.1} parent=5 // pred_fallthru
        _
      %p450 = scmp.lt.s32.totalorder %s33, 2
      // Predicated region
      $region53: #{_lambda_.1} parent=5 // pred_check
        %p451 = pneg %p450
      $region54: #{_lambda_.1} parent=5 // pred_check_branch
        %453 = sbr.rel (%p451) target = $region56
      $region55: #{_lambda_.1} parent=5 // pred_region
        // Predicated region
        $region57: #{_lambda_.1} parent=55 // pred_check
          %p454 = pneg %p53
        $region58: #{_lambda_.1} parent=55 // pred_check_branch
          %456 = sbr.rel (%p454) target = $region60
        $region59: #{_lambda_.1} parent=55 // pred_region
          %s457 = sand.u32 %s43, 1
          %s458 = scalar_lea.sflag [#allocation3], %s457
          %s459 = sand.u32 %s43, 1
          %s460 = smul.addr %s459, 256
          %s461 = scalar_lea.vmem [#allocation2], %s460
          %s463 = ssub.s32 4096, 4096
          %464 = vsyncadd %s458, %s463
          %s465 = smul.addr %s33, 32
          %s466 = smul.addr %s465, 128
          %s467 = scalar_lea.hbm %s0, %s466
          %s468 = sshll.u32 %s461, 4
          %s469 = int_to_ptr.vmem [resolvable:$true] %s468
          %474 = dma.hbm_to_vmem [thread:$0]  %s467, 4096, %s469, %s458, 128, 128, 8
        $region60: #{_lambda_.1} parent=55 // pred_fallthru
          _
      $region56: #{_lambda_.1} parent=5 // pred_fallthru
        _
      %p475 = scmp.le.s32.totalorder 1, %s33
      %p476 = scmp.lt.s32.totalorder %s33, 3
      %p477 = pnand %p475, %p476
      %p478 = pneg %p477
      // Predicated region
      $region61: #{_lambda_.1} parent=5 // pred_check
        _
      $region62: #{_lambda_.1} parent=5 // pred_check_branch
        %480 = sbr.rel (%p477) target = $region64
      $region63: #{_lambda_.1} parent=5 // pred_region
        %s481 = ssub.s32 %s33, 1
        %s482 = sand.u32 %s46, 1
        %s483 = scalar_lea.sflag [#allocation3], %s482
        %s484 = sand.u32 %s46, 1
        %s485 = smul.addr %s484, 256
        %s486 = scalar_lea.vmem [#allocation2], %s485
        // Predicated region
        $region65: #{_lambda_.1} parent=63 // pred_check
          %p487 = pneg %p59
        $region66: #{_lambda_.1} parent=63 // pred_check_branch
          %489 = sbr.rel (%p487) target = $region68
        $region67: #{_lambda_.1} parent=63 // pred_region
          %490 = dma.done %s483, 4096
        $region68: #{_lambda_.1} parent=63 // pred_fallthru
          _
        // Predicated region
        $region69: #{_lambda_.1} parent=63 // pred_check
          %p491 = pneg %p80
        $region70: #{_lambda_.1} parent=63 // pred_check_branch
          %493 = sbr.rel (%p491) target = $region72
        $region71: #{_lambda_.1} parent=63 // pred_region
          %494 = dma.done [#allocation6], 64
        $region72: #{_lambda_.1} parent=63 // pred_fallthru
          _
        // Predicated region
        $region73: #{_lambda_.1} parent=63 // pred_check
          %p495 = pneg %p101
        $region74: #{_lambda_.1} parent=63 // pred_check_branch
          %497 = sbr.rel (%p495) target = $region76
        $region75: #{_lambda_.1} parent=63 // pred_region
          %498 = dma.done [#allocation6], 16
        $region76: #{_lambda_.1} parent=63 // pred_fallthru
          _
        // Predicated region
        $region77: #{_lambda_.1} parent=63 // pred_check
          %p499 = pneg %p122
        $region78: #{_lambda_.1} parent=63 // pred_check_branch
          %501 = sbr.rel (%p499) target = $region80
        $region79: #{_lambda_.1} parent=63 // pred_region
          %502 = dma.done [#allocation9], 16
        $region80: #{_lambda_.1} parent=63 // pred_fallthru
          _
        // Predicated region
        $region81: #{_lambda_.1} parent=63 // pred_check
          %p503 = pneg %p143
        $region82: #{_lambda_.1} parent=63 // pred_check_branch
          %505 = sbr.rel (%p503) target = $region84
        $region83: #{_lambda_.1} parent=63 // pred_region
          %506 = dma.done [#allocation9], 16
        $region84: #{_lambda_.1} parent=63 // pred_fallthru
          _
        // Predicated region
        $region85: #{_lambda_.1} parent=63 // pred_check
          %p507 = pneg %p164
        $region86: #{_lambda_.1} parent=63 // pred_check_branch
          %509 = sbr.rel (%p507) target = $region88
        $region87: #{_lambda_.1} parent=63 // pred_region
          %510 = dma.done [#allocation12], 2304
        $region88: #{_lambda_.1} parent=63 // pred_fallthru
          _
        // Predicated region
        $region89: #{_lambda_.1} parent=63 // pred_check
          %p511 = pneg %p185
        $region90: #{_lambda_.1} parent=63 // pred_check_branch
          %513 = sbr.rel (%p511) target = $region92
        $region91: #{_lambda_.1} parent=63 // pred_region
          %514 = dma.done [#allocation12], 16
        $region92: #{_lambda_.1} parent=63 // pred_fallthru
          _
        // Predicated region
        $region93: #{_lambda_.1} parent=63 // pred_check
          %p515 = pneg %p206
        $region94: #{_lambda_.1} parent=63 // pred_check_branch
          %517 = sbr.rel (%p515) target = $region96
        $region95: #{_lambda_.1} parent=63 // pred_region
          %518 = dma.done [#allocation15], 256
        $region96: #{_lambda_.1} parent=63 // pred_fallthru
          _
        // Predicated region
        $region97: #{_lambda_.1} parent=63 // pred_check
          %p519 = pneg %p227
        $region98: #{_lambda_.1} parent=63 // pred_check_branch
          %521 = sbr.rel (%p519) target = $region100
        $region99: #{_lambda_.1} parent=63 // pred_region
          %522 = dma.done [#allocation15], 16
        $region100: #{_lambda_.1} parent=63 // pred_fallthru
          _
        // Predicated region
        $region101: #{_lambda_.1} parent=63 // pred_check
          %p523 = pneg %p248
        $region102: #{_lambda_.1} parent=63 // pred_check_branch
          %525 = sbr.rel (%p523) target = $region104
        $region103: #{_lambda_.1} parent=63 // pred_region
          %526 = dma.done [#allocation18], 64
        $region104: #{_lambda_.1} parent=63 // pred_fallthru
          _
        // Predicated region
        $region105: #{_lambda_.1} parent=63 // pred_check
          %p527 = pneg %p269
        $region106: #{_lambda_.1} parent=63 // pred_check_branch
          %529 = sbr.rel (%p527) target = $region108
        $region107: #{_lambda_.1} parent=63 // pred_region
          %530 = dma.done [#allocation18], 16
        $region108: #{_lambda_.1} parent=63 // pred_fallthru
          _
        %s531 = sand.u32 %s46, 1
        %s532 = scalar_lea.sflag [#allocation3], %s531
        %s533 = sand.u32 %s46, 1
        %s534 = smul.addr %s533, 256
        %s535 = scalar_lea.vmem [#allocation2], %s534
        %p536 = pneg %p59
        %p537 = pneg %p56
        %p538 = pneg %p80
        %p539 = pneg %p77
        %p540 = pneg %p101
        %p541 = pneg %p98
        %p542 = pneg %p122
        %p543 = pneg %p119
        %p544 = pneg %p143
        %p545 = pneg %p140
        %p546 = pneg %p164
        %p547 = pneg %p161
        %p548 = pneg %p185
        %p549 = pneg %p182
        %p550 = pneg %p206
        %p551 = pneg %p203
        %p552 = pneg %p227
        %p553 = pneg %p224
        %p554 = pneg %p248
        %p555 = pneg %p245
        %p556 = pneg %p269
        %p557 = pneg %p266
        %p558 = pneg %p295
        %p559 = pneg %p292
        %s560 = sand.u32 %s282, 1
        %s561 = scalar_lea.sflag [#allocation4], %s560
        %s562 = sand.u32 %s282, 1
        %s563 = smul.addr %s562, 256
        %s564 = scalar_lea.vmem [#allocation20], %s563
        %p565 = pneg %p321
        %p566 = pneg %p318
        %s567 = sand.u32 %s308, 1
        %s568 = scalar_lea.sflag [#allocation22], %s567
        %s569 = sand.u32 %s308, 1
        %s570 = smul.addr %s569, 64
        %s571 = scalar_lea.vmem [#allocation21], %s570
        %v572 = vld [vmem:[%s486] sm:$0xff]
        %v573 = vld [vmem:[%s486 + $0x8] sm:$0xff]
        %v574 = vld [vmem:[%s486 + $0x10] sm:$0xff]
        %v575 = vld [vmem:[%s486 + $0x18] sm:$0xff]
        %v576 = vld [vmem:[%s486 + $0x20] sm:$0xff]
        %v577 = vld [vmem:[%s486 + $0x28] sm:$0xff]
        %v578 = vld [vmem:[%s486 + $0x30] sm:$0xff]
        %v579 = vld [vmem:[%s486 + $0x38] sm:$0xff]
        %v580 = vld [vmem:[%s486 + $0x40] sm:$0xff]
        %v581 = vld [vmem:[%s486 + $0x48] sm:$0xff]
        %v582 = vld [vmem:[%s486 + $0x50] sm:$0xff]
        %v583 = vld [vmem:[%s486 + $0x58] sm:$0xff]
        %v584 = vld [vmem:[%s486 + $0x60] sm:$0xff]
        %v585 = vld [vmem:[%s486 + $0x68] sm:$0xff]
        %v586 = vld [vmem:[%s486 + $0x70] sm:$0xff]
        %v587 = vld [vmem:[%s486 + $0x78] sm:$0xff]
        %v588 = vld [vmem:[%s486 + $0x80] sm:$0xff]
        %v589 = vld [vmem:[%s486 + $0x88] sm:$0xff]
        %v590 = vld [vmem:[%s486 + $0x90] sm:$0xff]
        %v591 = vld [vmem:[%s486 + $0x98] sm:$0xff]
        %v592 = vld [vmem:[%s486 + $0xa0] sm:$0xff]
        %v593 = vld [vmem:[%s486 + $0xa8] sm:$0xff]
        %v594 = vld [vmem:[%s486 + $0xb0] sm:$0xff]
        %v595 = vld [vmem:[%s486 + $0xb8] sm:$0xff]
        %v596 = vld [vmem:[%s486 + $0xc0] sm:$0xff]
        %v597 = vld [vmem:[%s486 + $0xc8] sm:$0xff]
        %v598 = vld [vmem:[%s486 + $0xd0] sm:$0xff]
        %v599 = vld [vmem:[%s486 + $0xd8] sm:$0xff]
        %v600 = vld [vmem:[%s486 + $0xe0] sm:$0xff]
        %v601 = vld [vmem:[%s486 + $0xe8] sm:$0xff]
        %v602 = vld [vmem:[%s486 + $0xf0] sm:$0xff]
        %v603 = vld [vmem:[%s486 + $0xf8] sm:$0xff]
        %v604 = vld [vmem:[#allocation17] sm:$0xf]
        %v605 = vld [vmem:[#allocation19] sm:$0x1]
        %v607 = vlaneseq
        %v608 = vshrl.u32 %v607, 7
        %v609 = vsub.s32 0, %v608
        %v610 = vrot.slane %v605, %v609
        %vm612 = vcmask 31744
        %v614 = vsel %vm612, %v572, 0
        %v617 = vsel %vm612, %v573, 0
        %v620 = vsel %vm612, %v574, 0
        %v623 = vsel %vm612, %v575, 0
        %v626 = vsel %vm612, %v576, 0
        %v629 = vsel %vm612, %v577, 0
        %v632 = vsel %vm612, %v578, 0
        %v635 = vsel %vm612, %v579, 0
        %v638 = vsel %vm612, %v580, 0
        %v641 = vsel %vm612, %v581, 0
        %v644 = vsel %vm612, %v582, 0
        %v647 = vsel %vm612, %v583, 0
        %v650 = vsel %vm612, %v584, 0
        %v653 = vsel %vm612, %v585, 0
        %v656 = vsel %vm612, %v586, 0
        %v659 = vsel %vm612, %v587, 0
        %v662 = vsel %vm612, %v588, 0
        %v665 = vsel %vm612, %v589, 0
        %v668 = vsel %vm612, %v590, 0
        %v671 = vsel %vm612, %v591, 0
        %v674 = vsel %vm612, %v592, 0
        %v677 = vsel %vm612, %v593, 0
        %v680 = vsel %vm612, %v594, 0
        %v683 = vsel %vm612, %v595, 0
        %v686 = vsel %vm612, %v596, 0
        %v689 = vsel %vm612, %v597, 0
        %v692 = vsel %vm612, %v598, 0
        %v695 = vsel %vm612, %v599, 0
        %v698 = vsel %vm612, %v600, 0
        %v701 = vsel %vm612, %v601, 0
        %v704 = vsel %vm612, %v602, 0
        %v707 = vsel %vm612, %v603, 0
        %vm709 = vcmask 1043456
        %v711 = vsel %vm709, %v604, 0
        %713 = vmatprep.subr.mxu0 0.0
        %714 = vmatpush1.msra.mxu0 %v711
        %715 = vmatprep.subr.mxu0 0.0
        %716 = vmatpush1.msra.mxu0 0.0
        %717 = vmatprep.subr.mxu0 0.0
        %718 = vmatpush1.msra.mxu0 0.0
        %719 = vmatprep.subr.mxu0 0.0
        %720 = vmatpush1.msra.mxu0 0.0
        %721 = vmatprep.subr.mxu0 0.0
        %722 = vmatpush1.msra.mxu0 0.0
        %723 = vmatprep.subr.mxu0 0.0
        %724 = vmatpush1.msra.mxu0 0.0
        %725 = vmatprep.subr.mxu0 0.0
        %726 = vmatpush1.msra.mxu0 0.0
        %727 = vmatprep.subr.mxu0 0.0
        %728 = vmatpush1.msra.mxu0 0.0
        %729 = vmatprep.subr.mxu0 0.0
        %730 = vmatpush1.msra.mxu0 0.0
        %731 = vmatprep.subr.mxu0 0.0
        %732 = vmatpush1.msra.mxu0 0.0
        %733 = vmatprep.subr.mxu0 0.0
        %734 = vmatpush1.msra.mxu0 0.0
        %735 = vmatprep.subr.mxu0 0.0
        %736 = vmatpush1.msra.mxu0 0.0
        %737 = vmatprep.subr.mxu0 0.0
        %738 = vmatpush1.msra.mxu0 0.0
        %739 = vmatprep.subr.mxu0 0.0
        %740 = vmatpush1.msra.mxu0 0.0
        %741 = vmatprep.subr.mxu0 0.0
        %742 = vmatpush1.msra.mxu0 0.0
        %743 = vmatprep.subr.mxu0 0.0
        %744 = vmatpush1.msra.mxu0 0.0
        %745 = vmatprep.subr.mxu0 0.0
        %746 = vmatpush1.msra.mxu0 0.0
        %747 = vmatprep.subr.mxu0 0.0
        %748 = vmatpush1.msra.mxu0 0.0
        %749 = vmatprep.subr.mxu0 0.0
        %750 = vmatpush1.msra.mxu0 0.0
        %751 = vmatprep.subr.mxu0 0.0
        %752 = vmatpush1.msra.mxu0 0.0
        %753 = vmatprep.subr.mxu0 0.0
        %754 = vmatpush1.msra.mxu0 0.0
        %755 = vmatprep.subr.mxu0 0.0
        %756 = vmatpush1.msra.mxu0 0.0
        %757 = vmatprep.subr.mxu0 0.0
        %758 = vmatpush1.msra.mxu0 0.0
        %759 = vmatprep.subr.mxu0 0.0
        %760 = vmatpush1.msra.mxu0 0.0
        %761 = vmatprep.subr.mxu0 0.0
        %762 = vmatpush1.msra.mxu0 0.0
        %763 = vmatprep.subr.mxu0 0.0
        %764 = vmatpush1.msra.mxu0 0.0
        %765 = vmatprep.subr.mxu0 0.0
        %766 = vmatpush1.msra.mxu0 0.0
        %767 = vmatprep.subr.mxu0 0.0
        %768 = vmatpush1.msra.mxu0 0.0
        %769 = vmatprep.subr.mxu0 0.0
        %770 = vmatpush1.msra.mxu0 0.0
        %771 = vmatprep.subr.mxu0 0.0
        %772 = vmatpush1.msra.mxu0 0.0
        %773 = vmatprep.subr.mxu0 0.0
        %774 = vmatpush1.msra.mxu0 0.0
        %775 = vmatprep.subr.mxu0 0.0
        %776 = vmatpush1.msra.mxu0 0.0
        %777 = vmatprep.mubr.f32.mxu0 0.0
        %778 = vmatmul.mubr.f32.gmra.mrb[0].mxu0 %v614
        %v779 = vpop.f32.mrb[0].mxu0
        %v780 = vadd.f32 %v610, %v779
        %v781 = vpop.f32.mrb[0].mxu0
        %782 = vmatprep.mubr.f32.mxu0 0.0
        %783 = vmatmul.mubr.f32.gmra.mrb[0].mxu0 %v617
        %v784 = vpop.f32.mrb[0].mxu0
        %v785 = vadd.f32 %v610, %v784
        %v786 = vpop.f32.mrb[0].mxu0
        %787 = vmatprep.mubr.f32.mxu0 0.0
        %788 = vmatmul.mubr.f32.gmra.mrb[0].mxu0 %v620
        %v789 = vpop.f32.mrb[0].mxu0
        %v790 = vadd.f32 %v610, %v789
        %v791 = vpop.f32.mrb[0].mxu0
        %792 = vmatprep.mubr.f32.mxu0 0.0
        %793 = vmatmul.mubr.f32.gmra.mrb[0].mxu0 %v623
        %v794 = vpop.f32.mrb[0].mxu0
        %v795 = vadd.f32 %v610, %v794
        %v796 = vpop.f32.mrb[0].mxu0
        %797 = vmatprep.mubr.f32.mxu0 0.0
        %798 = vmatmul.mubr.f32.gmra.mrb[0].mxu0 %v626
        %v799 = vpop.f32.mrb[0].mxu0
        %v800 = vadd.f32 %v610, %v799
        %v801 = vpop.f32.mrb[0].mxu0
        %802 = vmatprep.mubr.f32.mxu0 0.0
        %803 = vmatmul.mubr.f32.gmra.mrb[0].mxu0 %v629
        %v804 = vpop.f32.mrb[0].mxu0
        %v805 = vadd.f32 %v610, %v804
        %v806 = vpop.f32.mrb[0].mxu0
        %807 = vmatprep.mubr.f32.mxu0 0.0
        %808 = vmatmul.mubr.f32.gmra.mrb[0].mxu0 %v632
        %v809 = vpop.f32.mrb[0].mxu0
        %v810 = vadd.f32 %v610, %v809
        %v811 = vpop.f32.mrb[0].mxu0
        %812 = vmatprep.mubr.f32.mxu0 0.0
        %813 = vmatmul.mubr.f32.gmra.mrb[0].mxu0 %v635
        %v814 = vpop.f32.mrb[0].mxu0
        %v815 = vadd.f32 %v610, %v814
        %v816 = vpop.f32.mrb[0].mxu0
        %817 = vmatprep.mubr.f32.mxu0 0.0
        %818 = vmatmul.mubr.f32.gmra.mrb[0].mxu0 %v638
        %v819 = vpop.f32.mrb[0].mxu0
        %v820 = vadd.f32 %v610, %v819
        %v821 = vpop.f32.mrb[0].mxu0
        %822 = vmatprep.mubr.f32.mxu0 0.0
        %823 = vmatmul.mubr.f32.gmra.mrb[0].mxu0 %v641
        %v824 = vpop.f32.mrb[0].mxu0
        %v825 = vadd.f32 %v610, %v824
        %v826 = vpop.f32.mrb[0].mxu0
        %827 = vmatprep.mubr.f32.mxu0 0.0
        %828 = vmatmul.mubr.f32.gmra.mrb[0].mxu0 %v644
        %v829 = vpop.f32.mrb[0].mxu0
        %v830 = vadd.f32 %v610, %v829
        %v831 = vpop.f32.mrb[0].mxu0
        %832 = vmatprep.mubr.f32.mxu0 0.0
        %833 = vmatmul.mubr.f32.gmra.mrb[0].mxu0 %v647
        %v834 = vpop.f32.mrb[0].mxu0
        %v835 = vadd.f32 %v610, %v834
        %v836 = vpop.f32.mrb[0].mxu0
        %837 = vmatprep.mubr.f32.mxu0 0.0
        %838 = vmatmul.mubr.f32.gmra.mrb[0].mxu0 %v650
        %v839 = vpop.f32.mrb[0].mxu0
        %v840 = vadd.f32 %v610, %v839
        %v841 = vpop.f32.mrb[0].mxu0
        %842 = vmatprep.mubr.f32.mxu0 0.0
        %843 = vmatmul.mubr.f32.gmra.mrb[0].mxu0 %v653
        %v844 = vpop.f32.mrb[0].mxu0
        %v845 = vadd.f32 %v610, %v844
        %v846 = vpop.f32.mrb[0].mxu0
        %847 = vmatprep.mubr.f32.mxu0 0.0
        %848 = vmatmul.mubr.f32.gmra.mrb[0].mxu0 %v656
        %v849 = vpop.f32.mrb[0].mxu0
        %v850 = vadd.f32 %v610, %v849
        %v851 = vpop.f32.mrb[0].mxu0
        %852 = vmatprep.mubr.f32.mxu0 0.0
        %853 = vmatmul.mubr.f32.gmra.mrb[0].mxu0 %v659
        %v854 = vpop.f32.mrb[0].mxu0
        %v855 = vadd.f32 %v610, %v854
        %v856 = vpop.f32.mrb[0].mxu0
        %857 = vmatprep.mubr.f32.mxu0 0.0
        %858 = vmatmul.mubr.f32.gmra.mrb[0].mxu0 %v662
        %v859 = vpop.f32.mrb[0].mxu0
        %v860 = vadd.f32 %v610, %v859
        %v861 = vpop.f32.mrb[0].mxu0
        %862 = vmatprep.mubr.f32.mxu0 0.0
        %863 = vmatmul.mubr.f32.gmra.mrb[0].mxu0 %v665
        %v864 = vpop.f32.mrb[0].mxu0
        %v865 = vadd.f32 %v610, %v864
        %v866 = vpop.f32.mrb[0].mxu0
        %867 = vmatprep.mubr.f32.mxu0 0.0
        %868 = vmatmul.mubr.f32.gmra.mrb[0].mxu0 %v668
        %v869 = vpop.f32.mrb[0].mxu0
        %v870 = vadd.f32 %v610, %v869
        %v871 = vpop.f32.mrb[0].mxu0
        %872 = vmatprep.mubr.f32.mxu0 0.0
        %873 = vmatmul.mubr.f32.gmra.mrb[0].mxu0 %v671
        %v874 = vpop.f32.mrb[0].mxu0
        %v875 = vadd.f32 %v610, %v874
        %v876 = vpop.f32.mrb[0].mxu0
        %877 = vmatprep.mubr.f32.mxu0 0.0
        %878 = vmatmul.mubr.f32.gmra.mrb[0].mxu0 %v674
        %v879 = vpop.f32.mrb[0].mxu0
        %v880 = vadd.f32 %v610, %v879
        %v881 = vpop.f32.mrb[0].mxu0
        %882 = vmatprep.mubr.f32.mxu0 0.0
        %883 = vmatmul.mubr.f32.gmra.mrb[0].mxu0 %v677
        %v884 = vpop.f32.mrb[0].mxu0
        %v885 = vadd.f32 %v610, %v884
        %v886 = vpop.f32.mrb[0].mxu0
        %887 = vmatprep.mubr.f32.mxu0 0.0
        %888 = vmatmul.mubr.f32.gmra.mrb[0].mxu0 %v680
        %v889 = vpop.f32.mrb[0].mxu0
        %v890 = vadd.f32 %v610, %v889
        %v891 = vpop.f32.mrb[0].mxu0
        %892 = vmatprep.mubr.f32.mxu0 0.0
        %893 = vmatmul.mubr.f32.gmra.mrb[0].mxu0 %v683
        %v894 = vpop.f32.mrb[0].mxu0
        %v895 = vadd.f32 %v610, %v894
        %v896 = vpop.f32.mrb[0].mxu0
        %897 = vmatprep.mubr.f32.mxu0 0.0
        %898 = vmatmul.mubr.f32.gmra.mrb[0].mxu0 %v686
        %v899 = vpop.f32.mrb[0].mxu0
        %v900 = vadd.f32 %v610, %v899
        %v901 = vpop.f32.mrb[0].mxu0
        %902 = vmatprep.mubr.f32.mxu0 0.0
        %903 = vmatmul.mubr.f32.gmra.mrb[0].mxu0 %v689
        %v904 = vpop.f32.mrb[0].mxu0
        %v905 = vadd.f32 %v610, %v904
        %v906 = vpop.f32.mrb[0].mxu0
        %907 = vmatprep.mubr.f32.mxu0 0.0
        %908 = vmatmul.mubr.f32.gmra.mrb[0].mxu0 %v692
        %v909 = vpop.f32.mrb[0].mxu0
        %v910 = vadd.f32 %v610, %v909
        %v911 = vpop.f32.mrb[0].mxu0
        %912 = vmatprep.mubr.f32.mxu0 0.0
        %913 = vmatmul.mubr.f32.gmra.mrb[0].mxu0 %v695
        %v914 = vpop.f32.mrb[0].mxu0
        %v915 = vadd.f32 %v610, %v914
        %v916 = vpop.f32.mrb[0].mxu0
        %917 = vmatprep.mubr.f32.mxu0 0.0
        %918 = vmatmul.mubr.f32.gmra.mrb[0].mxu0 %v698
        %v919 = vpop.f32.mrb[0].mxu0
        %v920 = vadd.f32 %v610, %v919
        %v921 = vpop.f32.mrb[0].mxu0
        %922 = vmatprep.mubr.f32.mxu0 0.0
        %923 = vmatmul.mubr.f32.gmra.mrb[0].mxu0 %v701
        %v924 = vpop.f32.mrb[0].mxu0
        %v925 = vadd.f32 %v610, %v924
        %v926 = vpop.f32.mrb[0].mxu0
        %927 = vmatprep.mubr.f32.mxu0 0.0
        %928 = vmatmul.mubr.f32.gmra.mrb[0].mxu0 %v704
        %v929 = vpop.f32.mrb[0].mxu0
        %v930 = vadd.f32 %v610, %v929
        %v931 = vpop.f32.mrb[0].mxu0
        %932 = vmatprep.mubr.f32.mxu0 0.0
        %933 = vmatmul.mubr.f32.gmra.mrb[0].mxu0 %v707
        %v934 = vpop.f32.mrb[0].mxu0
        %v935 = vadd.f32 %v610, %v934
        %v936 = vpop.f32.mrb[0].mxu0
        %937 = vdwg.mxu0
        %v938 = vmax.f32 %v780, 0.0
        %v939 = vmax.f32 %v785, 0.0
        %v940 = vmax.f32 %v790, 0.0
        %v941 = vmax.f32 %v795, 0.0
        %v942 = vmax.f32 %v800, 0.0
        %v943 = vmax.f32 %v805, 0.0
        %v944 = vmax.f32 %v810, 0.0
        %v945 = vmax.f32 %v815, 0.0
        %v946 = vmax.f32 %v820, 0.0
        %v947 = vmax.f32 %v825, 0.0
        %v948 = vmax.f32 %v830, 0.0
        %v949 = vmax.f32 %v835, 0.0
        %v950 = vmax.f32 %v840, 0.0
        %v951 = vmax.f32 %v845, 0.0
        %v952 = vmax.f32 %v850, 0.0
        %v953 = vmax.f32 %v855, 0.0
        %v954 = vmax.f32 %v860, 0.0
        %v955 = vmax.f32 %v865, 0.0
        %v956 = vmax.f32 %v870, 0.0
        %v957 = vmax.f32 %v875, 0.0
        %v958 = vmax.f32 %v880, 0.0
        %v959 = vmax.f32 %v885, 0.0
        %v960 = vmax.f32 %v890, 0.0
        %v961 = vmax.f32 %v895, 0.0
        %v962 = vmax.f32 %v900, 0.0
        %v963 = vmax.f32 %v905, 0.0
        %v964 = vmax.f32 %v910, 0.0
        %v965 = vmax.f32 %v915, 0.0
        %v966 = vmax.f32 %v920, 0.0
        %v967 = vmax.f32 %v925, 0.0
        %v968 = vmax.f32 %v930, 0.0
        %v969 = vmax.f32 %v935, 0.0
        %v970 = vld [vmem:[#allocation5] sm:$0xf]
        %v971 = vld [vmem:[#allocation7] sm:$0x1]
        %v973 = vlaneseq
        %v974 = vshrl.u32 %v973, 7
        %v975 = vsub.s32 0, %v974
        %v976 = vrot.slane %v971, %v975
        %v979 = vsel %vm709, %v970, 0
        %981 = vmatprep.subr.mxu0 0.0
        %982 = vmatpush1.msra.mxu0 %v979
        %983 = vmatprep.subr.mxu0 0.0
        %984 = vmatpush1.msra.mxu0 0.0
        %985 = vmatprep.subr.mxu0 0.0
        %986 = vmatpush1.msra.mxu0 0.0
        %987 = vmatprep.subr.mxu0 0.0
        %988 = vmatpush1.msra.mxu0 0.0
        %989 = vmatprep.subr.mxu0 0.0
        %990 = vmatpush1.msra.mxu0 0.0
        %991 = vmatprep.subr.mxu0 0.0
        %992 = vmatpush1.msra.mxu0 0.0
        %993 = vmatprep.subr.mxu0 0.0
        %994 = vmatpush1.msra.mxu0 0.0
        %995 = vmatprep.subr.mxu0 0.0
        %996 = vmatpush1.msra.mxu0 0.0
        %997 = vmatprep.subr.mxu0 0.0
        %998 = vmatpush1.msra.mxu0 0.0
        %999 = vmatprep.subr.mxu0 0.0
        %1000 = vmatpush1.msra.mxu0 0.0
        %1001 = vmatprep.subr.mxu0 0.0
        %1002 = vmatpush1.msra.mxu0 0.0
        %1003 = vmatprep.subr.mxu0 0.0
        %1004 = vmatpush1.msra.mxu0 0.0
        %1005 = vmatprep.subr.mxu0 0.0
        %1006 = vmatpush1.msra.mxu0 0.0
        %1007 = vmatprep.subr.mxu0 0.0
        %1008 = vmatpush1.msra.mxu0 0.0
        %1009 = vmatprep.subr.mxu0 0.0
        %1010 = vmatpush1.msra.mxu0 0.0
        %1011 = vmatprep.subr.mxu0 0.0
        %1012 = vmatpush1.msra.mxu0 0.0
        %1013 = vmatprep.subr.mxu0 0.0
        %1014 = vmatpush1.msra.mxu0 0.0
        %1015 = vmatprep.subr.mxu0 0.0
        %1016 = vmatpush1.msra.mxu0 0.0
        %1017 = vmatprep.subr.mxu0 0.0
        %1018 = vmatpush1.msra.mxu0 0.0
        %1019 = vmatprep.subr.mxu0 0.0
        %1020 = vmatpush1.msra.mxu0 0.0
        %1021 = vmatprep.subr.mxu0 0.0
        %1022 = vmatpush1.msra.mxu0 0.0
        %1023 = vmatprep.subr.mxu0 0.0
        %1024 = vmatpush1.msra.mxu0 0.0
        %1025 = vmatprep.subr.mxu0 0.0
        %1026 = vmatpush1.msra.mxu0 0.0
        %1027 = vmatprep.subr.mxu0 0.0
        %1028 = vmatpush1.msra.mxu0 0.0
        %1029 = vmatprep.subr.mxu0 0.0
        %1030 = vmatpush1.msra.mxu0 0.0
        %1031 = vmatprep.subr.mxu0 0.0
        %1032 = vmatpush1.msra.mxu0 0.0
        %1033 = vmatprep.subr.mxu0 0.0
        %1034 = vmatpush1.msra.mxu0 0.0
        %1035 = vmatprep.subr.mxu0 0.0
        %1036 = vmatpush1.msra.mxu0 0.0
        %1037 = vmatprep.subr.mxu0 0.0
        %1038 = vmatpush1.msra.mxu0 0.0
        %1039 = vmatprep.subr.mxu0 0.0
        %1040 = vmatpush1.msra.mxu0 0.0
        %1041 = vmatprep.subr.mxu0 0.0
        %1042 = vmatpush1.msra.mxu0 0.0
        %1043 = vmatprep.subr.mxu0 0.0
        %1044 = vmatpush1.msra.mxu0 0.0
        %1045 = vmatprep.mubr.f32.mxu0 0.0
        %1046 = vmatmul.mubr.f32.gmra.mrb[0].mxu0 %v614
        %v1047 = vpop.f32.mrb[0].mxu0
        %v1048 = vadd.f32 %v976, %v1047
        %v1049 = vpop.f32.mrb[0].mxu0
        %1050 = vmatprep.mubr.f32.mxu0 0.0
        %1051 = vmatmul.mubr.f32.gmra.mrb[0].mxu0 %v617
        %v1052 = vpop.f32.mrb[0].mxu0
        %v1053 = vadd.f32 %v976, %v1052
        %v1054 = vpop.f32.mrb[0].mxu0
        %1055 = vmatprep.mubr.f32.mxu0 0.0
        %1056 = vmatmul.mubr.f32.gmra.mrb[0].mxu0 %v620
        %v1057 = vpop.f32.mrb[0].mxu0
        %v1058 = vadd.f32 %v976, %v1057
        %v1059 = vpop.f32.mrb[0].mxu0
        %1060 = vmatprep.mubr.f32.mxu0 0.0
        %1061 = vmatmul.mubr.f32.gmra.mrb[0].mxu0 %v623
        %v1062 = vpop.f32.mrb[0].mxu0
        %v1063 = vadd.f32 %v976, %v1062
        %v1064 = vpop.f32.mrb[0].mxu0
        %1065 = vmatprep.mubr.f32.mxu0 0.0
        %1066 = vmatmul.mubr.f32.gmra.mrb[0].mxu0 %v626
        %v1067 = vpop.f32.mrb[0].mxu0
        %v1068 = vadd.f32 %v976, %v1067
        %v1069 = vpop.f32.mrb[0].mxu0
        %1070 = vmatprep.mubr.f32.mxu0 0.0
        %1071 = vmatmul.mubr.f32.gmra.mrb[0].mxu0 %v629
        %v1072 = vpop.f32.mrb[0].mxu0
        %v1073 = vadd.f32 %v976, %v1072
        %v1074 = vpop.f32.mrb[0].mxu0
        %1075 = vmatprep.mubr.f32.mxu0 0.0
        %1076 = vmatmul.mubr.f32.gmra.mrb[0].mxu0 %v632
        %v1077 = vpop.f32.mrb[0].mxu0
        %v1078 = vadd.f32 %v976, %v1077
        %v1079 = vpop.f32.mrb[0].mxu0
        %1080 = vmatprep.mubr.f32.mxu0 0.0
        %1081 = vmatmul.mubr.f32.gmra.mrb[0].mxu0 %v635
        %v1082 = vpop.f32.mrb[0].mxu0
        %v1083 = vadd.f32 %v976, %v1082
        %v1084 = vpop.f32.mrb[0].mxu0
        %1085 = vmatprep.mubr.f32.mxu0 0.0
        %1086 = vmatmul.mubr.f32.gmra.mrb[0].mxu0 %v638
        %v1087 = vpop.f32.mrb[0].mxu0
        %v1088 = vadd.f32 %v976, %v1087
        %v1089 = vpop.f32.mrb[0].mxu0
        %1090 = vmatprep.mubr.f32.mxu0 0.0
        %1091 = vmatmul.mubr.f32.gmra.mrb[0].mxu0 %v641
        %v1092 = vpop.f32.mrb[0].mxu0
        %v1093 = vadd.f32 %v976, %v1092
        %v1094 = vpop.f32.mrb[0].mxu0
        %1095 = vmatprep.mubr.f32.mxu0 0.0
        %1096 = vmatmul.mubr.f32.gmra.mrb[0].mxu0 %v644
        %v1097 = vpop.f32.mrb[0].mxu0
        %v1098 = vadd.f32 %v976, %v1097
        %v1099 = vpop.f32.mrb[0].mxu0
        %1100 = vmatprep.mubr.f32.mxu0 0.0
        %1101 = vmatmul.mubr.f32.gmra.mrb[0].mxu0 %v647
        %v1102 = vpop.f32.mrb[0].mxu0
        %v1103 = vadd.f32 %v976, %v1102
        %v1104 = vpop.f32.mrb[0].mxu0
        %1105 = vmatprep.mubr.f32.mxu0 0.0
        %1106 = vmatmul.mubr.f32.gmra.mrb[0].mxu0 %v650
        %v1107 = vpop.f32.mrb[0].mxu0
        %v1108 = vadd.f32 %v976, %v1107
        %v1109 = vpop.f32.mrb[0].mxu0
        %1110 = vmatprep.mubr.f32.mxu0 0.0
        %1111 = vmatmul.mubr.f32.gmra.mrb[0].mxu0 %v653
        %v1112 = vpop.f32.mrb[0].mxu0
        %v1113 = vadd.f32 %v976, %v1112
        %v1114 = vpop.f32.mrb[0].mxu0
        %1115 = vmatprep.mubr.f32.mxu0 0.0
        %1116 = vmatmul.mubr.f32.gmra.mrb[0].mxu0 %v656
        %v1117 = vpop.f32.mrb[0].mxu0
        %v1118 = vadd.f32 %v976, %v1117
        %v1119 = vpop.f32.mrb[0].mxu0
        %1120 = vmatprep.mubr.f32.mxu0 0.0
        %1121 = vmatmul.mubr.f32.gmra.mrb[0].mxu0 %v659
        %v1122 = vpop.f32.mrb[0].mxu0
        %v1123 = vadd.f32 %v976, %v1122
        %v1124 = vpop.f32.mrb[0].mxu0
        %1125 = vmatprep.mubr.f32.mxu0 0.0
        %1126 = vmatmul.mubr.f32.gmra.mrb[0].mxu0 %v662
        %v1127 = vpop.f32.mrb[0].mxu0
        %v1128 = vadd.f32 %v976, %v1127
        %v1129 = vpop.f32.mrb[0].mxu0
        %1130 = vmatprep.mubr.f32.mxu0 0.0
        %1131 = vmatmul.mubr.f32.gmra.mrb[0].mxu0 %v665
        %v1132 = vpop.f32.mrb[0].mxu0
        %v1133 = vadd.f32 %v976, %v1132
        %v1134 = vpop.f32.mrb[0].mxu0
        %1135 = vmatprep.mubr.f32.mxu0 0.0
        %1136 = vmatmul.mubr.f32.gmra.mrb[0].mxu0 %v668
        %v1137 = vpop.f32.mrb[0].mxu0
        %v1138 = vadd.f32 %v976, %v1137
        %v1139 = vpop.f32.mrb[0].mxu0
        %1140 = vmatprep.mubr.f32.mxu0 0.0
        %1141 = vmatmul.mubr.f32.gmra.mrb[0].mxu0 %v671
        %v1142 = vpop.f32.mrb[0].mxu0
        %v1143 = vadd.f32 %v976, %v1142
        %v1144 = vpop.f32.mrb[0].mxu0
        %1145 = vmatprep.mubr.f32.mxu0 0.0
        %1146 = vmatmul.mubr.f32.gmra.mrb[0].mxu0 %v674
        %v1147 = vpop.f32.mrb[0].mxu0
        %v1148 = vadd.f32 %v976, %v1147
        %v1149 = vpop.f32.mrb[0].mxu0
        %1150 = vmatprep.mubr.f32.mxu0 0.0
        %1151 = vmatmul.mubr.f32.gmra.mrb[0].mxu0 %v677
        %v1152 = vpop.f32.mrb[0].mxu0
        %v1153 = vadd.f32 %v976, %v1152
        %v1154 = vpop.f32.mrb[0].mxu0
        %1155 = vmatprep.mubr.f32.mxu0 0.0
        %1156 = vmatmul.mubr.f32.gmra.mrb[0].mxu0 %v680
        %v1157 = vpop.f32.mrb[0].mxu0
        %v1158 = vadd.f32 %v976, %v1157
        %v1159 = vpop.f32.mrb[0].mxu0
        %1160 = vmatprep.mubr.f32.mxu0 0.0
        %1161 = vmatmul.mubr.f32.gmra.mrb[0].mxu0 %v683
        %v1162 = vpop.f32.mrb[0].mxu0
        %v1163 = vadd.f32 %v976, %v1162
        %v1164 = vpop.f32.mrb[0].mxu0
        %1165 = vmatprep.mubr.f32.mxu0 0.0
        %1166 = vmatmul.mubr.f32.gmra.mrb[0].mxu0 %v686
        %v1167 = vpop.f32.mrb[0].mxu0
        %v1168 = vadd.f32 %v976, %v1167
        %v1169 = vpop.f32.mrb[0].mxu0
        %1170 = vmatprep.mubr.f32.mxu0 0.0
        %1171 = vmatmul.mubr.f32.gmra.mrb[0].mxu0 %v689
        %v1172 = vpop.f32.mrb[0].mxu0
        %v1173 = vadd.f32 %v976, %v1172
        %v1174 = vpop.f32.mrb[0].mxu0
        %1175 = vmatprep.mubr.f32.mxu0 0.0
        %1176 = vmatmul.mubr.f32.gmra.mrb[0].mxu0 %v692
        %v1177 = vpop.f32.mrb[0].mxu0
        %v1178 = vadd.f32 %v976, %v1177
        %v1179 = vpop.f32.mrb[0].mxu0
        %1180 = vmatprep.mubr.f32.mxu0 0.0
        %1181 = vmatmul.mubr.f32.gmra.mrb[0].mxu0 %v695
        %v1182 = vpop.f32.mrb[0].mxu0
        %v1183 = vadd.f32 %v976, %v1182
        %v1184 = vpop.f32.mrb[0].mxu0
        %1185 = vmatprep.mubr.f32.mxu0 0.0
        %1186 = vmatmul.mubr.f32.gmra.mrb[0].mxu0 %v698
        %v1187 = vpop.f32.mrb[0].mxu0
        %v1188 = vadd.f32 %v976, %v1187
        %v1189 = vpop.f32.mrb[0].mxu0
        %1190 = vmatprep.mubr.f32.mxu0 0.0
        %1191 = vmatmul.mubr.f32.gmra.mrb[0].mxu0 %v701
        %v1192 = vpop.f32.mrb[0].mxu0
        %v1193 = vadd.f32 %v976, %v1192
        %v1194 = vpop.f32.mrb[0].mxu0
        %1195 = vmatprep.mubr.f32.mxu0 0.0
        %1196 = vmatmul.mubr.f32.gmra.mrb[0].mxu0 %v704
        %v1197 = vpop.f32.mrb[0].mxu0
        %v1198 = vadd.f32 %v976, %v1197
        %v1199 = vpop.f32.mrb[0].mxu0
        %1200 = vmatprep.mubr.f32.mxu0 0.0
        %1201 = vmatmul.mubr.f32.gmra.mrb[0].mxu0 %v707
        %v1202 = vpop.f32.mrb[0].mxu0
        %v1203 = vadd.f32 %v976, %v1202
        %v1204 = vpop.f32.mrb[0].mxu0
        %1205 = vdwg.mxu0
        %v1206 = vmax.f32 %v1048, 0.0
        %v1207 = vmax.f32 %v1053, 0.0
        %v1208 = vmax.f32 %v1058, 0.0
        %v1209 = vmax.f32 %v1063, 0.0
        %v1210 = vmax.f32 %v1068, 0.0
        %v1211 = vmax.f32 %v1073, 0.0
        %v1212 = vmax.f32 %v1078, 0.0
        %v1213 = vmax.f32 %v1083, 0.0
        %v1214 = vmax.f32 %v1088, 0.0
        %v1215 = vmax.f32 %v1093, 0.0
        %v1216 = vmax.f32 %v1098, 0.0
        %v1217 = vmax.f32 %v1103, 0.0
        %v1218 = vmax.f32 %v1108, 0.0
        %v1219 = vmax.f32 %v1113, 0.0
        %v1220 = vmax.f32 %v1118, 0.0
        %v1221 = vmax.f32 %v1123, 0.0
        %v1222 = vmax.f32 %v1128, 0.0
        %v1223 = vmax.f32 %v1133, 0.0
        %v1224 = vmax.f32 %v1138, 0.0
        %v1225 = vmax.f32 %v1143, 0.0
        %v1226 = vmax.f32 %v1148, 0.0
        %v1227 = vmax.f32 %v1153, 0.0
        %v1228 = vmax.f32 %v1158, 0.0
        %v1229 = vmax.f32 %v1163, 0.0
        %v1230 = vmax.f32 %v1168, 0.0
        %v1231 = vmax.f32 %v1173, 0.0
        %v1232 = vmax.f32 %v1178, 0.0
        %v1233 = vmax.f32 %v1183, 0.0
        %v1234 = vmax.f32 %v1188, 0.0
        %v1235 = vmax.f32 %v1193, 0.0
        %v1236 = vmax.f32 %v1198, 0.0
        %v1237 = vmax.f32 %v1203, 0.0
        %v1238 = vld [vmem:[#allocation8] sm:$0x1]
        %v1240 = vlaneseq
        %v1241 = vshrl.u32 %v1240, 7
        %v1242 = vsub.s32 0, %v1241
        %v1243 = vrot.slane %v1238, %v1242
        %v1245 = vmul.f32 %v1206, %v1243
        %v1246 = vmul.f32 %v1207, %v1243
        %v1247 = vmul.f32 %v1208, %v1243
        %v1248 = vmul.f32 %v1209, %v1243
        %v1249 = vmul.f32 %v1210, %v1243
        %v1250 = vmul.f32 %v1211, %v1243
        %v1251 = vmul.f32 %v1212, %v1243
        %v1252 = vmul.f32 %v1213, %v1243
        %v1253 = vmul.f32 %v1214, %v1243
        %v1254 = vmul.f32 %v1215, %v1243
        %v1255 = vmul.f32 %v1216, %v1243
        %v1256 = vmul.f32 %v1217, %v1243
        %v1257 = vmul.f32 %v1218, %v1243
        %v1258 = vmul.f32 %v1219, %v1243
        %v1259 = vmul.f32 %v1220, %v1243
        %v1260 = vmul.f32 %v1221, %v1243
        %v1261 = vmul.f32 %v1222, %v1243
        %v1262 = vmul.f32 %v1223, %v1243
        %v1263 = vmul.f32 %v1224, %v1243
        %v1264 = vmul.f32 %v1225, %v1243
        %v1265 = vmul.f32 %v1226, %v1243
        %v1266 = vmul.f32 %v1227, %v1243
        %v1267 = vmul.f32 %v1228, %v1243
        %v1268 = vmul.f32 %v1229, %v1243
        %v1269 = vmul.f32 %v1230, %v1243
        %v1270 = vmul.f32 %v1231, %v1243
        %v1271 = vmul.f32 %v1232, %v1243
        %v1272 = vmul.f32 %v1233, %v1243
        %v1273 = vmul.f32 %v1234, %v1243
        %v1274 = vmul.f32 %v1235, %v1243
        %v1275 = vmul.f32 %v1236, %v1243
        %v1276 = vmul.f32 %v1237, %v1243
        %v1277 = vld [vmem:[#allocation10] sm:$0x1]
        %v1279 = vlaneseq
        %v1280 = vshrl.u32 %v1279, 7
        %v1281 = vsub.s32 0, %v1280
        %v1282 = vrot.slane %v1277, %v1281
        %v1284 = vadd.f32 %v1245, %v1282
        %v1285 = vadd.f32 %v1246, %v1282
        %v1286 = vadd.f32 %v1247, %v1282
        %v1287 = vadd.f32 %v1248, %v1282
        %v1288 = vadd.f32 %v1249, %v1282
        %v1289 = vadd.f32 %v1250, %v1282
        %v1290 = vadd.f32 %v1251, %v1282
        %v1291 = vadd.f32 %v1252, %v1282
        %v1292 = vadd.f32 %v1253, %v1282
        %v1293 = vadd.f32 %v1254, %v1282
        %v1294 = vadd.f32 %v1255, %v1282
        %v1295 = vadd.f32 %v1256, %v1282
        %v1296 = vadd.f32 %v1257, %v1282
        %v1297 = vadd.f32 %v1258, %v1282
        %v1298 = vadd.f32 %v1259, %v1282
        %v1299 = vadd.f32 %v1260, %v1282
        %v1300 = vadd.f32 %v1261, %v1282
        %v1301 = vadd.f32 %v1262, %v1282
        %v1302 = vadd.f32 %v1263, %v1282
        %v1303 = vadd.f32 %v1264, %v1282
        %v1304 = vadd.f32 %v1265, %v1282
        %v1305 = vadd.f32 %v1266, %v1282
        %v1306 = vadd.f32 %v1267, %v1282
        %v1307 = vadd.f32 %v1268, %v1282
        %v1308 = vadd.f32 %v1269, %v1282
        %v1309 = vadd.f32 %v1270, %v1282
        %v1310 = vadd.f32 %v1271, %v1282
        %v1311 = vadd.f32 %v1272, %v1282
        %v1312 = vadd.f32 %v1273, %v1282
        %v1313 = vadd.f32 %v1274, %v1282
        %v1314 = vadd.f32 %v1275, %v1282
        %v1315 = vadd.f32 %v1276, %v1282
        %v1316 = vmax.f32 %v1284, 0.0
        %v1317 = vmax.f32 %v1285, 0.0
        %v1318 = vmax.f32 %v1286, 0.0
        %v1319 = vmax.f32 %v1287, 0.0
        %v1320 = vmax.f32 %v1288, 0.0
        %v1321 = vmax.f32 %v1289, 0.0
        %v1322 = vmax.f32 %v1290, 0.0
        %v1323 = vmax.f32 %v1291, 0.0
        %v1324 = vmax.f32 %v1292, 0.0
        %v1325 = vmax.f32 %v1293, 0.0
        %v1326 = vmax.f32 %v1294, 0.0
        %v1327 = vmax.f32 %v1295, 0.0
        %v1328 = vmax.f32 %v1296, 0.0
        %v1329 = vmax.f32 %v1297, 0.0
        %v1330 = vmax.f32 %v1298, 0.0
        %v1331 = vmax.f32 %v1299, 0.0
        %v1332 = vmax.f32 %v1300, 0.0
        %v1333 = vmax.f32 %v1301, 0.0
        %v1334 = vmax.f32 %v1302, 0.0
        %v1335 = vmax.f32 %v1303, 0.0
        %v1336 = vmax.f32 %v1304, 0.0
        %v1337 = vmax.f32 %v1305, 0.0
        %v1338 = vmax.f32 %v1306, 0.0
        %v1339 = vmax.f32 %v1307, 0.0
        %v1340 = vmax.f32 %v1308, 0.0
        %v1341 = vmax.f32 %v1309, 0.0
        %v1342 = vmax.f32 %v1310, 0.0
        %v1343 = vmax.f32 %v1311, 0.0
        %v1344 = vmax.f32 %v1312, 0.0
        %v1345 = vmax.f32 %v1313, 0.0
        %v1346 = vmax.f32 %v1314, 0.0
        %v1347 = vmax.f32 %v1315, 0.0
        %v1348 = vmin.f32 %v1316, 6.0
        %v1349 = vmin.f32 %v1317, 6.0
        %v1350 = vmin.f32 %v1318, 6.0
        %v1351 = vmin.f32 %v1319, 6.0
        %v1352 = vmin.f32 %v1320, 6.0
        %v1353 = vmin.f32 %v1321, 6.0
        %v1354 = vmin.f32 %v1322, 6.0
        %v1355 = vmin.f32 %v1323, 6.0
        %v1356 = vmin.f32 %v1324, 6.0
        %v1357 = vmin.f32 %v1325, 6.0
        %v1358 = vmin.f32 %v1326, 6.0
        %v1359 = vmin.f32 %v1327, 6.0
        %v1360 = vmin.f32 %v1328, 6.0
        %v1361 = vmin.f32 %v1329, 6.0
        %v1362 = vmin.f32 %v1330, 6.0
        %v1363 = vmin.f32 %v1331, 6.0
        %v1364 = vmin.f32 %v1332, 6.0
        %v1365 = vmin.f32 %v1333, 6.0
        %v1366 = vmin.f32 %v1334, 6.0
        %v1367 = vmin.f32 %v1335, 6.0
        %v1368 = vmin.f32 %v1336, 6.0
        %v1369 = vmin.f32 %v1337, 6.0
        %v1370 = vmin.f32 %v1338, 6.0
        %v1371 = vmin.f32 %v1339, 6.0
        %v1372 = vmin.f32 %v1340, 6.0
        %v1373 = vmin.f32 %v1341, 6.0
        %v1374 = vmin.f32 %v1342, 6.0
        %v1375 = vmin.f32 %v1343, 6.0
        %v1376 = vmin.f32 %v1344, 6.0
        %v1377 = vmin.f32 %v1345, 6.0
        %v1378 = vmin.f32 %v1346, 6.0
        %v1379 = vmin.f32 %v1347, 6.0
        %vm1413 = vcmask 1040384
        %v1414 = vrot.slane 0.0, 7
        %v1415 = vsel %vm1413, %v1414, %v1414
        %v1416 = vrot.slane %v1348, 7
        %v1417 = vrot.slane %v1349, 7
        %v1418 = vsel %vm1413, %v1416, %v1417
        %v1419 = vrot.slane %v1350, 7
        %v1420 = vrot.slane %v1351, 7
        %v1421 = vsel %vm1413, %v1419, %v1420
        %v1422 = vrot.slane %v1352, 7
        %v1423 = vrot.slane %v1353, 7
        %v1424 = vsel %vm1413, %v1422, %v1423
        %v1425 = vrot.slane %v1354, 7
        %v1426 = vrot.slane %v1355, 7
        %v1427 = vsel %vm1413, %v1425, %v1426
        %v1428 = vrot.slane %v1356, 7
        %v1429 = vrot.slane %v1357, 7
        %v1430 = vsel %vm1413, %v1428, %v1429
        %v1431 = vrot.slane %v1358, 7
        %v1432 = vrot.slane %v1359, 7
        %v1433 = vsel %vm1413, %v1431, %v1432
        %v1434 = vrot.slane %v1360, 7
        %v1435 = vrot.slane %v1361, 7
        %v1436 = vsel %vm1413, %v1434, %v1435
        %v1437 = vrot.slane %v1362, 7
        %v1438 = vrot.slane %v1363, 7
        %v1439 = vsel %vm1413, %v1437, %v1438
        %v1440 = vrot.slane %v1364, 7
        %v1441 = vrot.slane %v1365, 7
        %v1442 = vsel %vm1413, %v1440, %v1441
        %v1443 = vrot.slane %v1366, 7
        %v1444 = vrot.slane %v1367, 7
        %v1445 = vsel %vm1413, %v1443, %v1444
        %v1446 = vrot.slane %v1368, 7
        %v1447 = vrot.slane %v1369, 7
        %v1448 = vsel %vm1413, %v1446, %v1447
        %v1449 = vrot.slane %v1370, 7
        %v1450 = vrot.slane %v1371, 7
        %v1451 = vsel %vm1413, %v1449, %v1450
        %v1452 = vrot.slane %v1372, 7
        %v1453 = vrot.slane %v1373, 7
        %v1454 = vsel %vm1413, %v1452, %v1453
        %v1455 = vrot.slane %v1374, 7
        %v1456 = vrot.slane %v1375, 7
        %v1457 = vsel %vm1413, %v1455, %v1456
        %v1458 = vrot.slane %v1376, 7
        %v1459 = vrot.slane %v1377, 7
        %v1460 = vsel %vm1413, %v1458, %v1459
        %v1461 = vrot.slane %v1378, 7
        %v1462 = vrot.slane %v1379, 7
        %v1463 = vsel %vm1413, %v1461, %v1462
        %v1498 = vsel %vm1413, 0.0, %v1414
        %v1499 = vsel %vm1413, 0.0, %v1416
        %v1500 = vsel %vm1413, 0.0, %v1419
        %v1501 = vsel %vm1413, 0.0, %v1422
        %v1502 = vsel %vm1413, 0.0, %v1425
        %v1503 = vsel %vm1413, 0.0, %v1428
        %v1504 = vsel %vm1413, 0.0, %v1431
        %v1505 = vsel %vm1413, 0.0, %v1434
        %v1506 = vsel %vm1413, 0.0, %v1437
        %v1507 = vsel %vm1413, 0.0, %v1440
        %v1508 = vsel %vm1413, 0.0, %v1443
        %v1509 = vsel %vm1413, 0.0, %v1446
        %v1510 = vsel %vm1413, 0.0, %v1449
        %v1511 = vsel %vm1413, 0.0, %v1452
        %v1512 = vsel %vm1413, 0.0, %v1455
        %v1513 = vsel %vm1413, 0.0, %v1458
        %v1514 = vsel %vm1413, 0.0, %v1461
        %vm1515 = vcmask 1046528
        %v1516 = vrot.slane 0.0, 1
        %v1517 = vsel %vm1515, %v1516, %v1516
        %v1518 = vrot.slane %v1348, 1
        %v1519 = vrot.slane %v1349, 1
        %v1520 = vsel %vm1515, %v1518, %v1519
        %v1521 = vrot.slane %v1350, 1
        %v1522 = vrot.slane %v1351, 1
        %v1523 = vsel %vm1515, %v1521, %v1522
        %v1524 = vrot.slane %v1352, 1
        %v1525 = vrot.slane %v1353, 1
        %v1526 = vsel %vm1515, %v1524, %v1525
        %v1527 = vrot.slane %v1354, 1
        %v1528 = vrot.slane %v1355, 1
        %v1529 = vsel %vm1515, %v1527, %v1528
        %v1530 = vrot.slane %v1356, 1
        %v1531 = vrot.slane %v1357, 1
        %v1532 = vsel %vm1515, %v1530, %v1531
        %v1533 = vrot.slane %v1358, 1
        %v1534 = vrot.slane %v1359, 1
        %v1535 = vsel %vm1515, %v1533, %v1534
        %v1536 = vrot.slane %v1360, 1
        %v1537 = vrot.slane %v1361, 1
        %v1538 = vsel %vm1515, %v1536, %v1537
        %v1539 = vrot.slane %v1362, 1
        %v1540 = vrot.slane %v1363, 1
        %v1541 = vsel %vm1515, %v1539, %v1540
        %v1542 = vrot.slane %v1364, 1
        %v1543 = vrot.slane %v1365, 1
        %v1544 = vsel %vm1515, %v1542, %v1543
        %v1545 = vrot.slane %v1366, 1
        %v1546 = vrot.slane %v1367, 1
        %v1547 = vsel %vm1515, %v1545, %v1546
        %v1548 = vrot.slane %v1368, 1
        %v1549 = vrot.slane %v1369, 1
        %v1550 = vsel %vm1515, %v1548, %v1549
        %v1551 = vrot.slane %v1370, 1
        %v1552 = vrot.slane %v1371, 1
        %v1553 = vsel %vm1515, %v1551, %v1552
        %v1554 = vrot.slane %v1372, 1
        %v1555 = vrot.slane %v1373, 1
        %v1556 = vsel %vm1515, %v1554, %v1555
        %v1557 = vrot.slane %v1374, 1
        %v1558 = vrot.slane %v1375, 1
        %v1559 = vsel %vm1515, %v1557, %v1558
        %v1560 = vrot.slane %v1376, 1
        %v1561 = vrot.slane %v1377, 1
        %v1562 = vsel %vm1515, %v1560, %v1561
        %v1563 = vrot.slane %v1378, 1
        %v1564 = vrot.slane %v1379, 1
        %v1565 = vsel %vm1515, %v1563, %v1564
        %v1583 = vsel %vm1515, %v1516, 0.0
        %v1584 = vsel %vm1515, %v1519, 0.0
        %v1585 = vsel %vm1515, %v1522, 0.0
        %v1586 = vsel %vm1515, %v1525, 0.0
        %v1587 = vsel %vm1515, %v1528, 0.0
        %v1588 = vsel %vm1515, %v1531, 0.0
        %v1589 = vsel %vm1515, %v1534, 0.0
        %v1590 = vsel %vm1515, %v1537, 0.0
        %v1591 = vsel %vm1515, %v1540, 0.0
        %v1592 = vsel %vm1515, %v1543, 0.0
        %v1593 = vsel %vm1515, %v1546, 0.0
        %v1594 = vsel %vm1515, %v1549, 0.0
        %v1595 = vsel %vm1515, %v1552, 0.0
        %v1596 = vsel %vm1515, %v1555, 0.0
        %v1597 = vsel %vm1515, %v1558, 0.0
        %v1598 = vsel %vm1515, %v1561, 0.0
        %v1599 = vsel %vm1515, %v1564, 0.0
        %1600 = vrot.lane.b32.xlu0 0.0, 16
        %v1601 = vpop.permute.xlu0 %1600
        %1602 = vrot.lane.b32.xlu0 %v1348, 16
        %v1603 = vpop.permute.xlu0 %1602
        %1604 = vrot.lane.b32.xlu0 %v1349, 16
        %v1605 = vpop.permute.xlu0 %1604
        %1606 = vrot.lane.b32.xlu0 %v1350, 16
        %v1607 = vpop.permute.xlu0 %1606
        %1608 = vrot.lane.b32.xlu0 %v1351, 16
        %v1609 = vpop.permute.xlu0 %1608
        %1610 = vrot.lane.b32.xlu0 %v1352, 16
        %v1611 = vpop.permute.xlu0 %1610
        %1612 = vrot.lane.b32.xlu0 %v1353, 16
        %v1613 = vpop.permute.xlu0 %1612
        %1614 = vrot.lane.b32.xlu0 %v1354, 16
        %v1615 = vpop.permute.xlu0 %1614
        %1616 = vrot.lane.b32.xlu0 %v1355, 16
        %v1617 = vpop.permute.xlu0 %1616
        %1618 = vrot.lane.b32.xlu0 %v1356, 16
        %v1619 = vpop.permute.xlu0 %1618
        %1620 = vrot.lane.b32.xlu0 %v1357, 16
        %v1621 = vpop.permute.xlu0 %1620
        %1622 = vrot.lane.b32.xlu0 %v1358, 16
        %v1623 = vpop.permute.xlu0 %1622
        %1624 = vrot.lane.b32.xlu0 %v1359, 16
        %v1625 = vpop.permute.xlu0 %1624
        %1626 = vrot.lane.b32.xlu0 %v1360, 16
        %v1627 = vpop.permute.xlu0 %1626
        %1628 = vrot.lane.b32.xlu0 %v1361, 16
        %v1629 = vpop.permute.xlu0 %1628
        %1630 = vrot.lane.b32.xlu0 %v1362, 16
        %v1631 = vpop.permute.xlu0 %1630
        %1632 = vrot.lane.b32.xlu0 %v1363, 16
        %v1633 = vpop.permute.xlu0 %1632
        %1634 = vrot.lane.b32.xlu0 %v1364, 16
        %v1635 = vpop.permute.xlu0 %1634
        %1636 = vrot.lane.b32.xlu0 %v1365, 16
        %v1637 = vpop.permute.xlu0 %1636
        %1638 = vrot.lane.b32.xlu0 %v1366, 16
        %v1639 = vpop.permute.xlu0 %1638
        %1640 = vrot.lane.b32.xlu0 %v1367, 16
        %v1641 = vpop.permute.xlu0 %1640
        %1642 = vrot.lane.b32.xlu0 %v1368, 16
        %v1643 = vpop.permute.xlu0 %1642
        %1644 = vrot.lane.b32.xlu0 %v1369, 16
        %v1645 = vpop.permute.xlu0 %1644
        %1646 = vrot.lane.b32.xlu0 %v1370, 16
        %v1647 = vpop.permute.xlu0 %1646
        %1648 = vrot.lane.b32.xlu0 %v1371, 16
        %v1649 = vpop.permute.xlu0 %1648
        %1650 = vrot.lane.b32.xlu0 %v1372, 16
        %v1651 = vpop.permute.xlu0 %1650
        %1652 = vrot.lane.b32.xlu0 %v1373, 16
        %v1653 = vpop.permute.xlu0 %1652
        %1654 = vrot.lane.b32.xlu0 %v1374, 16
        %v1655 = vpop.permute.xlu0 %1654
        %1656 = vrot.lane.b32.xlu0 %v1375, 16
        %v1657 = vpop.permute.xlu0 %1656
        %1658 = vrot.lane.b32.xlu0 %v1376, 16
        %v1659 = vpop.permute.xlu0 %1658
        %1660 = vrot.lane.b32.xlu0 %v1377, 16
        %v1661 = vpop.permute.xlu0 %1660
        %1662 = vrot.lane.b32.xlu0 %v1378, 16
        %v1663 = vpop.permute.xlu0 %1662
        %1664 = vrot.lane.b32.xlu0 %v1379, 16
        %v1665 = vpop.permute.xlu0 %1664
        %1716 = vrot.lane.b32.xlu0 %v1517, 32
        %v1717 = vpop.permute.xlu0 %1716
        %1718 = vrot.lane.b32.xlu0 %v1583, 32
        %v1719 = vpop.permute.xlu0 %1718
        %1720 = vrot.lane.b32.xlu0 %v1520, 32
        %v1721 = vpop.permute.xlu0 %1720
        %1722 = vrot.lane.b32.xlu0 %v1584, 32
        %v1723 = vpop.permute.xlu0 %1722
        %1724 = vrot.lane.b32.xlu0 %v1523, 32
        %v1725 = vpop.permute.xlu0 %1724
        %1726 = vrot.lane.b32.xlu0 %v1585, 32
        %v1727 = vpop.permute.xlu0 %1726
        %1728 = vrot.lane.b32.xlu0 %v1526, 32
        %v1729 = vpop.permute.xlu0 %1728
        %1730 = vrot.lane.b32.xlu0 %v1586, 32
        %v1731 = vpop.permute.xlu0 %1730
        %1732 = vrot.lane.b32.xlu0 %v1529, 32
        %v1733 = vpop.permute.xlu0 %1732
        %1734 = vrot.lane.b32.xlu0 %v1587, 32
        %v1735 = vpop.permute.xlu0 %1734
        %1736 = vrot.lane.b32.xlu0 %v1532, 32
        %v1737 = vpop.permute.xlu0 %1736
        %1738 = vrot.lane.b32.xlu0 %v1588, 32
        %v1739 = vpop.permute.xlu0 %1738
        %1740 = vrot.lane.b32.xlu0 %v1535, 32
        %v1741 = vpop.permute.xlu0 %1740
        %1742 = vrot.lane.b32.xlu0 %v1589, 32
        %v1743 = vpop.permute.xlu0 %1742
        %1744 = vrot.lane.b32.xlu0 %v1538, 32
        %v1745 = vpop.permute.xlu0 %1744
        %1746 = vrot.lane.b32.xlu0 %v1590, 32
        %v1747 = vpop.permute.xlu0 %1746
        %1748 = vrot.lane.b32.xlu0 %v1541, 32
        %v1749 = vpop.permute.xlu0 %1748
        %1750 = vrot.lane.b32.xlu0 %v1591, 32
        %v1751 = vpop.permute.xlu0 %1750
        %1752 = vrot.lane.b32.xlu0 %v1544, 32
        %v1753 = vpop.permute.xlu0 %1752
        %1754 = vrot.lane.b32.xlu0 %v1592, 32
        %v1755 = vpop.permute.xlu0 %1754
        %1756 = vrot.lane.b32.xlu0 %v1547, 32
        %v1757 = vpop.permute.xlu0 %1756
        %1758 = vrot.lane.b32.xlu0 %v1593, 32
        %v1759 = vpop.permute.xlu0 %1758
        %1760 = vrot.lane.b32.xlu0 %v1550, 32
        %v1761 = vpop.permute.xlu0 %1760
        %1762 = vrot.lane.b32.xlu0 %v1594, 32
        %v1763 = vpop.permute.xlu0 %1762
        %1764 = vrot.lane.b32.xlu0 %v1553, 32
        %v1765 = vpop.permute.xlu0 %1764
        %1766 = vrot.lane.b32.xlu0 %v1595, 32
        %v1767 = vpop.permute.xlu0 %1766
        %1768 = vrot.lane.b32.xlu0 %v1556, 32
        %v1769 = vpop.permute.xlu0 %1768
        %1770 = vrot.lane.b32.xlu0 %v1596, 32
        %v1771 = vpop.permute.xlu0 %1770
        %1772 = vrot.lane.b32.xlu0 %v1559, 32
        %v1773 = vpop.permute.xlu0 %1772
        %1774 = vrot.lane.b32.xlu0 %v1597, 32
        %v1775 = vpop.permute.xlu0 %1774
        %1776 = vrot.lane.b32.xlu0 %v1562, 32
        %v1777 = vpop.permute.xlu0 %1776
        %1778 = vrot.lane.b32.xlu0 %v1598, 32
        %v1779 = vpop.permute.xlu0 %1778
        %1780 = vrot.lane.b32.xlu0 %v1565, 32
        %v1781 = vpop.permute.xlu0 %1780
        %1782 = vrot.lane.b32.xlu0 %v1599, 32
        %v1783 = vpop.permute.xlu0 %1782
        %vm1818 = vcmask 130048
        %v1819 = vsel %vm1818, %v1498, %v1601
        %v1820 = vsel %vm1818, %v1415, %v1601
        %v1821 = vsel %vm1818, %v1499, %v1603
        %v1822 = vsel %vm1818, %v1418, %v1605
        %v1823 = vsel %vm1818, %v1500, %v1607
        %v1824 = vsel %vm1818, %v1421, %v1609
        %v1825 = vsel %vm1818, %v1501, %v1611
        %v1826 = vsel %vm1818, %v1424, %v1613
        %v1827 = vsel %vm1818, %v1502, %v1615
        %v1828 = vsel %vm1818, %v1427, %v1617
        %v1829 = vsel %vm1818, %v1503, %v1619
        %v1830 = vsel %vm1818, %v1430, %v1621
        %v1831 = vsel %vm1818, %v1504, %v1623
        %v1832 = vsel %vm1818, %v1433, %v1625
        %v1833 = vsel %vm1818, %v1505, %v1627
        %v1834 = vsel %vm1818, %v1436, %v1629
        %v1835 = vsel %vm1818, %v1506, %v1631
        %v1836 = vsel %vm1818, %v1439, %v1633
        %v1837 = vsel %vm1818, %v1507, %v1635
        %v1838 = vsel %vm1818, %v1442, %v1637
        %v1839 = vsel %vm1818, %v1508, %v1639
        %v1840 = vsel %vm1818, %v1445, %v1641
        %v1841 = vsel %vm1818, %v1509, %v1643
        %v1842 = vsel %vm1818, %v1448, %v1645
        %v1843 = vsel %vm1818, %v1510, %v1647
        %v1844 = vsel %vm1818, %v1451, %v1649
        %v1845 = vsel %vm1818, %v1511, %v1651
        %v1846 = vsel %vm1818, %v1454, %v1653
        %v1847 = vsel %vm1818, %v1512, %v1655
        %v1848 = vsel %vm1818, %v1457, %v1657
        %v1849 = vsel %vm1818, %v1513, %v1659
        %v1850 = vsel %vm1818, %v1460, %v1661
        %v1851 = vsel %vm1818, %v1514, %v1663
        %v1852 = vsel %vm1818, %v1463, %v1665
        %vm1853 = vcmask 261120
        %v1854 = vsel %vm1853, %v1819, %v1717
        %v1855 = vsel %vm1853, %v1820, %v1719
        %v1856 = vsel %vm1853, %v1821, %v1721
        %v1857 = vsel %vm1853, %v1822, %v1723
        %v1858 = vsel %vm1853, %v1823, %v1725
        %v1859 = vsel %vm1853, %v1824, %v1727
        %v1860 = vsel %vm1853, %v1825, %v1729
        %v1861 = vsel %vm1853, %v1826, %v1731
        %v1862 = vsel %vm1853, %v1827, %v1733
        %v1863 = vsel %vm1853, %v1828, %v1735
        %v1864 = vsel %vm1853, %v1829, %v1737
        %v1865 = vsel %vm1853, %v1830, %v1739
        %v1866 = vsel %vm1853, %v1831, %v1741
        %v1867 = vsel %vm1853, %v1832, %v1743
        %v1868 = vsel %vm1853, %v1833, %v1745
        %v1869 = vsel %vm1853, %v1834, %v1747
        %v1870 = vsel %vm1853, %v1835, %v1749
        %v1871 = vsel %vm1853, %v1836, %v1751
        %v1872 = vsel %vm1853, %v1837, %v1753
        %v1873 = vsel %vm1853, %v1838, %v1755
        %v1874 = vsel %vm1853, %v1839, %v1757
        %v1875 = vsel %vm1853, %v1840, %v1759
        %v1876 = vsel %vm1853, %v1841, %v1761
        %v1877 = vsel %vm1853, %v1842, %v1763
        %v1878 = vsel %vm1853, %v1843, %v1765
        %v1879 = vsel %vm1853, %v1844, %v1767
        %v1880 = vsel %vm1853, %v1845, %v1769
        %v1881 = vsel %vm1853, %v1846, %v1771
        %v1882 = vsel %vm1853, %v1847, %v1773
        %v1883 = vsel %vm1853, %v1848, %v1775
        %v1884 = vsel %vm1853, %v1849, %v1777
        %v1885 = vsel %vm1853, %v1850, %v1779
        %v1886 = vsel %vm1853, %v1851, %v1781
        %v1887 = vsel %vm1853, %v1852, %v1783
        %v1888 = vld [vmem:[#allocation11] sm:$0xff]
        %v1889 = vld [vmem:[#allocation11 + $0x8] sm:$0xff]
        %v1890 = vld [vmem:[#allocation11 + $0x10] sm:$0xff]
        %v1891 = vld [vmem:[#allocation11 + $0x18] sm:$0xff]
        %v1892 = vld [vmem:[#allocation11 + $0x20] sm:$0xff]
        %v1893 = vld [vmem:[#allocation11 + $0x28] sm:$0xff]
        %s1894 = scalar_lea.vmem [#allocation11], 48
        %v1895 = vld [vmem:[%s1894] sm:$0xff]
        %v1896 = vld [vmem:[%s1894 + $0x8] sm:$0xff]
        %v1897 = vld [vmem:[%s1894 + $0x10] sm:$0xff]
        %v1898 = vld [vmem:[%s1894 + $0x18] sm:$0xff]
        %v1899 = vld [vmem:[%s1894 + $0x20] sm:$0xff]
        %v1900 = vld [vmem:[%s1894 + $0x28] sm:$0xff]
        %vm1901 = vcmask 392192
        %v1903 = vsel %vm1901, %v1856, 0
        %v1906 = vsel %vm1901, %v1857, 0
        %v1909 = vsel %vm1901, %v1858, 0
        %v1912 = vsel %vm1901, %v1859, 0
        %v1915 = vsel %vm1901, %v1860, 0
        %v1918 = vsel %vm1901, %v1861, 0
        %v1921 = vsel %vm1901, %v1862, 0
        %v1924 = vsel %vm1901, %v1863, 0
        %v1927 = vsel %vm1901, %v1864, 0
        %v1930 = vsel %vm1901, %v1865, 0
        %v1933 = vsel %vm1901, %v1866, 0
        %v1936 = vsel %vm1901, %v1867, 0
        %v1939 = vsel %vm1901, %v1868, 0
        %v1942 = vsel %vm1901, %v1869, 0
        %v1945 = vsel %vm1901, %v1870, 0
        %v1948 = vsel %vm1901, %v1871, 0
        %v1951 = vsel %vm1901, %v1872, 0
        %v1954 = vsel %vm1901, %v1873, 0
        %v1957 = vsel %vm1901, %v1874, 0
        %v1960 = vsel %vm1901, %v1875, 0
        %v1963 = vsel %vm1901, %v1876, 0
        %v1966 = vsel %vm1901, %v1877, 0
        %v1969 = vsel %vm1901, %v1878, 0
        %v1972 = vsel %vm1901, %v1879, 0
        %v1975 = vsel %vm1901, %v1880, 0
        %v1978 = vsel %vm1901, %v1881, 0
        %v1981 = vsel %vm1901, %v1882, 0
        %v1984 = vsel %vm1901, %v1883, 0
        %v1987 = vsel %vm1901, %v1884, 0
        %v1990 = vsel %vm1901, %v1885, 0
        %v1993 = vsel %vm1901, %v1886, 0
        %v1996 = vsel %vm1901, %v1887, 0
        %1998 = vmatprep.subr.mxu0 0.0
        %1999 = vmatpush1.msra.mxu0 %v1895
        %2000 = vmatprep.subr.mxu0 0.0
        %2001 = vmatpush1.msra.mxu0 %v1896
        %2002 = vmatprep.subr.mxu0 0.0
        %2003 = vmatpush1.msra.mxu0 %v1897
        %2004 = vmatprep.subr.mxu0 0.0
        %2005 = vmatpush1.msra.mxu0 %v1898
        %2006 = vmatprep.subr.mxu0 0.0
        %2007 = vmatpush1.msra.mxu0 %v1899
        %2008 = vmatprep.subr.mxu0 0.0
        %2009 = vmatpush1.msra.mxu0 %v1900
        %2010 = vmatprep.subr.mxu0 0.0
        %2011 = vmatpush1.msra.mxu0 0.0
        %2012 = vmatprep.subr.mxu0 0.0
        %2013 = vmatpush1.msra.mxu0 0.0
        %2014 = vmatprep.subr.mxu0 0.0
        %2015 = vmatpush1.msra.mxu0 0.0
        %2016 = vmatprep.subr.mxu0 0.0
        %2017 = vmatpush1.msra.mxu0 0.0
        %2018 = vmatprep.subr.mxu0 0.0
        %2019 = vmatpush1.msra.mxu0 0.0
        %2020 = vmatprep.subr.mxu0 0.0
        %2021 = vmatpush1.msra.mxu0 0.0
        %2022 = vmatprep.subr.mxu0 0.0
        %2023 = vmatpush1.msra.mxu0 0.0
        %2024 = vmatprep.subr.mxu0 0.0
        %2025 = vmatpush1.msra.mxu0 0.0
        %2026 = vmatprep.subr.mxu0 0.0
        %2027 = vmatpush1.msra.mxu0 0.0
        %2028 = vmatprep.subr.mxu0 0.0
        %2029 = vmatpush1.msra.mxu0 0.0
        %2030 = vmatprep.subr.mxu0 0.0
        %2031 = vmatpush1.msra.mxu0 0.0
        %2032 = vmatprep.subr.mxu0 0.0
        %2033 = vmatpush1.msra.mxu0 0.0
        %2034 = vmatprep.subr.mxu0 0.0
        %2035 = vmatpush1.msra.mxu0 0.0
        %2036 = vmatprep.subr.mxu0 0.0
        %2037 = vmatpush1.msra.mxu0 0.0
        %2038 = vmatprep.subr.mxu0 0.0
        %2039 = vmatpush1.msra.mxu0 0.0
        %2040 = vmatprep.subr.mxu0 0.0
        %2041 = vmatpush1.msra.mxu0 0.0
        %2042 = vmatprep.subr.mxu0 0.0
        %2043 = vmatpush1.msra.mxu0 0.0
        %2044 = vmatprep.subr.mxu0 0.0
        %2045 = vmatpush1.msra.mxu0 0.0
        %2046 = vmatprep.subr.mxu0 0.0
        %2047 = vmatpush1.msra.mxu0 0.0
        %2048 = vmatprep.subr.mxu0 0.0
        %2049 = vmatpush1.msra.mxu0 0.0
        %2050 = vmatprep.subr.mxu0 0.0
        %2051 = vmatpush1.msra.mxu0 0.0
        %2052 = vmatprep.subr.mxu0 0.0
        %2053 = vmatpush1.msra.mxu0 0.0
        %2054 = vmatprep.subr.mxu0 0.0
        %2055 = vmatpush1.msra.mxu0 0.0
        %2056 = vmatprep.subr.mxu0 0.0
        %2057 = vmatpush1.msra.mxu0 0.0
        %2058 = vmatprep.subr.mxu0 0.0
        %2059 = vmatpush1.msra.mxu0 0.0
        %2060 = vmatprep.subr.mxu0 0.0
        %2061 = vmatpush1.msra.mxu0 0.0
        %2062 = vmatprep.mubr.f32.mxu0 0.0
        %2063 = vmatmul.mubr.f32.gmra.mrb[0].mxu0 %v1903
        %v2064 = vpop.f32.mrb[0].mxu0
        %v2065 = vadd.f32 0.0, %v2064
        %v2066 = vpop.f32.mrb[0].mxu0
        %2067 = vmatprep.mubr.f32.mxu0 0.0
        %2068 = vmatmul.mubr.f32.gmra.mrb[0].mxu0 %v1906
        %v2069 = vpop.f32.mrb[0].mxu0
        %v2070 = vadd.f32 0.0, %v2069
        %v2071 = vpop.f32.mrb[0].mxu0
        %2072 = vmatprep.mubr.f32.mxu0 0.0
        %2073 = vmatmul.mubr.f32.gmra.mrb[0].mxu0 %v1909
        %v2074 = vpop.f32.mrb[0].mxu0
        %v2075 = vadd.f32 0.0, %v2074
        %v2076 = vpop.f32.mrb[0].mxu0
        %2077 = vmatprep.mubr.f32.mxu0 0.0
        %2078 = vmatmul.mubr.f32.gmra.mrb[0].mxu0 %v1912
        %v2079 = vpop.f32.mrb[0].mxu0
        %v2080 = vadd.f32 0.0, %v2079
        %v2081 = vpop.f32.mrb[0].mxu0
        %2082 = vmatprep.mubr.f32.mxu0 0.0
        %2083 = vmatmul.mubr.f32.gmra.mrb[0].mxu0 %v1915
        %v2084 = vpop.f32.mrb[0].mxu0
        %v2085 = vadd.f32 0.0, %v2084
        %v2086 = vpop.f32.mrb[0].mxu0
        %2087 = vmatprep.mubr.f32.mxu0 0.0
        %2088 = vmatmul.mubr.f32.gmra.mrb[0].mxu0 %v1918
        %v2089 = vpop.f32.mrb[0].mxu0
        %v2090 = vadd.f32 0.0, %v2089
        %v2091 = vpop.f32.mrb[0].mxu0
        %2092 = vmatprep.mubr.f32.mxu0 0.0
        %2093 = vmatmul.mubr.f32.gmra.mrb[0].mxu0 %v1921
        %v2094 = vpop.f32.mrb[0].mxu0
        %v2095 = vadd.f32 0.0, %v2094
        %v2096 = vpop.f32.mrb[0].mxu0
        %2097 = vmatprep.mubr.f32.mxu0 0.0
        %2098 = vmatmul.mubr.f32.gmra.mrb[0].mxu0 %v1924
        %v2099 = vpop.f32.mrb[0].mxu0
        %v2100 = vadd.f32 0.0, %v2099
        %v2101 = vpop.f32.mrb[0].mxu0
        %2102 = vmatprep.mubr.f32.mxu0 0.0
        %2103 = vmatmul.mubr.f32.gmra.mrb[0].mxu0 %v1927
        %v2104 = vpop.f32.mrb[0].mxu0
        %v2105 = vadd.f32 0.0, %v2104
        %v2106 = vpop.f32.mrb[0].mxu0
        %2107 = vmatprep.mubr.f32.mxu0 0.0
        %2108 = vmatmul.mubr.f32.gmra.mrb[0].mxu0 %v1930
        %v2109 = vpop.f32.mrb[0].mxu0
        %v2110 = vadd.f32 0.0, %v2109
        %v2111 = vpop.f32.mrb[0].mxu0
        %2112 = vmatprep.mubr.f32.mxu0 0.0
        %2113 = vmatmul.mubr.f32.gmra.mrb[0].mxu0 %v1933
        %v2114 = vpop.f32.mrb[0].mxu0
        %v2115 = vadd.f32 0.0, %v2114
        %v2116 = vpop.f32.mrb[0].mxu0
        %2117 = vmatprep.mubr.f32.mxu0 0.0
        %2118 = vmatmul.mubr.f32.gmra.mrb[0].mxu0 %v1936
        %v2119 = vpop.f32.mrb[0].mxu0
        %v2120 = vadd.f32 0.0, %v2119
        %v2121 = vpop.f32.mrb[0].mxu0
        %2122 = vmatprep.mubr.f32.mxu0 0.0
        %2123 = vmatmul.mubr.f32.gmra.mrb[0].mxu0 %v1939
        %v2124 = vpop.f32.mrb[0].mxu0
        %v2125 = vadd.f32 0.0, %v2124
        %v2126 = vpop.f32.mrb[0].mxu0
        %2127 = vmatprep.mubr.f32.mxu0 0.0
        %2128 = vmatmul.mubr.f32.gmra.mrb[0].mxu0 %v1942
        %v2129 = vpop.f32.mrb[0].mxu0
        %v2130 = vadd.f32 0.0, %v2129
        %v2131 = vpop.f32.mrb[0].mxu0
        %2132 = vmatprep.mubr.f32.mxu0 0.0
        %2133 = vmatmul.mubr.f32.gmra.mrb[0].mxu0 %v1945
        %v2134 = vpop.f32.mrb[0].mxu0
        %v2135 = vadd.f32 0.0, %v2134
        %v2136 = vpop.f32.mrb[0].mxu0
        %2137 = vmatprep.mubr.f32.mxu0 0.0
        %2138 = vmatmul.mubr.f32.gmra.mrb[0].mxu0 %v1948
        %v2139 = vpop.f32.mrb[0].mxu0
        %v2140 = vadd.f32 0.0, %v2139
        %v2141 = vpop.f32.mrb[0].mxu0
        %2142 = vmatprep.mubr.f32.mxu0 0.0
        %2143 = vmatmul.mubr.f32.gmra.mrb[0].mxu0 %v1951
        %v2144 = vpop.f32.mrb[0].mxu0
        %v2145 = vadd.f32 0.0, %v2144
        %v2146 = vpop.f32.mrb[0].mxu0
        %2147 = vmatprep.mubr.f32.mxu0 0.0
        %2148 = vmatmul.mubr.f32.gmra.mrb[0].mxu0 %v1954
        %v2149 = vpop.f32.mrb[0].mxu0
        %v2150 = vadd.f32 0.0, %v2149
        %v2151 = vpop.f32.mrb[0].mxu0
        %2152 = vmatprep.mubr.f32.mxu0 0.0
        %2153 = vmatmul.mubr.f32.gmra.mrb[0].mxu0 %v1957
        %v2154 = vpop.f32.mrb[0].mxu0
        %v2155 = vadd.f32 0.0, %v2154
        %v2156 = vpop.f32.mrb[0].mxu0
        %2157 = vmatprep.mubr.f32.mxu0 0.0
        %2158 = vmatmul.mubr.f32.gmra.mrb[0].mxu0 %v1960
        %v2159 = vpop.f32.mrb[0].mxu0
        %v2160 = vadd.f32 0.0, %v2159
        %v2161 = vpop.f32.mrb[0].mxu0
        %2162 = vmatprep.mubr.f32.mxu0 0.0
        %2163 = vmatmul.mubr.f32.gmra.mrb[0].mxu0 %v1963
        %v2164 = vpop.f32.mrb[0].mxu0
        %v2165 = vadd.f32 0.0, %v2164
        %v2166 = vpop.f32.mrb[0].mxu0
        %2167 = vmatprep.mubr.f32.mxu0 0.0
        %2168 = vmatmul.mubr.f32.gmra.mrb[0].mxu0 %v1966
        %v2169 = vpop.f32.mrb[0].mxu0
        %v2170 = vadd.f32 0.0, %v2169
        %v2171 = vpop.f32.mrb[0].mxu0
        %2172 = vmatprep.mubr.f32.mxu0 0.0
        %2173 = vmatmul.mubr.f32.gmra.mrb[0].mxu0 %v1969
        %v2174 = vpop.f32.mrb[0].mxu0
        %v2175 = vadd.f32 0.0, %v2174
        %v2176 = vpop.f32.mrb[0].mxu0
        %2177 = vmatprep.mubr.f32.mxu0 0.0
        %2178 = vmatmul.mubr.f32.gmra.mrb[0].mxu0 %v1972
        %v2179 = vpop.f32.mrb[0].mxu0
        %v2180 = vadd.f32 0.0, %v2179
        %v2181 = vpop.f32.mrb[0].mxu0
        %2182 = vmatprep.mubr.f32.mxu0 0.0
        %2183 = vmatmul.mubr.f32.gmra.mrb[0].mxu0 %v1975
        %v2184 = vpop.f32.mrb[0].mxu0
        %v2185 = vadd.f32 0.0, %v2184
        %v2186 = vpop.f32.mrb[0].mxu0
        %2187 = vmatprep.mubr.f32.mxu0 0.0
        %2188 = vmatmul.mubr.f32.gmra.mrb[0].mxu0 %v1978
        %v2189 = vpop.f32.mrb[0].mxu0
        %v2190 = vadd.f32 0.0, %v2189
        %v2191 = vpop.f32.mrb[0].mxu0
        %2192 = vmatprep.mubr.f32.mxu0 0.0
        %2193 = vmatmul.mubr.f32.gmra.mrb[0].mxu0 %v1981
        %v2194 = vpop.f32.mrb[0].mxu0
        %v2195 = vadd.f32 0.0, %v2194
        %v2196 = vpop.f32.mrb[0].mxu0
        %2197 = vmatprep.mubr.f32.mxu0 0.0
        %2198 = vmatmul.mubr.f32.gmra.mrb[0].mxu0 %v1984
        %v2199 = vpop.f32.mrb[0].mxu0
        %v2200 = vadd.f32 0.0, %v2199
        %v2201 = vpop.f32.mrb[0].mxu0
        %2202 = vmatprep.mubr.f32.mxu0 0.0
        %2203 = vmatmul.mubr.f32.gmra.mrb[0].mxu0 %v1987
        %v2204 = vpop.f32.mrb[0].mxu0
        %v2205 = vadd.f32 0.0, %v2204
        %v2206 = vpop.f32.mrb[0].mxu0
        %2207 = vmatprep.mubr.f32.mxu0 0.0
        %2208 = vmatmul.mubr.f32.gmra.mrb[0].mxu0 %v1990
        %v2209 = vpop.f32.mrb[0].mxu0
        %v2210 = vadd.f32 0.0, %v2209
        %v2211 = vpop.f32.mrb[0].mxu0
        %2212 = vmatprep.mubr.f32.mxu0 0.0
        %2213 = vmatmul.mubr.f32.gmra.mrb[0].mxu0 %v1993
        %v2214 = vpop.f32.mrb[0].mxu0
        %v2215 = vadd.f32 0.0, %v2214
        %v2216 = vpop.f32.mrb[0].mxu0
        %2217 = vmatprep.mubr.f32.mxu0 0.0
        %2218 = vmatmul.mubr.f32.gmra.mrb[0].mxu0 %v1996
        %v2219 = vpop.f32.mrb[0].mxu0
        %v2220 = vadd.f32 0.0, %v2219
        %v2221 = vpop.f32.mrb[0].mxu0
        %2222 = vdwg.mxu0
        %v2224 = vsel %vm1901, %v1854, 0
        %v2227 = vsel %vm1901, %v1855, 0
        %2229 = vmatprep.subr.mxu0 0.0
        %2230 = vmatpush1.msra.mxu0 %v1888
        %2231 = vmatprep.subr.mxu0 0.0
        %2232 = vmatpush1.msra.mxu0 %v1889
        %2233 = vmatprep.subr.mxu0 0.0
        %2234 = vmatpush1.msra.mxu0 %v1890
        %2235 = vmatprep.subr.mxu0 0.0
        %2236 = vmatpush1.msra.mxu0 %v1891
        %2237 = vmatprep.subr.mxu0 0.0
        %2238 = vmatpush1.msra.mxu0 %v1892
        %2239 = vmatprep.subr.mxu0 0.0
        %2240 = vmatpush1.msra.mxu0 %v1893
        %2241 = vmatprep.subr.mxu0 0.0
        %2242 = vmatpush1.msra.mxu0 0.0
        %2243 = vmatprep.subr.mxu0 0.0
        %2244 = vmatpush1.msra.mxu0 0.0
        %2245 = vmatprep.subr.mxu0 0.0
        %2246 = vmatpush1.msra.mxu0 0.0
        %2247 = vmatprep.subr.mxu0 0.0
        %2248 = vmatpush1.msra.mxu0 0.0
        %2249 = vmatprep.subr.mxu0 0.0
        %2250 = vmatpush1.msra.mxu0 0.0
        %2251 = vmatprep.subr.mxu0 0.0
        %2252 = vmatpush1.msra.mxu0 0.0
        %2253 = vmatprep.subr.mxu0 0.0
        %2254 = vmatpush1.msra.mxu0 0.0
        %2255 = vmatprep.subr.mxu0 0.0
        %2256 = vmatpush1.msra.mxu0 0.0
        %2257 = vmatprep.subr.mxu0 0.0
        %2258 = vmatpush1.msra.mxu0 0.0
        %2259 = vmatprep.subr.mxu0 0.0
        %2260 = vmatpush1.msra.mxu0 0.0
        %2261 = vmatprep.subr.mxu0 0.0
        %2262 = vmatpush1.msra.mxu0 0.0
        %2263 = vmatprep.subr.mxu0 0.0
        %2264 = vmatpush1.msra.mxu0 0.0
        %2265 = vmatprep.subr.mxu0 0.0
        %2266 = vmatpush1.msra.mxu0 0.0
        %2267 = vmatprep.subr.mxu0 0.0
        %2268 = vmatpush1.msra.mxu0 0.0
        %2269 = vmatprep.subr.mxu0 0.0
        %2270 = vmatpush1.msra.mxu0 0.0
        %2271 = vmatprep.subr.mxu0 0.0
        %2272 = vmatpush1.msra.mxu0 0.0
        %2273 = vmatprep.subr.mxu0 0.0
        %2274 = vmatpush1.msra.mxu0 0.0
        %2275 = vmatprep.subr.mxu0 0.0
        %2276 = vmatpush1.msra.mxu0 0.0
        %2277 = vmatprep.subr.mxu0 0.0
        %2278 = vmatpush1.msra.mxu0 0.0
        %2279 = vmatprep.subr.mxu0 0.0
        %2280 = vmatpush1.msra.mxu0 0.0
        %2281 = vmatprep.subr.mxu0 0.0
        %2282 = vmatpush1.msra.mxu0 0.0
        %2283 = vmatprep.subr.mxu0 0.0
        %2284 = vmatpush1.msra.mxu0 0.0
        %2285 = vmatprep.subr.mxu0 0.0
        %2286 = vmatpush1.msra.mxu0 0.0
        %2287 = vmatprep.subr.mxu0 0.0
        %2288 = vmatpush1.msra.mxu0 0.0
        %2289 = vmatprep.subr.mxu0 0.0
        %2290 = vmatpush1.msra.mxu0 0.0
        %2291 = vmatprep.subr.mxu0 0.0
        %2292 = vmatpush1.msra.mxu0 0.0
        %2293 = vmatprep.mubr.f32.mxu0 0.0
        %2294 = vmatmul.mubr.f32.gmra.mrb[0].mxu0 %v2224
        %v2295 = vpop.f32.mrb[0].mxu0
        %v2296 = vadd.f32 %v2065, %v2295
        %v2297 = vpop.f32.mrb[0].mxu0
        %2298 = vmatprep.mubr.f32.mxu0 0.0
        %2299 = vmatmul.mubr.f32.gmra.mrb[0].mxu0 %v2227
        %v2300 = vpop.f32.mrb[0].mxu0
        %v2301 = vadd.f32 %v2070, %v2300
        %v2302 = vpop.f32.mrb[0].mxu0
        %2303 = vmatprep.mubr.f32.mxu0 0.0
        %2304 = vmatmul.mubr.f32.gmra.mrb[0].mxu0 %v1903
        %v2305 = vpop.f32.mrb[0].mxu0
        %v2306 = vadd.f32 %v2075, %v2305
        %v2307 = vpop.f32.mrb[0].mxu0
        %2308 = vmatprep.mubr.f32.mxu0 0.0
        %2309 = vmatmul.mubr.f32.gmra.mrb[0].mxu0 %v1906
        %v2310 = vpop.f32.mrb[0].mxu0
        %v2311 = vadd.f32 %v2080, %v2310
        %v2312 = vpop.f32.mrb[0].mxu0
        %2313 = vmatprep.mubr.f32.mxu0 0.0
        %2314 = vmatmul.mubr.f32.gmra.mrb[0].mxu0 %v1909
        %v2315 = vpop.f32.mrb[0].mxu0
        %v2316 = vadd.f32 %v2085, %v2315
        %v2317 = vpop.f32.mrb[0].mxu0
        %2318 = vmatprep.mubr.f32.mxu0 0.0
        %2319 = vmatmul.mubr.f32.gmra.mrb[0].mxu0 %v1912
        %v2320 = vpop.f32.mrb[0].mxu0
        %v2321 = vadd.f32 %v2090, %v2320
        %v2322 = vpop.f32.mrb[0].mxu0
        %2323 = vmatprep.mubr.f32.mxu0 0.0
        %2324 = vmatmul.mubr.f32.gmra.mrb[0].mxu0 %v1915
        %v2325 = vpop.f32.mrb[0].mxu0
        %v2326 = vadd.f32 %v2095, %v2325
        %v2327 = vpop.f32.mrb[0].mxu0
        %2328 = vmatprep.mubr.f32.mxu0 0.0
        %2329 = vmatmul.mubr.f32.gmra.mrb[0].mxu0 %v1918
        %v2330 = vpop.f32.mrb[0].mxu0
        %v2331 = vadd.f32 %v2100, %v2330
        %v2332 = vpop.f32.mrb[0].mxu0
        %2333 = vmatprep.mubr.f32.mxu0 0.0
        %2334 = vmatmul.mubr.f32.gmra.mrb[0].mxu0 %v1921
        %v2335 = vpop.f32.mrb[0].mxu0
        %v2336 = vadd.f32 %v2105, %v2335
        %v2337 = vpop.f32.mrb[0].mxu0
        %2338 = vmatprep.mubr.f32.mxu0 0.0
        %2339 = vmatmul.mubr.f32.gmra.mrb[0].mxu0 %v1924
        %v2340 = vpop.f32.mrb[0].mxu0
        %v2341 = vadd.f32 %v2110, %v2340
        %v2342 = vpop.f32.mrb[0].mxu0
        %2343 = vmatprep.mubr.f32.mxu0 0.0
        %2344 = vmatmul.mubr.f32.gmra.mrb[0].mxu0 %v1927
        %v2345 = vpop.f32.mrb[0].mxu0
        %v2346 = vadd.f32 %v2115, %v2345
        %v2347 = vpop.f32.mrb[0].mxu0
        %2348 = vmatprep.mubr.f32.mxu0 0.0
        %2349 = vmatmul.mubr.f32.gmra.mrb[0].mxu0 %v1930
        %v2350 = vpop.f32.mrb[0].mxu0
        %v2351 = vadd.f32 %v2120, %v2350
        %v2352 = vpop.f32.mrb[0].mxu0
        %2353 = vmatprep.mubr.f32.mxu0 0.0
        %2354 = vmatmul.mubr.f32.gmra.mrb[0].mxu0 %v1933
        %v2355 = vpop.f32.mrb[0].mxu0
        %v2356 = vadd.f32 %v2125, %v2355
        %v2357 = vpop.f32.mrb[0].mxu0
        %2358 = vmatprep.mubr.f32.mxu0 0.0
        %2359 = vmatmul.mubr.f32.gmra.mrb[0].mxu0 %v1936
        %v2360 = vpop.f32.mrb[0].mxu0
        %v2361 = vadd.f32 %v2130, %v2360
        %v2362 = vpop.f32.mrb[0].mxu0
        %2363 = vmatprep.mubr.f32.mxu0 0.0
        %2364 = vmatmul.mubr.f32.gmra.mrb[0].mxu0 %v1939
        %v2365 = vpop.f32.mrb[0].mxu0
        %v2366 = vadd.f32 %v2135, %v2365
        %v2367 = vpop.f32.mrb[0].mxu0
        %2368 = vmatprep.mubr.f32.mxu0 0.0
        %2369 = vmatmul.mubr.f32.gmra.mrb[0].mxu0 %v1942
        %v2370 = vpop.f32.mrb[0].mxu0
        %v2371 = vadd.f32 %v2140, %v2370
        %v2372 = vpop.f32.mrb[0].mxu0
        %2373 = vmatprep.mubr.f32.mxu0 0.0
        %2374 = vmatmul.mubr.f32.gmra.mrb[0].mxu0 %v1945
        %v2375 = vpop.f32.mrb[0].mxu0
        %v2376 = vadd.f32 %v2145, %v2375
        %v2377 = vpop.f32.mrb[0].mxu0
        %2378 = vmatprep.mubr.f32.mxu0 0.0
        %2379 = vmatmul.mubr.f32.gmra.mrb[0].mxu0 %v1948
        %v2380 = vpop.f32.mrb[0].mxu0
        %v2381 = vadd.f32 %v2150, %v2380
        %v2382 = vpop.f32.mrb[0].mxu0
        %2383 = vmatprep.mubr.f32.mxu0 0.0
        %2384 = vmatmul.mubr.f32.gmra.mrb[0].mxu0 %v1951
        %v2385 = vpop.f32.mrb[0].mxu0
        %v2386 = vadd.f32 %v2155, %v2385
        %v2387 = vpop.f32.mrb[0].mxu0
        %2388 = vmatprep.mubr.f32.mxu0 0.0
        %2389 = vmatmul.mubr.f32.gmra.mrb[0].mxu0 %v1954
        %v2390 = vpop.f32.mrb[0].mxu0
        %v2391 = vadd.f32 %v2160, %v2390
        %v2392 = vpop.f32.mrb[0].mxu0
        %2393 = vmatprep.mubr.f32.mxu0 0.0
        %2394 = vmatmul.mubr.f32.gmra.mrb[0].mxu0 %v1957
        %v2395 = vpop.f32.mrb[0].mxu0
        %v2396 = vadd.f32 %v2165, %v2395
        %v2397 = vpop.f32.mrb[0].mxu0
        %2398 = vmatprep.mubr.f32.mxu0 0.0
        %2399 = vmatmul.mubr.f32.gmra.mrb[0].mxu0 %v1960
        %v2400 = vpop.f32.mrb[0].mxu0
        %v2401 = vadd.f32 %v2170, %v2400
        %v2402 = vpop.f32.mrb[0].mxu0
        %2403 = vmatprep.mubr.f32.mxu0 0.0
        %2404 = vmatmul.mubr.f32.gmra.mrb[0].mxu0 %v1963
        %v2405 = vpop.f32.mrb[0].mxu0
        %v2406 = vadd.f32 %v2175, %v2405
        %v2407 = vpop.f32.mrb[0].mxu0
        %2408 = vmatprep.mubr.f32.mxu0 0.0
        %2409 = vmatmul.mubr.f32.gmra.mrb[0].mxu0 %v1966
        %v2410 = vpop.f32.mrb[0].mxu0
        %v2411 = vadd.f32 %v2180, %v2410
        %v2412 = vpop.f32.mrb[0].mxu0
        %2413 = vmatprep.mubr.f32.mxu0 0.0
        %2414 = vmatmul.mubr.f32.gmra.mrb[0].mxu0 %v1969
        %v2415 = vpop.f32.mrb[0].mxu0
        %v2416 = vadd.f32 %v2185, %v2415
        %v2417 = vpop.f32.mrb[0].mxu0
        %2418 = vmatprep.mubr.f32.mxu0 0.0
        %2419 = vmatmul.mubr.f32.gmra.mrb[0].mxu0 %v1972
        %v2420 = vpop.f32.mrb[0].mxu0
        %v2421 = vadd.f32 %v2190, %v2420
        %v2422 = vpop.f32.mrb[0].mxu0
        %2423 = vmatprep.mubr.f32.mxu0 0.0
        %2424 = vmatmul.mubr.f32.gmra.mrb[0].mxu0 %v1975
        %v2425 = vpop.f32.mrb[0].mxu0
        %v2426 = vadd.f32 %v2195, %v2425
        %v2427 = vpop.f32.mrb[0].mxu0
        %2428 = vmatprep.mubr.f32.mxu0 0.0
        %2429 = vmatmul.mubr.f32.gmra.mrb[0].mxu0 %v1978
        %v2430 = vpop.f32.mrb[0].mxu0
        %v2431 = vadd.f32 %v2200, %v2430
        %v2432 = vpop.f32.mrb[0].mxu0
        %2433 = vmatprep.mubr.f32.mxu0 0.0
        %2434 = vmatmul.mubr.f32.gmra.mrb[0].mxu0 %v1981
        %v2435 = vpop.f32.mrb[0].mxu0
        %v2436 = vadd.f32 %v2205, %v2435
        %v2437 = vpop.f32.mrb[0].mxu0
        %2438 = vmatprep.mubr.f32.mxu0 0.0
        %2439 = vmatmul.mubr.f32.gmra.mrb[0].mxu0 %v1984
        %v2440 = vpop.f32.mrb[0].mxu0
        %v2441 = vadd.f32 %v2210, %v2440
        %v2442 = vpop.f32.mrb[0].mxu0
        %2443 = vmatprep.mubr.f32.mxu0 0.0
        %2444 = vmatmul.mubr.f32.gmra.mrb[0].mxu0 %v1987
        %v2445 = vpop.f32.mrb[0].mxu0
        %v2446 = vadd.f32 %v2215, %v2445
        %v2447 = vpop.f32.mrb[0].mxu0
        %2448 = vmatprep.mubr.f32.mxu0 0.0
        %2449 = vmatmul.mubr.f32.gmra.mrb[0].mxu0 %v1990
        %v2450 = vpop.f32.mrb[0].mxu0
        %v2451 = vadd.f32 %v2220, %v2450
        %v2452 = vpop.f32.mrb[0].mxu0
        %2453 = vdwg.mxu0
        %s2454 = scalar_lea.vmem [#allocation11], 96
        %v2455 = vld [vmem:[%s2454] sm:$0xff]
        %v2456 = vld [vmem:[%s2454 + $0x8] sm:$0xff]
        %v2457 = vld [vmem:[%s2454 + $0x10] sm:$0xff]
        %v2458 = vld [vmem:[%s2454 + $0x18] sm:$0xff]
        %v2459 = vld [vmem:[%s2454 + $0x20] sm:$0xff]
        %v2460 = vld [vmem:[%s2454 + $0x28] sm:$0xff]
        %2461 = vmatprep.subr.mxu0 0.0
        %2462 = vmatpush1.msra.mxu0 %v2455
        %2463 = vmatprep.subr.mxu0 0.0
        %2464 = vmatpush1.msra.mxu0 %v2456
        %2465 = vmatprep.subr.mxu0 0.0
        %2466 = vmatpush1.msra.mxu0 %v2457
        %2467 = vmatprep.subr.mxu0 0.0
        %2468 = vmatpush1.msra.mxu0 %v2458
        %2469 = vmatprep.subr.mxu0 0.0
        %2470 = vmatpush1.msra.mxu0 %v2459
        %2471 = vmatprep.subr.mxu0 0.0
        %2472 = vmatpush1.msra.mxu0 %v2460
        %2473 = vmatprep.subr.mxu0 0.0
        %2474 = vmatpush1.msra.mxu0 0.0
        %2475 = vmatprep.subr.mxu0 0.0
        %2476 = vmatpush1.msra.mxu0 0.0
        %2477 = vmatprep.subr.mxu0 0.0
        %2478 = vmatpush1.msra.mxu0 0.0
        %2479 = vmatprep.subr.mxu0 0.0
        %2480 = vmatpush1.msra.mxu0 0.0
        %2481 = vmatprep.subr.mxu0 0.0
        %2482 = vmatpush1.msra.mxu0 0.0
        %2483 = vmatprep.subr.mxu0 0.0
        %2484 = vmatpush1.msra.mxu0 0.0
        %2485 = vmatprep.subr.mxu0 0.0
        %2486 = vmatpush1.msra.mxu0 0.0
        %2487 = vmatprep.subr.mxu0 0.0
        %2488 = vmatpush1.msra.mxu0 0.0
        %2489 = vmatprep.subr.mxu0 0.0
        %2490 = vmatpush1.msra.mxu0 0.0
        %2491 = vmatprep.subr.mxu0 0.0
        %2492 = vmatpush1.msra.mxu0 0.0
        %2493 = vmatprep.subr.mxu0 0.0
        %2494 = vmatpush1.msra.mxu0 0.0
        %2495 = vmatprep.subr.mxu0 0.0
        %2496 = vmatpush1.msra.mxu0 0.0
        %2497 = vmatprep.subr.mxu0 0.0
        %2498 = vmatpush1.msra.mxu0 0.0
        %2499 = vmatprep.subr.mxu0 0.0
        %2500 = vmatpush1.msra.mxu0 0.0
        %2501 = vmatprep.subr.mxu0 0.0
        %2502 = vmatpush1.msra.mxu0 0.0
        %2503 = vmatprep.subr.mxu0 0.0
        %2504 = vmatpush1.msra.mxu0 0.0
        %2505 = vmatprep.subr.mxu0 0.0
        %2506 = vmatpush1.msra.mxu0 0.0
        %2507 = vmatprep.subr.mxu0 0.0
        %2508 = vmatpush1.msra.mxu0 0.0
        %2509 = vmatprep.subr.mxu0 0.0
        %2510 = vmatpush1.msra.mxu0 0.0
        %2511 = vmatprep.subr.mxu0 0.0
        %2512 = vmatpush1.msra.mxu0 0.0
        %2513 = vmatprep.subr.mxu0 0.0
        %2514 = vmatpush1.msra.mxu0 0.0
        %2515 = vmatprep.subr.mxu0 0.0
        %2516 = vmatpush1.msra.mxu0 0.0
        %2517 = vmatprep.subr.mxu0 0.0
        %2518 = vmatpush1.msra.mxu0 0.0
        %2519 = vmatprep.subr.mxu0 0.0
        %2520 = vmatpush1.msra.mxu0 0.0
        %2521 = vmatprep.subr.mxu0 0.0
        %2522 = vmatpush1.msra.mxu0 0.0
        %2523 = vmatprep.subr.mxu0 0.0
        %2524 = vmatpush1.msra.mxu0 0.0
        %2525 = vmatprep.mubr.f32.mxu0 0.0
        %2526 = vmatmul.mubr.f32.gmra.mrb[0].mxu0 %v1909
        %v2527 = vpop.f32.mrb[0].mxu0
        %v2528 = vadd.f32 0.0, %v2527
        %v2529 = vpop.f32.mrb[0].mxu0
        %2530 = vmatprep.mubr.f32.mxu0 0.0
        %2531 = vmatmul.mubr.f32.gmra.mrb[0].mxu0 %v1912
        %v2532 = vpop.f32.mrb[0].mxu0
        %v2533 = vadd.f32 0.0, %v2532
        %v2534 = vpop.f32.mrb[0].mxu0
        %2535 = vmatprep.mubr.f32.mxu0 0.0
        %2536 = vmatmul.mubr.f32.gmra.mrb[0].mxu0 %v1915
        %v2537 = vpop.f32.mrb[0].mxu0
        %v2538 = vadd.f32 0.0, %v2537
        %v2539 = vpop.f32.mrb[0].mxu0
        %2540 = vmatprep.mubr.f32.mxu0 0.0
        %2541 = vmatmul.mubr.f32.gmra.mrb[0].mxu0 %v1918
        %v2542 = vpop.f32.mrb[0].mxu0
        %v2543 = vadd.f32 0.0, %v2542
        %v2544 = vpop.f32.mrb[0].mxu0
        %2545 = vmatprep.mubr.f32.mxu0 0.0
        %2546 = vmatmul.mubr.f32.gmra.mrb[0].mxu0 %v1921
        %v2547 = vpop.f32.mrb[0].mxu0
        %v2548 = vadd.f32 0.0, %v2547
        %v2549 = vpop.f32.mrb[0].mxu0
        %2550 = vmatprep.mubr.f32.mxu0 0.0
        %2551 = vmatmul.mubr.f32.gmra.mrb[0].mxu0 %v1924
        %v2552 = vpop.f32.mrb[0].mxu0
        %v2553 = vadd.f32 0.0, %v2552
        %v2554 = vpop.f32.mrb[0].mxu0
        %2555 = vmatprep.mubr.f32.mxu0 0.0
        %2556 = vmatmul.mubr.f32.gmra.mrb[0].mxu0 %v1927
        %v2557 = vpop.f32.mrb[0].mxu0
        %v2558 = vadd.f32 0.0, %v2557
        %v2559 = vpop.f32.mrb[0].mxu0
        %2560 = vmatprep.mubr.f32.mxu0 0.0
        %2561 = vmatmul.mubr.f32.gmra.mrb[0].mxu0 %v1930
        %v2562 = vpop.f32.mrb[0].mxu0
        %v2563 = vadd.f32 0.0, %v2562
        %v2564 = vpop.f32.mrb[0].mxu0
        %2565 = vmatprep.mubr.f32.mxu0 0.0
        %2566 = vmatmul.mubr.f32.gmra.mrb[0].mxu0 %v1933
        %v2567 = vpop.f32.mrb[0].mxu0
        %v2568 = vadd.f32 0.0, %v2567
        %v2569 = vpop.f32.mrb[0].mxu0
        %2570 = vmatprep.mubr.f32.mxu0 0.0
        %2571 = vmatmul.mubr.f32.gmra.mrb[0].mxu0 %v1936
        %v2572 = vpop.f32.mrb[0].mxu0
        %v2573 = vadd.f32 0.0, %v2572
        %v2574 = vpop.f32.mrb[0].mxu0
        %2575 = vmatprep.mubr.f32.mxu0 0.0
        %2576 = vmatmul.mubr.f32.gmra.mrb[0].mxu0 %v1939
        %v2577 = vpop.f32.mrb[0].mxu0
        %v2578 = vadd.f32 0.0, %v2577
        %v2579 = vpop.f32.mrb[0].mxu0
        %2580 = vmatprep.mubr.f32.mxu0 0.0
        %2581 = vmatmul.mubr.f32.gmra.mrb[0].mxu0 %v1942
        %v2582 = vpop.f32.mrb[0].mxu0
        %v2583 = vadd.f32 0.0, %v2582
        %v2584 = vpop.f32.mrb[0].mxu0
        %2585 = vmatprep.mubr.f32.mxu0 0.0
        %2586 = vmatmul.mubr.f32.gmra.mrb[0].mxu0 %v1945
        %v2587 = vpop.f32.mrb[0].mxu0
        %v2588 = vadd.f32 0.0, %v2587
        %v2589 = vpop.f32.mrb[0].mxu0
        %2590 = vmatprep.mubr.f32.mxu0 0.0
        %2591 = vmatmul.mubr.f32.gmra.mrb[0].mxu0 %v1948
        %v2592 = vpop.f32.mrb[0].mxu0
        %v2593 = vadd.f32 0.0, %v2592
        %v2594 = vpop.f32.mrb[0].mxu0
        %2595 = vmatprep.mubr.f32.mxu0 0.0
        %2596 = vmatmul.mubr.f32.gmra.mrb[0].mxu0 %v1951
        %v2597 = vpop.f32.mrb[0].mxu0
        %v2598 = vadd.f32 0.0, %v2597
        %v2599 = vpop.f32.mrb[0].mxu0
        %2600 = vmatprep.mubr.f32.mxu0 0.0
        %2601 = vmatmul.mubr.f32.gmra.mrb[0].mxu0 %v1954
        %v2602 = vpop.f32.mrb[0].mxu0
        %v2603 = vadd.f32 0.0, %v2602
        %v2604 = vpop.f32.mrb[0].mxu0
        %2605 = vmatprep.mubr.f32.mxu0 0.0
        %2606 = vmatmul.mubr.f32.gmra.mrb[0].mxu0 %v1957
        %v2607 = vpop.f32.mrb[0].mxu0
        %v2608 = vadd.f32 0.0, %v2607
        %v2609 = vpop.f32.mrb[0].mxu0
        %2610 = vmatprep.mubr.f32.mxu0 0.0
        %2611 = vmatmul.mubr.f32.gmra.mrb[0].mxu0 %v1960
        %v2612 = vpop.f32.mrb[0].mxu0
        %v2613 = vadd.f32 0.0, %v2612
        %v2614 = vpop.f32.mrb[0].mxu0
        %2615 = vmatprep.mubr.f32.mxu0 0.0
        %2616 = vmatmul.mubr.f32.gmra.mrb[0].mxu0 %v1963
        %v2617 = vpop.f32.mrb[0].mxu0
        %v2618 = vadd.f32 0.0, %v2617
        %v2619 = vpop.f32.mrb[0].mxu0
        %2620 = vmatprep.mubr.f32.mxu0 0.0
        %2621 = vmatmul.mubr.f32.gmra.mrb[0].mxu0 %v1966
        %v2622 = vpop.f32.mrb[0].mxu0
        %v2623 = vadd.f32 0.0, %v2622
        %v2624 = vpop.f32.mrb[0].mxu0
        %2625 = vmatprep.mubr.f32.mxu0 0.0
        %2626 = vmatmul.mubr.f32.gmra.mrb[0].mxu0 %v1969
        %v2627 = vpop.f32.mrb[0].mxu0
        %v2628 = vadd.f32 0.0, %v2627
        %v2629 = vpop.f32.mrb[0].mxu0
        %2630 = vmatprep.mubr.f32.mxu0 0.0
        %2631 = vmatmul.mubr.f32.gmra.mrb[0].mxu0 %v1972
        %v2632 = vpop.f32.mrb[0].mxu0
        %v2633 = vadd.f32 0.0, %v2632
        %v2634 = vpop.f32.mrb[0].mxu0
        %2635 = vmatprep.mubr.f32.mxu0 0.0
        %2636 = vmatmul.mubr.f32.gmra.mrb[0].mxu0 %v1975
        %v2637 = vpop.f32.mrb[0].mxu0
        %v2638 = vadd.f32 0.0, %v2637
        %v2639 = vpop.f32.mrb[0].mxu0
        %2640 = vmatprep.mubr.f32.mxu0 0.0
        %2641 = vmatmul.mubr.f32.gmra.mrb[0].mxu0 %v1978
        %v2642 = vpop.f32.mrb[0].mxu0
        %v2643 = vadd.f32 0.0, %v2642
        %v2644 = vpop.f32.mrb[0].mxu0
        %2645 = vmatprep.mubr.f32.mxu0 0.0
        %2646 = vmatmul.mubr.f32.gmra.mrb[0].mxu0 %v1981
        %v2647 = vpop.f32.mrb[0].mxu0
        %v2648 = vadd.f32 0.0, %v2647
        %v2649 = vpop.f32.mrb[0].mxu0
        %2650 = vmatprep.mubr.f32.mxu0 0.0
        %2651 = vmatmul.mubr.f32.gmra.mrb[0].mxu0 %v1984
        %v2652 = vpop.f32.mrb[0].mxu0
        %v2653 = vadd.f32 0.0, %v2652
        %v2654 = vpop.f32.mrb[0].mxu0
        %2655 = vmatprep.mubr.f32.mxu0 0.0
        %2656 = vmatmul.mubr.f32.gmra.mrb[0].mxu0 %v1987
        %v2657 = vpop.f32.mrb[0].mxu0
        %v2658 = vadd.f32 0.0, %v2657
        %v2659 = vpop.f32.mrb[0].mxu0
        %2660 = vmatprep.mubr.f32.mxu0 0.0
        %2661 = vmatmul.mubr.f32.gmra.mrb[0].mxu0 %v1990
        %v2662 = vpop.f32.mrb[0].mxu0
        %v2663 = vadd.f32 0.0, %v2662
        %v2664 = vpop.f32.mrb[0].mxu0
        %2665 = vmatprep.mubr.f32.mxu0 0.0
        %2666 = vmatmul.mubr.f32.gmra.mrb[0].mxu0 %v1993
        %v2667 = vpop.f32.mrb[0].mxu0
        %v2668 = vadd.f32 0.0, %v2667
        %v2669 = vpop.f32.mrb[0].mxu0
        %2670 = vmatprep.mubr.f32.mxu0 0.0
        %2671 = vmatmul.mubr.f32.gmra.mrb[0].mxu0 %v1996
        %v2672 = vpop.f32.mrb[0].mxu0
        %v2673 = vadd.f32 0.0, %v2672
        %v2674 = vpop.f32.mrb[0].mxu0
        %2675 = vmatprep.mubr.f32.mxu0 0.0
        %2676 = vmatmul.mubr.f32.gmra.mrb[0].mxu0 %v2224
        %v2677 = vpop.f32.mrb[0].mxu0
        %v2678 = vadd.f32 0.0, %v2677
        %v2679 = vpop.f32.mrb[0].mxu0
        %2680 = vmatprep.mubr.f32.mxu0 0.0
        %2681 = vmatmul.mubr.f32.gmra.mrb[0].mxu0 %v2227
        %v2682 = vpop.f32.mrb[0].mxu0
        %v2683 = vadd.f32 0.0, %v2682
        %v2684 = vpop.f32.mrb[0].mxu0
        %2685 = vdwg.mxu0
        %v2686 = vadd.f32 %v2296, %v2528
        %v2687 = vadd.f32 %v2301, %v2533
        %v2688 = vadd.f32 %v2306, %v2538
        %v2689 = vadd.f32 %v2311, %v2543
        %v2690 = vadd.f32 %v2316, %v2548
        %v2691 = vadd.f32 %v2321, %v2553
        %v2692 = vadd.f32 %v2326, %v2558
        %v2693 = vadd.f32 %v2331, %v2563
        %v2694 = vadd.f32 %v2336, %v2568
        %v2695 = vadd.f32 %v2341, %v2573
        %v2696 = vadd.f32 %v2346, %v2578
        %v2697 = vadd.f32 %v2351, %v2583
        %v2698 = vadd.f32 %v2356, %v2588
        %v2699 = vadd.f32 %v2361, %v2593
        %v2700 = vadd.f32 %v2366, %v2598
        %v2701 = vadd.f32 %v2371, %v2603
        %v2702 = vadd.f32 %v2376, %v2608
        %v2703 = vadd.f32 %v2381, %v2613
        %v2704 = vadd.f32 %v2386, %v2618
        %v2705 = vadd.f32 %v2391, %v2623
        %v2706 = vadd.f32 %v2396, %v2628
        %v2707 = vadd.f32 %v2401, %v2633
        %v2708 = vadd.f32 %v2406, %v2638
        %v2709 = vadd.f32 %v2411, %v2643
        %v2710 = vadd.f32 %v2416, %v2648
        %v2711 = vadd.f32 %v2421, %v2653
        %v2712 = vadd.f32 %v2426, %v2658
        %v2713 = vadd.f32 %v2431, %v2663
        %v2714 = vadd.f32 %v2436, %v2668
        %v2715 = vadd.f32 %v2441, %v2673
        %v2716 = vadd.f32 %v2446, %v2678
        %v2717 = vadd.f32 %v2451, %v2683
        %v2718 = vld [vmem:[#allocation13] sm:$0x1]
        %v2720 = vlaneseq
        %v2721 = vshrl.u32 %v2720, 7
        %v2722 = vsub.s32 0, %v2721
        %v2723 = vrot.slane %v2718, %v2722
        %v2725 = vadd.f32 %v2686, %v2723
        %v2726 = vadd.f32 %v2687, %v2723
        %v2727 = vadd.f32 %v2688, %v2723
        %v2728 = vadd.f32 %v2689, %v2723
        %v2729 = vadd.f32 %v2690, %v2723
        %v2730 = vadd.f32 %v2691, %v2723
        %v2731 = vadd.f32 %v2692, %v2723
        %v2732 = vadd.f32 %v2693, %v2723
        %v2733 = vadd.f32 %v2694, %v2723
        %v2734 = vadd.f32 %v2695, %v2723
        %v2735 = vadd.f32 %v2696, %v2723
        %v2736 = vadd.f32 %v2697, %v2723
        %v2737 = vadd.f32 %v2698, %v2723
        %v2738 = vadd.f32 %v2699, %v2723
        %v2739 = vadd.f32 %v2700, %v2723
        %v2740 = vadd.f32 %v2701, %v2723
        %v2741 = vadd.f32 %v2702, %v2723
        %v2742 = vadd.f32 %v2703, %v2723
        %v2743 = vadd.f32 %v2704, %v2723
        %v2744 = vadd.f32 %v2705, %v2723
        %v2745 = vadd.f32 %v2706, %v2723
        %v2746 = vadd.f32 %v2707, %v2723
        %v2747 = vadd.f32 %v2708, %v2723
        %v2748 = vadd.f32 %v2709, %v2723
        %v2749 = vadd.f32 %v2710, %v2723
        %v2750 = vadd.f32 %v2711, %v2723
        %v2751 = vadd.f32 %v2712, %v2723
        %v2752 = vadd.f32 %v2713, %v2723
        %v2753 = vadd.f32 %v2714, %v2723
        %v2754 = vadd.f32 %v2715, %v2723
        %v2755 = vadd.f32 %v2716, %v2723
        %v2756 = vadd.f32 %v2717, %v2723
        %v2757 = vmax.f32 %v2725, 0.0
        %v2758 = vmax.f32 %v2726, 0.0
        %v2759 = vmax.f32 %v2727, 0.0
        %v2760 = vmax.f32 %v2728, 0.0
        %v2761 = vmax.f32 %v2729, 0.0
        %v2762 = vmax.f32 %v2730, 0.0
        %v2763 = vmax.f32 %v2731, 0.0
        %v2764 = vmax.f32 %v2732, 0.0
        %v2765 = vmax.f32 %v2733, 0.0
        %v2766 = vmax.f32 %v2734, 0.0
        %v2767 = vmax.f32 %v2735, 0.0
        %v2768 = vmax.f32 %v2736, 0.0
        %v2769 = vmax.f32 %v2737, 0.0
        %v2770 = vmax.f32 %v2738, 0.0
        %v2771 = vmax.f32 %v2739, 0.0
        %v2772 = vmax.f32 %v2740, 0.0
        %v2773 = vmax.f32 %v2741, 0.0
        %v2774 = vmax.f32 %v2742, 0.0
        %v2775 = vmax.f32 %v2743, 0.0
        %v2776 = vmax.f32 %v2744, 0.0
        %v2777 = vmax.f32 %v2745, 0.0
        %v2778 = vmax.f32 %v2746, 0.0
        %v2779 = vmax.f32 %v2747, 0.0
        %v2780 = vmax.f32 %v2748, 0.0
        %v2781 = vmax.f32 %v2749, 0.0
        %v2782 = vmax.f32 %v2750, 0.0
        %v2783 = vmax.f32 %v2751, 0.0
        %v2784 = vmax.f32 %v2752, 0.0
        %v2785 = vmax.f32 %v2753, 0.0
        %v2786 = vmax.f32 %v2754, 0.0
        %v2787 = vmax.f32 %v2755, 0.0
        %v2788 = vmax.f32 %v2756, 0.0
        %v2789 = vld [vmem:[#allocation14] sm:$0xff]
        %v2790 = vld [vmem:[#allocation14 + $0x8] sm:$0xff]
        %v2791 = vld [vmem:[#allocation16] sm:$0x1]
        %v2793 = vlaneseq
        %v2794 = vshrl.u32 %v2793, 7
        %v2795 = vsub.s32 0, %v2794
        %v2796 = vrot.slane %v2791, %v2795
        %v2799 = vsel %vm1818, %v2757, 0
        %v2802 = vsel %vm1818, %v2758, 0
        %v2805 = vsel %vm1818, %v2759, 0
        %v2808 = vsel %vm1818, %v2760, 0
        %v2811 = vsel %vm1818, %v2761, 0
        %v2814 = vsel %vm1818, %v2762, 0
        %v2817 = vsel %vm1818, %v2763, 0
        %v2820 = vsel %vm1818, %v2764, 0
        %v2823 = vsel %vm1818, %v2765, 0
        %v2826 = vsel %vm1818, %v2766, 0
        %v2829 = vsel %vm1818, %v2767, 0
        %v2832 = vsel %vm1818, %v2768, 0
        %v2835 = vsel %vm1818, %v2769, 0
        %v2838 = vsel %vm1818, %v2770, 0
        %v2841 = vsel %vm1818, %v2771, 0
        %v2844 = vsel %vm1818, %v2772, 0
        %v2847 = vsel %vm1818, %v2773, 0
        %v2850 = vsel %vm1818, %v2774, 0
        %v2853 = vsel %vm1818, %v2775, 0
        %v2856 = vsel %vm1818, %v2776, 0
        %v2859 = vsel %vm1818, %v2777, 0
        %v2862 = vsel %vm1818, %v2778, 0
        %v2865 = vsel %vm1818, %v2779, 0
        %v2868 = vsel %vm1818, %v2780, 0
        %v2871 = vsel %vm1818, %v2781, 0
        %v2874 = vsel %vm1818, %v2782, 0
        %v2877 = vsel %vm1818, %v2783, 0
        %v2880 = vsel %vm1818, %v2784, 0
        %v2883 = vsel %vm1818, %v2785, 0
        %v2886 = vsel %vm1818, %v2786, 0
        %v2889 = vsel %vm1818, %v2787, 0
        %v2892 = vsel %vm1818, %v2788, 0
        %2894 = vmatprep.subr.mxu0 0.0
        %2895 = vmatpush1.msra.mxu0 %v2789
        %2896 = vmatprep.subr.mxu0 0.0
        %2897 = vmatpush1.msra.mxu0 %v2790
        %2898 = vmatprep.subr.mxu0 0.0
        %2899 = vmatpush1.msra.mxu0 0.0
        %2900 = vmatprep.subr.mxu0 0.0
        %2901 = vmatpush1.msra.mxu0 0.0
        %2902 = vmatprep.subr.mxu0 0.0
        %2903 = vmatpush1.msra.mxu0 0.0
        %2904 = vmatprep.subr.mxu0 0.0
        %2905 = vmatpush1.msra.mxu0 0.0
        %2906 = vmatprep.subr.mxu0 0.0
        %2907 = vmatpush1.msra.mxu0 0.0
        %2908 = vmatprep.subr.mxu0 0.0
        %2909 = vmatpush1.msra.mxu0 0.0
        %2910 = vmatprep.subr.mxu0 0.0
        %2911 = vmatpush1.msra.mxu0 0.0
        %2912 = vmatprep.subr.mxu0 0.0
        %2913 = vmatpush1.msra.mxu0 0.0
        %2914 = vmatprep.subr.mxu0 0.0
        %2915 = vmatpush1.msra.mxu0 0.0
        %2916 = vmatprep.subr.mxu0 0.0
        %2917 = vmatpush1.msra.mxu0 0.0
        %2918 = vmatprep.subr.mxu0 0.0
        %2919 = vmatpush1.msra.mxu0 0.0
        %2920 = vmatprep.subr.mxu0 0.0
        %2921 = vmatpush1.msra.mxu0 0.0
        %2922 = vmatprep.subr.mxu0 0.0
        %2923 = vmatpush1.msra.mxu0 0.0
        %2924 = vmatprep.subr.mxu0 0.0
        %2925 = vmatpush1.msra.mxu0 0.0
        %2926 = vmatprep.subr.mxu0 0.0
        %2927 = vmatpush1.msra.mxu0 0.0
        %2928 = vmatprep.subr.mxu0 0.0
        %2929 = vmatpush1.msra.mxu0 0.0
        %2930 = vmatprep.subr.mxu0 0.0
        %2931 = vmatpush1.msra.mxu0 0.0
        %2932 = vmatprep.subr.mxu0 0.0
        %2933 = vmatpush1.msra.mxu0 0.0
        %2934 = vmatprep.subr.mxu0 0.0
        %2935 = vmatpush1.msra.mxu0 0.0
        %2936 = vmatprep.subr.mxu0 0.0
        %2937 = vmatpush1.msra.mxu0 0.0
        %2938 = vmatprep.subr.mxu0 0.0
        %2939 = vmatpush1.msra.mxu0 0.0
        %2940 = vmatprep.subr.mxu0 0.0
        %2941 = vmatpush1.msra.mxu0 0.0
        %2942 = vmatprep.subr.mxu0 0.0
        %2943 = vmatpush1.msra.mxu0 0.0
        %2944 = vmatprep.subr.mxu0 0.0
        %2945 = vmatpush1.msra.mxu0 0.0
        %2946 = vmatprep.subr.mxu0 0.0
        %2947 = vmatpush1.msra.mxu0 0.0
        %2948 = vmatprep.subr.mxu0 0.0
        %2949 = vmatpush1.msra.mxu0 0.0
        %2950 = vmatprep.subr.mxu0 0.0
        %2951 = vmatpush1.msra.mxu0 0.0
        %2952 = vmatprep.subr.mxu0 0.0
        %2953 = vmatpush1.msra.mxu0 0.0
        %2954 = vmatprep.subr.mxu0 0.0
        %2955 = vmatpush1.msra.mxu0 0.0
        %2956 = vmatprep.subr.mxu0 0.0
        %2957 = vmatpush1.msra.mxu0 0.0
        %2958 = vmatprep.mubr.f32.mxu0 0.0
        %2959 = vmatmul.mubr.f32.gmra.mrb[0].mxu0 %v2799
        %v2960 = vpop.f32.mrb[0].mxu0
        %v2961 = vadd.f32 %v2796, %v2960
        %v2962 = vpop.f32.mrb[0].mxu0
        %2963 = vmatprep.mubr.f32.mxu0 0.0
        %2964 = vmatmul.mubr.f32.gmra.mrb[0].mxu0 %v2802
        %v2965 = vpop.f32.mrb[0].mxu0
        %v2966 = vadd.f32 %v2796, %v2965
        %v2967 = vpop.f32.mrb[0].mxu0
        %2968 = vmatprep.mubr.f32.mxu0 0.0
        %2969 = vmatmul.mubr.f32.gmra.mrb[0].mxu0 %v2805
        %v2970 = vpop.f32.mrb[0].mxu0
        %v2971 = vadd.f32 %v2796, %v2970
        %v2972 = vpop.f32.mrb[0].mxu0
        %2973 = vmatprep.mubr.f32.mxu0 0.0
        %2974 = vmatmul.mubr.f32.gmra.mrb[0].mxu0 %v2808
        %v2975 = vpop.f32.mrb[0].mxu0
        %v2976 = vadd.f32 %v2796, %v2975
        %v2977 = vpop.f32.mrb[0].mxu0
        %2978 = vmatprep.mubr.f32.mxu0 0.0
        %2979 = vmatmul.mubr.f32.gmra.mrb[0].mxu0 %v2811
        %v2980 = vpop.f32.mrb[0].mxu0
        %v2981 = vadd.f32 %v2796, %v2980
        %v2982 = vpop.f32.mrb[0].mxu0
        %2983 = vmatprep.mubr.f32.mxu0 0.0
        %2984 = vmatmul.mubr.f32.gmra.mrb[0].mxu0 %v2814
        %v2985 = vpop.f32.mrb[0].mxu0
        %v2986 = vadd.f32 %v2796, %v2985
        %v2987 = vpop.f32.mrb[0].mxu0
        %2988 = vmatprep.mubr.f32.mxu0 0.0
        %2989 = vmatmul.mubr.f32.gmra.mrb[0].mxu0 %v2817
        %v2990 = vpop.f32.mrb[0].mxu0
        %v2991 = vadd.f32 %v2796, %v2990
        %v2992 = vpop.f32.mrb[0].mxu0
        %2993 = vmatprep.mubr.f32.mxu0 0.0
        %2994 = vmatmul.mubr.f32.gmra.mrb[0].mxu0 %v2820
        %v2995 = vpop.f32.mrb[0].mxu0
        %v2996 = vadd.f32 %v2796, %v2995
        %v2997 = vpop.f32.mrb[0].mxu0
        %2998 = vmatprep.mubr.f32.mxu0 0.0
        %2999 = vmatmul.mubr.f32.gmra.mrb[0].mxu0 %v2823
        %v3000 = vpop.f32.mrb[0].mxu0
        %v3001 = vadd.f32 %v2796, %v3000
        %v3002 = vpop.f32.mrb[0].mxu0
        %3003 = vmatprep.mubr.f32.mxu0 0.0
        %3004 = vmatmul.mubr.f32.gmra.mrb[0].mxu0 %v2826
        %v3005 = vpop.f32.mrb[0].mxu0
        %v3006 = vadd.f32 %v2796, %v3005
        %v3007 = vpop.f32.mrb[0].mxu0
        %3008 = vmatprep.mubr.f32.mxu0 0.0
        %3009 = vmatmul.mubr.f32.gmra.mrb[0].mxu0 %v2829
        %v3010 = vpop.f32.mrb[0].mxu0
        %v3011 = vadd.f32 %v2796, %v3010
        %v3012 = vpop.f32.mrb[0].mxu0
        %3013 = vmatprep.mubr.f32.mxu0 0.0
        %3014 = vmatmul.mubr.f32.gmra.mrb[0].mxu0 %v2832
        %v3015 = vpop.f32.mrb[0].mxu0
        %v3016 = vadd.f32 %v2796, %v3015
        %v3017 = vpop.f32.mrb[0].mxu0
        %3018 = vmatprep.mubr.f32.mxu0 0.0
        %3019 = vmatmul.mubr.f32.gmra.mrb[0].mxu0 %v2835
        %v3020 = vpop.f32.mrb[0].mxu0
        %v3021 = vadd.f32 %v2796, %v3020
        %v3022 = vpop.f32.mrb[0].mxu0
        %3023 = vmatprep.mubr.f32.mxu0 0.0
        %3024 = vmatmul.mubr.f32.gmra.mrb[0].mxu0 %v2838
        %v3025 = vpop.f32.mrb[0].mxu0
        %v3026 = vadd.f32 %v2796, %v3025
        %v3027 = vpop.f32.mrb[0].mxu0
        %3028 = vmatprep.mubr.f32.mxu0 0.0
        %3029 = vmatmul.mubr.f32.gmra.mrb[0].mxu0 %v2841
        %v3030 = vpop.f32.mrb[0].mxu0
        %v3031 = vadd.f32 %v2796, %v3030
        %v3032 = vpop.f32.mrb[0].mxu0
        %3033 = vmatprep.mubr.f32.mxu0 0.0
        %3034 = vmatmul.mubr.f32.gmra.mrb[0].mxu0 %v2844
        %v3035 = vpop.f32.mrb[0].mxu0
        %v3036 = vadd.f32 %v2796, %v3035
        %v3037 = vpop.f32.mrb[0].mxu0
        %3038 = vmatprep.mubr.f32.mxu0 0.0
        %3039 = vmatmul.mubr.f32.gmra.mrb[0].mxu0 %v2847
        %v3040 = vpop.f32.mrb[0].mxu0
        %v3041 = vadd.f32 %v2796, %v3040
        %v3042 = vpop.f32.mrb[0].mxu0
        %3043 = vmatprep.mubr.f32.mxu0 0.0
        %3044 = vmatmul.mubr.f32.gmra.mrb[0].mxu0 %v2850
        %v3045 = vpop.f32.mrb[0].mxu0
        %v3046 = vadd.f32 %v2796, %v3045
        %v3047 = vpop.f32.mrb[0].mxu0
        %3048 = vmatprep.mubr.f32.mxu0 0.0
        %3049 = vmatmul.mubr.f32.gmra.mrb[0].mxu0 %v2853
        %v3050 = vpop.f32.mrb[0].mxu0
        %v3051 = vadd.f32 %v2796, %v3050
        %v3052 = vpop.f32.mrb[0].mxu0
        %3053 = vmatprep.mubr.f32.mxu0 0.0
        %3054 = vmatmul.mubr.f32.gmra.mrb[0].mxu0 %v2856
        %v3055 = vpop.f32.mrb[0].mxu0
        %v3056 = vadd.f32 %v2796, %v3055
        %v3057 = vpop.f32.mrb[0].mxu0
        %3058 = vmatprep.mubr.f32.mxu0 0.0
        %3059 = vmatmul.mubr.f32.gmra.mrb[0].mxu0 %v2859
        %v3060 = vpop.f32.mrb[0].mxu0
        %v3061 = vadd.f32 %v2796, %v3060
        %v3062 = vpop.f32.mrb[0].mxu0
        %3063 = vmatprep.mubr.f32.mxu0 0.0
        %3064 = vmatmul.mubr.f32.gmra.mrb[0].mxu0 %v2862
        %v3065 = vpop.f32.mrb[0].mxu0
        %v3066 = vadd.f32 %v2796, %v3065
        %v3067 = vpop.f32.mrb[0].mxu0
        %3068 = vmatprep.mubr.f32.mxu0 0.0
        %3069 = vmatmul.mubr.f32.gmra.mrb[0].mxu0 %v2865
        %v3070 = vpop.f32.mrb[0].mxu0
        %v3071 = vadd.f32 %v2796, %v3070
        %v3072 = vpop.f32.mrb[0].mxu0
        %3073 = vmatprep.mubr.f32.mxu0 0.0
        %3074 = vmatmul.mubr.f32.gmra.mrb[0].mxu0 %v2868
        %v3075 = vpop.f32.mrb[0].mxu0
        %v3076 = vadd.f32 %v2796, %v3075
        %v3077 = vpop.f32.mrb[0].mxu0
        %3078 = vmatprep.mubr.f32.mxu0 0.0
        %3079 = vmatmul.mubr.f32.gmra.mrb[0].mxu0 %v2871
        %v3080 = vpop.f32.mrb[0].mxu0
        %v3081 = vadd.f32 %v2796, %v3080
        %v3082 = vpop.f32.mrb[0].mxu0
        %3083 = vmatprep.mubr.f32.mxu0 0.0
        %3084 = vmatmul.mubr.f32.gmra.mrb[0].mxu0 %v2874
        %v3085 = vpop.f32.mrb[0].mxu0
        %v3086 = vadd.f32 %v2796, %v3085
        %v3087 = vpop.f32.mrb[0].mxu0
        %3088 = vmatprep.mubr.f32.mxu0 0.0
        %3089 = vmatmul.mubr.f32.gmra.mrb[0].mxu0 %v2877
        %v3090 = vpop.f32.mrb[0].mxu0
        %v3091 = vadd.f32 %v2796, %v3090
        %v3092 = vpop.f32.mrb[0].mxu0
        %3093 = vmatprep.mubr.f32.mxu0 0.0
        %3094 = vmatmul.mubr.f32.gmra.mrb[0].mxu0 %v2880
        %v3095 = vpop.f32.mrb[0].mxu0
        %v3096 = vadd.f32 %v2796, %v3095
        %v3097 = vpop.f32.mrb[0].mxu0
        %3098 = vmatprep.mubr.f32.mxu0 0.0
        %3099 = vmatmul.mubr.f32.gmra.mrb[0].mxu0 %v2883
        %v3100 = vpop.f32.mrb[0].mxu0
        %v3101 = vadd.f32 %v2796, %v3100
        %v3102 = vpop.f32.mrb[0].mxu0
        %3103 = vmatprep.mubr.f32.mxu0 0.0
        %3104 = vmatmul.mubr.f32.gmra.mrb[0].mxu0 %v2886
        %v3105 = vpop.f32.mrb[0].mxu0
        %v3106 = vadd.f32 %v2796, %v3105
        %v3107 = vpop.f32.mrb[0].mxu0
        %3108 = vmatprep.mubr.f32.mxu0 0.0
        %3109 = vmatmul.mubr.f32.gmra.mrb[0].mxu0 %v2889
        %v3110 = vpop.f32.mrb[0].mxu0
        %v3111 = vadd.f32 %v2796, %v3110
        %v3112 = vpop.f32.mrb[0].mxu0
        %3113 = vmatprep.mubr.f32.mxu0 0.0
        %3114 = vmatmul.mubr.f32.gmra.mrb[0].mxu0 %v2892
        %v3115 = vpop.f32.mrb[0].mxu0
        %v3116 = vadd.f32 %v2796, %v3115
        %v3117 = vpop.f32.mrb[0].mxu0
        %3118 = vdwg.mxu0
        %v3119 = vmax.f32 %v2961, 0.0
        %v3120 = vmax.f32 %v2966, 0.0
        %v3121 = vmax.f32 %v2971, 0.0
        %v3122 = vmax.f32 %v2976, 0.0
        %v3123 = vmax.f32 %v2981, 0.0
        %v3124 = vmax.f32 %v2986, 0.0
        %v3125 = vmax.f32 %v2991, 0.0
        %v3126 = vmax.f32 %v2996, 0.0
        %v3127 = vmax.f32 %v3001, 0.0
        %v3128 = vmax.f32 %v3006, 0.0
        %v3129 = vmax.f32 %v3011, 0.0
        %v3130 = vmax.f32 %v3016, 0.0
        %v3131 = vmax.f32 %v3021, 0.0
        %v3132 = vmax.f32 %v3026, 0.0
        %v3133 = vmax.f32 %v3031, 0.0
        %v3134 = vmax.f32 %v3036, 0.0
        %v3135 = vmax.f32 %v3041, 0.0
        %v3136 = vmax.f32 %v3046, 0.0
        %v3137 = vmax.f32 %v3051, 0.0
        %v3138 = vmax.f32 %v3056, 0.0
        %v3139 = vmax.f32 %v3061, 0.0
        %v3140 = vmax.f32 %v3066, 0.0
        %v3141 = vmax.f32 %v3071, 0.0
        %v3142 = vmax.f32 %v3076, 0.0
        %v3143 = vmax.f32 %v3081, 0.0
        %v3144 = vmax.f32 %v3086, 0.0
        %v3145 = vmax.f32 %v3091, 0.0
        %v3146 = vmax.f32 %v3096, 0.0
        %v3147 = vmax.f32 %v3101, 0.0
        %v3148 = vmax.f32 %v3106, 0.0
        %v3149 = vmax.f32 %v3111, 0.0
        %v3150 = vmax.f32 %v3116, 0.0
        %v3151 = vadd.f32 %v3119, %v938
        %v3152 = vadd.f32 %v3120, %v939
        %v3153 = vadd.f32 %v3121, %v940
        %v3154 = vadd.f32 %v3122, %v941
        %v3155 = vadd.f32 %v3123, %v942
        %v3156 = vadd.f32 %v3124, %v943
        %v3157 = vadd.f32 %v3125, %v944
        %v3158 = vadd.f32 %v3126, %v945
        %v3159 = vadd.f32 %v3127, %v946
        %v3160 = vadd.f32 %v3128, %v947
        %v3161 = vadd.f32 %v3129, %v948
        %v3162 = vadd.f32 %v3130, %v949
        %v3163 = vadd.f32 %v3131, %v950
        %v3164 = vadd.f32 %v3132, %v951
        %v3165 = vadd.f32 %v3133, %v952
        %v3166 = vadd.f32 %v3134, %v953
        %v3167 = vadd.f32 %v3135, %v954
        %v3168 = vadd.f32 %v3136, %v955
        %v3169 = vadd.f32 %v3137, %v956
        %v3170 = vadd.f32 %v3138, %v957
        %v3171 = vadd.f32 %v3139, %v958
        %v3172 = vadd.f32 %v3140, %v959
        %v3173 = vadd.f32 %v3141, %v960
        %v3174 = vadd.f32 %v3142, %v961
        %v3175 = vadd.f32 %v3143, %v962
        %v3176 = vadd.f32 %v3144, %v963
        %v3177 = vadd.f32 %v3145, %v964
        %v3178 = vadd.f32 %v3146, %v965
        %v3179 = vadd.f32 %v3147, %v966
        %v3180 = vadd.f32 %v3148, %v967
        %v3181 = vadd.f32 %v3149, %v968
        %v3182 = vadd.f32 %v3150, %v969
        %vm3183 = vcmask 64512
        %3184 = vst.msk [vmem:[%s564] sm:$0xff] %vm3183, %v3151
        %3185 = vst.msk [vmem:[%s564 + $0x8] sm:$0xff] %vm3183, %v3152
        %3186 = vst.msk [vmem:[%s564 + $0x10] sm:$0xff] %vm3183, %v3153
        %3187 = vst.msk [vmem:[%s564 + $0x18] sm:$0xff] %vm3183, %v3154
        %3188 = vst.msk [vmem:[%s564 + $0x20] sm:$0xff] %vm3183, %v3155
        %3189 = vst.msk [vmem:[%s564 + $0x28] sm:$0xff] %vm3183, %v3156
        %3190 = vst.msk [vmem:[%s564 + $0x30] sm:$0xff] %vm3183, %v3157
        %3191 = vst.msk [vmem:[%s564 + $0x38] sm:$0xff] %vm3183, %v3158
        %3192 = vst.msk [vmem:[%s564 + $0x40] sm:$0xff] %vm3183, %v3159
        %3193 = vst.msk [vmem:[%s564 + $0x48] sm:$0xff] %vm3183, %v3160
        %3194 = vst.msk [vmem:[%s564 + $0x50] sm:$0xff] %vm3183, %v3161
        %3195 = vst.msk [vmem:[%s564 + $0x58] sm:$0xff] %vm3183, %v3162
        %3196 = vst.msk [vmem:[%s564 + $0x60] sm:$0xff] %vm3183, %v3163
        %3197 = vst.msk [vmem:[%s564 + $0x68] sm:$0xff] %vm3183, %v3164
        %3198 = vst.msk [vmem:[%s564 + $0x70] sm:$0xff] %vm3183, %v3165
        %3199 = vst.msk [vmem:[%s564 + $0x78] sm:$0xff] %vm3183, %v3166
        %3200 = vst.msk [vmem:[%s564 + $0x80] sm:$0xff] %vm3183, %v3167
        %3201 = vst.msk [vmem:[%s564 + $0x88] sm:$0xff] %vm3183, %v3168
        %3202 = vst.msk [vmem:[%s564 + $0x90] sm:$0xff] %vm3183, %v3169
        %3203 = vst.msk [vmem:[%s564 + $0x98] sm:$0xff] %vm3183, %v3170
        %3204 = vst.msk [vmem:[%s564 + $0xa0] sm:$0xff] %vm3183, %v3171
        %3205 = vst.msk [vmem:[%s564 + $0xa8] sm:$0xff] %vm3183, %v3172
        %3206 = vst.msk [vmem:[%s564 + $0xb0] sm:$0xff] %vm3183, %v3173
        %3207 = vst.msk [vmem:[%s564 + $0xb8] sm:$0xff] %vm3183, %v3174
        %3208 = vst.msk [vmem:[%s564 + $0xc0] sm:$0xff] %vm3183, %v3175
        %3209 = vst.msk [vmem:[%s564 + $0xc8] sm:$0xff] %vm3183, %v3176
        %3210 = vst.msk [vmem:[%s564 + $0xd0] sm:$0xff] %vm3183, %v3177
        %3211 = vst.msk [vmem:[%s564 + $0xd8] sm:$0xff] %vm3183, %v3178
        %3212 = vst.msk [vmem:[%s564 + $0xe0] sm:$0xff] %vm3183, %v3179
        %3213 = vst.msk [vmem:[%s564 + $0xe8] sm:$0xff] %vm3183, %v3180
        %3214 = vst.msk [vmem:[%s564 + $0xf0] sm:$0xff] %vm3183, %v3181
        %3215 = vst.msk [vmem:[%s564 + $0xf8] sm:$0xff] %vm3183, %v3182
        %v3216 = vmax.f32 %v3151, %v3153
        %v3217 = vmax.f32 %v3152, %v3154
        %v3218 = vmax.f32 %v3155, %v3157
        %v3219 = vmax.f32 %v3156, %v3158
        %v3220 = vmax.f32 %v3159, %v3161
        %v3221 = vmax.f32 %v3160, %v3162
        %v3222 = vmax.f32 %v3163, %v3165
        %v3223 = vmax.f32 %v3164, %v3166
        %v3224 = vmax.f32 %v3167, %v3169
        %v3225 = vmax.f32 %v3168, %v3170
        %v3226 = vmax.f32 %v3171, %v3173
        %v3227 = vmax.f32 %v3172, %v3174
        %v3228 = vmax.f32 %v3175, %v3177
        %v3229 = vmax.f32 %v3176, %v3178
        %v3230 = vmax.f32 %v3179, %v3181
        %v3231 = vmax.f32 %v3180, %v3182
        %v3248 = vcombine.high %v3216, %v3216
        %v3250 = vunpack.c.l.s4 1983009808
        %v3251 = vunpack.c.0.s8 %v3250
        %v3252 = vlaneseq
        %v3253 = vshrl.u32 %v3252, 7
        %v3254 = vsub.s32 %v3251, %v3253
        %v3255 = vrot.slane %v3216, %v3254
        %v3257 = vunpack.c.l.s4 1983009808
        %v3258 = vunpack.c.0.s8 %v3257
        %v3259 = vlaneseq
        %v3260 = vshrl.u32 %v3259, 7
        %v3261 = vsub.s32 %v3258, %v3260
        %v3262 = vrot.slane %v3248, %v3261
        %v3263 = vcombine.high %v3255, %v3255
        %v3264 = vcombine.high %v3262, %v3262
        %v3265 = vcombine.high %v3217, %v3217
        %v3267 = vunpack.c.l.s4 1983009808
        %v3268 = vunpack.c.0.s8 %v3267
        %v3269 = vlaneseq
        %v3270 = vshrl.u32 %v3269, 7
        %v3271 = vsub.s32 %v3268, %v3270
        %v3272 = vrot.slane %v3217, %v3271
        %v3274 = vunpack.c.l.s4 1983009808
        %v3275 = vunpack.c.0.s8 %v3274
        %v3276 = vlaneseq
        %v3277 = vshrl.u32 %v3276, 7
        %v3278 = vsub.s32 %v3275, %v3277
        %v3279 = vrot.slane %v3265, %v3278
        %v3280 = vcombine.high %v3272, %v3272
        %v3281 = vcombine.high %v3279, %v3279
        %v3282 = vcombine.high %v3218, %v3218
        %v3284 = vunpack.c.l.s4 1983009808
        %v3285 = vunpack.c.0.s8 %v3284
        %v3286 = vlaneseq
        %v3287 = vshrl.u32 %v3286, 7
        %v3288 = vsub.s32 %v3285, %v3287
        %v3289 = vrot.slane %v3218, %v3288
        %v3291 = vunpack.c.l.s4 1983009808
        %v3292 = vunpack.c.0.s8 %v3291
        %v3293 = vlaneseq
        %v3294 = vshrl.u32 %v3293, 7
        %v3295 = vsub.s32 %v3292, %v3294
        %v3296 = vrot.slane %v3282, %v3295
        %v3297 = vcombine.high %v3289, %v3289
        %v3298 = vcombine.high %v3296, %v3296
        %v3299 = vcombine.high %v3219, %v3219
        %v3301 = vunpack.c.l.s4 1983009808
        %v3302 = vunpack.c.0.s8 %v3301
        %v3303 = vlaneseq
        %v3304 = vshrl.u32 %v3303, 7
        %v3305 = vsub.s32 %v3302, %v3304
        %v3306 = vrot.slane %v3219, %v3305
        %v3308 = vunpack.c.l.s4 1983009808
        %v3309 = vunpack.c.0.s8 %v3308
        %v3310 = vlaneseq
        %v3311 = vshrl.u32 %v3310, 7
        %v3312 = vsub.s32 %v3309, %v3311
        %v3313 = vrot.slane %v3299, %v3312
        %v3314 = vcombine.high %v3306, %v3306
        %v3315 = vcombine.high %v3313, %v3313
        %v3316 = vcombine.high %v3220, %v3220
        %v3318 = vunpack.c.l.s4 1983009808
        %v3319 = vunpack.c.0.s8 %v3318
        %v3320 = vlaneseq
        %v3321 = vshrl.u32 %v3320, 7
        %v3322 = vsub.s32 %v3319, %v3321
        %v3323 = vrot.slane %v3220, %v3322
        %v3325 = vunpack.c.l.s4 1983009808
        %v3326 = vunpack.c.0.s8 %v3325
        %v3327 = vlaneseq
        %v3328 = vshrl.u32 %v3327, 7
        %v3329 = vsub.s32 %v3326, %v3328
        %v3330 = vrot.slane %v3316, %v3329
        %v3331 = vcombine.high %v3323, %v3323
        %v3332 = vcombine.high %v3330, %v3330
        %v3333 = vcombine.high %v3221, %v3221
        %v3335 = vunpack.c.l.s4 1983009808
        %v3336 = vunpack.c.0.s8 %v3335
        %v3337 = vlaneseq
        %v3338 = vshrl.u32 %v3337, 7
        %v3339 = vsub.s32 %v3336, %v3338
        %v3340 = vrot.slane %v3221, %v3339
        %v3342 = vunpack.c.l.s4 1983009808
        %v3343 = vunpack.c.0.s8 %v3342
        %v3344 = vlaneseq
        %v3345 = vshrl.u32 %v3344, 7
        %v3346 = vsub.s32 %v3343, %v3345
        %v3347 = vrot.slane %v3333, %v3346
        %v3348 = vcombine.high %v3340, %v3340
        %v3349 = vcombine.high %v3347, %v3347
        %v3350 = vcombine.high %v3222, %v3222
        %v3352 = vunpack.c.l.s4 1983009808
        %v3353 = vunpack.c.0.s8 %v3352
        %v3354 = vlaneseq
        %v3355 = vshrl.u32 %v3354, 7
        %v3356 = vsub.s32 %v3353, %v3355
        %v3357 = vrot.slane %v3222, %v3356
        %v3359 = vunpack.c.l.s4 1983009808
        %v3360 = vunpack.c.0.s8 %v3359
        %v3361 = vlaneseq
        %v3362 = vshrl.u32 %v3361, 7
        %v3363 = vsub.s32 %v3360, %v3362
        %v3364 = vrot.slane %v3350, %v3363
        %v3365 = vcombine.high %v3357, %v3357
        %v3366 = vcombine.high %v3364, %v3364
        %v3367 = vcombine.high %v3223, %v3223
        %v3369 = vunpack.c.l.s4 1983009808
        %v3370 = vunpack.c.0.s8 %v3369
        %v3371 = vlaneseq
        %v3372 = vshrl.u32 %v3371, 7
        %v3373 = vsub.s32 %v3370, %v3372
        %v3374 = vrot.slane %v3223, %v3373
        %v3376 = vunpack.c.l.s4 1983009808
        %v3377 = vunpack.c.0.s8 %v3376
        %v3378 = vlaneseq
        %v3379 = vshrl.u32 %v3378, 7
        %v3380 = vsub.s32 %v3377, %v3379
        %v3381 = vrot.slane %v3367, %v3380
        %v3382 = vcombine.high %v3374, %v3374
        %v3383 = vcombine.high %v3381, %v3381
        %v3384 = vcombine.high %v3224, %v3224
        %v3386 = vunpack.c.l.s4 1983009808
        %v3387 = vunpack.c.0.s8 %v3386
        %v3388 = vlaneseq
        %v3389 = vshrl.u32 %v3388, 7
        %v3390 = vsub.s32 %v3387, %v3389
        %v3391 = vrot.slane %v3224, %v3390
        %v3393 = vunpack.c.l.s4 1983009808
        %v3394 = vunpack.c.0.s8 %v3393
        %v3395 = vlaneseq
        %v3396 = vshrl.u32 %v3395, 7
        %v3397 = vsub.s32 %v3394, %v3396
        %v3398 = vrot.slane %v3384, %v3397
        %v3399 = vcombine.high %v3391, %v3391
        %v3400 = vcombine.high %v3398, %v3398
        %v3401 = vcombine.high %v3225, %v3225
        %v3403 = vunpack.c.l.s4 1983009808
        %v3404 = vunpack.c.0.s8 %v3403
        %v3405 = vlaneseq
        %v3406 = vshrl.u32 %v3405, 7
        %v3407 = vsub.s32 %v3404, %v3406
        %v3408 = vrot.slane %v3225, %v3407
        %v3410 = vunpack.c.l.s4 1983009808
        %v3411 = vunpack.c.0.s8 %v3410
        %v3412 = vlaneseq
        %v3413 = vshrl.u32 %v3412, 7
        %v3414 = vsub.s32 %v3411, %v3413
        %v3415 = vrot.slane %v3401, %v3414
        %v3416 = vcombine.high %v3408, %v3408
        %v3417 = vcombine.high %v3415, %v3415
        %v3418 = vcombine.high %v3226, %v3226
        %v3420 = vunpack.c.l.s4 1983009808
        %v3421 = vunpack.c.0.s8 %v3420
        %v3422 = vlaneseq
        %v3423 = vshrl.u32 %v3422, 7
        %v3424 = vsub.s32 %v3421, %v3423
        %v3425 = vrot.slane %v3226, %v3424
        %v3427 = vunpack.c.l.s4 1983009808
        %v3428 = vunpack.c.0.s8 %v3427
        %v3429 = vlaneseq
        %v3430 = vshrl.u32 %v3429, 7
        %v3431 = vsub.s32 %v3428, %v3430
        %v3432 = vrot.slane %v3418, %v3431
        %v3433 = vcombine.high %v3425, %v3425
        %v3434 = vcombine.high %v3432, %v3432
        %v3435 = vcombine.high %v3227, %v3227
        %v3437 = vunpack.c.l.s4 1983009808
        %v3438 = vunpack.c.0.s8 %v3437
        %v3439 = vlaneseq
        %v3440 = vshrl.u32 %v3439, 7
        %v3441 = vsub.s32 %v3438, %v3440
        %v3442 = vrot.slane %v3227, %v3441
        %v3444 = vunpack.c.l.s4 1983009808
        %v3445 = vunpack.c.0.s8 %v3444
        %v3446 = vlaneseq
        %v3447 = vshrl.u32 %v3446, 7
        %v3448 = vsub.s32 %v3445, %v3447
        %v3449 = vrot.slane %v3435, %v3448
        %v3450 = vcombine.high %v3442, %v3442
        %v3451 = vcombine.high %v3449, %v3449
        %v3452 = vcombine.high %v3228, %v3228
        %v3454 = vunpack.c.l.s4 1983009808
        %v3455 = vunpack.c.0.s8 %v3454
        %v3456 = vlaneseq
        %v3457 = vshrl.u32 %v3456, 7
        %v3458 = vsub.s32 %v3455, %v3457
        %v3459 = vrot.slane %v3228, %v3458
        %v3461 = vunpack.c.l.s4 1983009808
        %v3462 = vunpack.c.0.s8 %v3461
        %v3463 = vlaneseq
        %v3464 = vshrl.u32 %v3463, 7
        %v3465 = vsub.s32 %v3462, %v3464
        %v3466 = vrot.slane %v3452, %v3465
        %v3467 = vcombine.high %v3459, %v3459
        %v3468 = vcombine.high %v3466, %v3466
        %v3469 = vcombine.high %v3229, %v3229
        %v3471 = vunpack.c.l.s4 1983009808
        %v3472 = vunpack.c.0.s8 %v3471
        %v3473 = vlaneseq
        %v3474 = vshrl.u32 %v3473, 7
        %v3475 = vsub.s32 %v3472, %v3474
        %v3476 = vrot.slane %v3229, %v3475
        %v3478 = vunpack.c.l.s4 1983009808
        %v3479 = vunpack.c.0.s8 %v3478
        %v3480 = vlaneseq
        %v3481 = vshrl.u32 %v3480, 7
        %v3482 = vsub.s32 %v3479, %v3481
        %v3483 = vrot.slane %v3469, %v3482
        %v3484 = vcombine.high %v3476, %v3476
        %v3485 = vcombine.high %v3483, %v3483
        %v3486 = vcombine.high %v3230, %v3230
        %v3488 = vunpack.c.l.s4 1983009808
        %v3489 = vunpack.c.0.s8 %v3488
        %v3490 = vlaneseq
        %v3491 = vshrl.u32 %v3490, 7
        %v3492 = vsub.s32 %v3489, %v3491
        %v3493 = vrot.slane %v3230, %v3492
        %v3495 = vunpack.c.l.s4 1983009808
        %v3496 = vunpack.c.0.s8 %v3495
        %v3497 = vlaneseq
        %v3498 = vshrl.u32 %v3497, 7
        %v3499 = vsub.s32 %v3496, %v3498
        %v3500 = vrot.slane %v3486, %v3499
        %v3501 = vcombine.high %v3493, %v3493
        %v3502 = vcombine.high %v3500, %v3500
        %v3503 = vcombine.high %v3231, %v3231
        %v3505 = vunpack.c.l.s4 1983009808
        %v3506 = vunpack.c.0.s8 %v3505
        %v3507 = vlaneseq
        %v3508 = vshrl.u32 %v3507, 7
        %v3509 = vsub.s32 %v3506, %v3508
        %v3510 = vrot.slane %v3231, %v3509
        %v3512 = vunpack.c.l.s4 1983009808
        %v3513 = vunpack.c.0.s8 %v3512
        %v3514 = vlaneseq
        %v3515 = vshrl.u32 %v3514, 7
        %v3516 = vsub.s32 %v3513, %v3515
        %v3517 = vrot.slane %v3503, %v3516
        %v3518 = vcombine.high %v3510, %v3510
        %v3519 = vcombine.high %v3517, %v3517
        %v3584 = vrot.slane %v3255, 7
        %v3585 = vrot.slane %v3584, 2
        %v3586 = vrot.slane %v3263, 7
        %v3587 = vrot.slane %v3586, 2
        %v3588 = vrot.slane %v3262, 7
        %v3589 = vrot.slane %v3588, 2
        %v3590 = vrot.slane %v3264, 7
        %v3591 = vrot.slane %v3590, 2
        %v3592 = vrot.slane %v3272, 7
        %v3593 = vrot.slane %v3592, 2
        %v3594 = vrot.slane %v3280, 7
        %v3595 = vrot.slane %v3594, 2
        %v3596 = vrot.slane %v3279, 7
        %v3597 = vrot.slane %v3596, 2
        %v3598 = vrot.slane %v3281, 7
        %v3599 = vrot.slane %v3598, 2
        %v3600 = vrot.slane %v3289, 7
        %v3601 = vrot.slane %v3600, 2
        %v3602 = vrot.slane %v3297, 7
        %v3603 = vrot.slane %v3602, 2
        %v3604 = vrot.slane %v3296, 7
        %v3605 = vrot.slane %v3604, 2
        %v3606 = vrot.slane %v3298, 7
        %v3607 = vrot.slane %v3606, 2
        %v3608 = vrot.slane %v3306, 7
        %v3609 = vrot.slane %v3608, 2
        %v3610 = vrot.slane %v3314, 7
        %v3611 = vrot.slane %v3610, 2
        %v3612 = vrot.slane %v3313, 7
        %v3613 = vrot.slane %v3612, 2
        %v3614 = vrot.slane %v3315, 7
        %v3615 = vrot.slane %v3614, 2
        %v3616 = vrot.slane %v3323, 7
        %v3617 = vrot.slane %v3616, 2
        %v3618 = vrot.slane %v3331, 7
        %v3619 = vrot.slane %v3618, 2
        %v3620 = vrot.slane %v3330, 7
        %v3621 = vrot.slane %v3620, 2
        %v3622 = vrot.slane %v3332, 7
        %v3623 = vrot.slane %v3622, 2
        %v3624 = vrot.slane %v3340, 7
        %v3625 = vrot.slane %v3624, 2
        %v3626 = vrot.slane %v3348, 7
        %v3627 = vrot.slane %v3626, 2
        %v3628 = vrot.slane %v3347, 7
        %v3629 = vrot.slane %v3628, 2
        %v3630 = vrot.slane %v3349, 7
        %v3631 = vrot.slane %v3630, 2
        %v3632 = vrot.slane %v3357, 7
        %v3633 = vrot.slane %v3632, 2
        %v3634 = vrot.slane %v3365, 7
        %v3635 = vrot.slane %v3634, 2
        %v3636 = vrot.slane %v3364, 7
        %v3637 = vrot.slane %v3636, 2
        %v3638 = vrot.slane %v3366, 7
        %v3639 = vrot.slane %v3638, 2
        %v3640 = vrot.slane %v3374, 7
        %v3641 = vrot.slane %v3640, 2
        %v3642 = vrot.slane %v3382, 7
        %v3643 = vrot.slane %v3642, 2
        %v3644 = vrot.slane %v3381, 7
        %v3645 = vrot.slane %v3644, 2
        %v3646 = vrot.slane %v3383, 7
        %v3647 = vrot.slane %v3646, 2
        %v3648 = vrot.slane %v3391, 7
        %v3649 = vrot.slane %v3648, 2
        %v3650 = vrot.slane %v3399, 7
        %v3651 = vrot.slane %v3650, 2
        %v3652 = vrot.slane %v3398, 7
        %v3653 = vrot.slane %v3652, 2
        %v3654 = vrot.slane %v3400, 7
        %v3655 = vrot.slane %v3654, 2
        %v3656 = vrot.slane %v3408, 7
        %v3657 = vrot.slane %v3656, 2
        %v3658 = vrot.slane %v3416, 7
        %v3659 = vrot.slane %v3658, 2
        %v3660 = vrot.slane %v3415, 7
        %v3661 = vrot.slane %v3660, 2
        %v3662 = vrot.slane %v3417, 7
        %v3663 = vrot.slane %v3662, 2
        %v3664 = vrot.slane %v3425, 7
        %v3665 = vrot.slane %v3664, 2
        %v3666 = vrot.slane %v3433, 7
        %v3667 = vrot.slane %v3666, 2
        %v3668 = vrot.slane %v3432, 7
        %v3669 = vrot.slane %v3668, 2
        %v3670 = vrot.slane %v3434, 7
        %v3671 = vrot.slane %v3670, 2
        %v3672 = vrot.slane %v3442, 7
        %v3673 = vrot.slane %v3672, 2
        %v3674 = vrot.slane %v3450, 7
        %v3675 = vrot.slane %v3674, 2
        %v3676 = vrot.slane %v3449, 7
        %v3677 = vrot.slane %v3676, 2
        %v3678 = vrot.slane %v3451, 7
        %v3679 = vrot.slane %v3678, 2
        %v3680 = vrot.slane %v3459, 7
        %v3681 = vrot.slane %v3680, 2
        %v3682 = vrot.slane %v3467, 7
        %v3683 = vrot.slane %v3682, 2
        %v3684 = vrot.slane %v3466, 7
        %v3685 = vrot.slane %v3684, 2
        %v3686 = vrot.slane %v3468, 7
        %v3687 = vrot.slane %v3686, 2
        %v3688 = vrot.slane %v3476, 7
        %v3689 = vrot.slane %v3688, 2
        %v3690 = vrot.slane %v3484, 7
        %v3691 = vrot.slane %v3690, 2
        %v3692 = vrot.slane %v3483, 7
        %v3693 = vrot.slane %v3692, 2
        %v3694 = vrot.slane %v3485, 7
        %v3695 = vrot.slane %v3694, 2
        %v3696 = vrot.slane %v3493, 7
        %v3697 = vrot.slane %v3696, 2
        %v3698 = vrot.slane %v3501, 7
        %v3699 = vrot.slane %v3698, 2
        %v3700 = vrot.slane %v3500, 7
        %v3701 = vrot.slane %v3700, 2
        %v3702 = vrot.slane %v3502, 7
        %v3703 = vrot.slane %v3702, 2
        %v3704 = vrot.slane %v3510, 7
        %v3705 = vrot.slane %v3704, 2
        %v3706 = vrot.slane %v3518, 7
        %v3707 = vrot.slane %v3706, 2
        %v3708 = vrot.slane %v3517, 7
        %v3709 = vrot.slane %v3708, 2
        %v3710 = vrot.slane %v3519, 7
        %v3711 = vrot.slane %v3710, 2
        %v3776 = vmax.f32 %v3255, %v3585
        %v3777 = vmax.f32 %v3263, %v3587
        %v3778 = vmax.f32 %v3262, %v3589
        %v3779 = vmax.f32 %v3264, %v3591
        %v3780 = vmax.f32 %v3272, %v3593
        %v3781 = vmax.f32 %v3280, %v3595
        %v3782 = vmax.f32 %v3279, %v3597
        %v3783 = vmax.f32 %v3281, %v3599
        %v3784 = vmax.f32 %v3289, %v3601
        %v3785 = vmax.f32 %v3297, %v3603
        %v3786 = vmax.f32 %v3296, %v3605
        %v3787 = vmax.f32 %v3298, %v3607
        %v3788 = vmax.f32 %v3306, %v3609
        %v3789 = vmax.f32 %v3314, %v3611
        %v3790 = vmax.f32 %v3313, %v3613
        %v3791 = vmax.f32 %v3315, %v3615
        %v3792 = vmax.f32 %v3323, %v3617
        %v3793 = vmax.f32 %v3331, %v3619
        %v3794 = vmax.f32 %v3330, %v3621
        %v3795 = vmax.f32 %v3332, %v3623
        %v3796 = vmax.f32 %v3340, %v3625
        %v3797 = vmax.f32 %v3348, %v3627
        %v3798 = vmax.f32 %v3347, %v3629
        %v3799 = vmax.f32 %v3349, %v3631
        %v3800 = vmax.f32 %v3357, %v3633
        %v3801 = vmax.f32 %v3365, %v3635
        %v3802 = vmax.f32 %v3364, %v3637
        %v3803 = vmax.f32 %v3366, %v3639
        %v3804 = vmax.f32 %v3374, %v3641
        %v3805 = vmax.f32 %v3382, %v3643
        %v3806 = vmax.f32 %v3381, %v3645
        %v3807 = vmax.f32 %v3383, %v3647
        %v3808 = vmax.f32 %v3391, %v3649
        %v3809 = vmax.f32 %v3399, %v3651
        %v3810 = vmax.f32 %v3398, %v3653
        %v3811 = vmax.f32 %v3400, %v3655
        %v3812 = vmax.f32 %v3408, %v3657
        %v3813 = vmax.f32 %v3416, %v3659
        %v3814 = vmax.f32 %v3415, %v3661
        %v3815 = vmax.f32 %v3417, %v3663
        %v3816 = vmax.f32 %v3425, %v3665
        %v3817 = vmax.f32 %v3433, %v3667
        %v3818 = vmax.f32 %v3432, %v3669
        %v3819 = vmax.f32 %v3434, %v3671
        %v3820 = vmax.f32 %v3442, %v3673
        %v3821 = vmax.f32 %v3450, %v3675
        %v3822 = vmax.f32 %v3449, %v3677
        %v3823 = vmax.f32 %v3451, %v3679
        %v3824 = vmax.f32 %v3459, %v3681
        %v3825 = vmax.f32 %v3467, %v3683
        %v3826 = vmax.f32 %v3466, %v3685
        %v3827 = vmax.f32 %v3468, %v3687
        %v3828 = vmax.f32 %v3476, %v3689
        %v3829 = vmax.f32 %v3484, %v3691
        %v3830 = vmax.f32 %v3483, %v3693
        %v3831 = vmax.f32 %v3485, %v3695
        %v3832 = vmax.f32 %v3493, %v3697
        %v3833 = vmax.f32 %v3501, %v3699
        %v3834 = vmax.f32 %v3500, %v3701
        %v3835 = vmax.f32 %v3502, %v3703
        %v3836 = vmax.f32 %v3510, %v3705
        %v3837 = vmax.f32 %v3518, %v3707
        %v3838 = vmax.f32 %v3517, %v3709
        %v3839 = vmax.f32 %v3519, %v3711
        %v3904 = vlaneseq
        %v3905 = vshrl.u32 %v3904, 7
        %v3906 = vsub.s32 0, %v3905
        %v3907 = vrot.slane %v3776, %v3906
        %v3908 = vlaneseq
        %v3909 = vshrl.u32 %v3908, 7
        %v3910 = vsub.s32 0, %v3909
        %v3911 = vrot.slane %v3777, %v3910
        %v3912 = vlaneseq
        %v3913 = vshrl.u32 %v3912, 7
        %v3914 = vsub.s32 0, %v3913
        %v3915 = vrot.slane %v3778, %v3914
        %v3916 = vlaneseq
        %v3917 = vshrl.u32 %v3916, 7
        %v3918 = vsub.s32 0, %v3917
        %v3919 = vrot.slane %v3779, %v3918
        %v3920 = vlaneseq
        %v3921 = vshrl.u32 %v3920, 7
        %v3922 = vsub.s32 0, %v3921
        %v3923 = vrot.slane %v3780, %v3922
        %v3924 = vlaneseq
        %v3925 = vshrl.u32 %v3924, 7
        %v3926 = vsub.s32 0, %v3925
        %v3927 = vrot.slane %v3781, %v3926
        %v3928 = vlaneseq
        %v3929 = vshrl.u32 %v3928, 7
        %v3930 = vsub.s32 0, %v3929
        %v3931 = vrot.slane %v3782, %v3930
        %v3932 = vlaneseq
        %v3933 = vshrl.u32 %v3932, 7
        %v3934 = vsub.s32 0, %v3933
        %v3935 = vrot.slane %v3783, %v3934
        %v3936 = vlaneseq
        %v3937 = vshrl.u32 %v3936, 7
        %v3938 = vsub.s32 0, %v3937
        %v3939 = vrot.slane %v3784, %v3938
        %v3940 = vlaneseq
        %v3941 = vshrl.u32 %v3940, 7
        %v3942 = vsub.s32 0, %v3941
        %v3943 = vrot.slane %v3785, %v3942
        %v3944 = vlaneseq
        %v3945 = vshrl.u32 %v3944, 7
        %v3946 = vsub.s32 0, %v3945
        %v3947 = vrot.slane %v3786, %v3946
        %v3948 = vlaneseq
        %v3949 = vshrl.u32 %v3948, 7
        %v3950 = vsub.s32 0, %v3949
        %v3951 = vrot.slane %v3787, %v3950
        %v3952 = vlaneseq
        %v3953 = vshrl.u32 %v3952, 7
        %v3954 = vsub.s32 0, %v3953
        %v3955 = vrot.slane %v3788, %v3954
        %v3956 = vlaneseq
        %v3957 = vshrl.u32 %v3956, 7
        %v3958 = vsub.s32 0, %v3957
        %v3959 = vrot.slane %v3789, %v3958
        %v3960 = vlaneseq
        %v3961 = vshrl.u32 %v3960, 7
        %v3962 = vsub.s32 0, %v3961
        %v3963 = vrot.slane %v3790, %v3962
        %v3964 = vlaneseq
        %v3965 = vshrl.u32 %v3964, 7
        %v3966 = vsub.s32 0, %v3965
        %v3967 = vrot.slane %v3791, %v3966
        %v3968 = vlaneseq
        %v3969 = vshrl.u32 %v3968, 7
        %v3970 = vsub.s32 0, %v3969
        %v3971 = vrot.slane %v3792, %v3970
        %v3972 = vlaneseq
        %v3973 = vshrl.u32 %v3972, 7
        %v3974 = vsub.s32 0, %v3973
        %v3975 = vrot.slane %v3793, %v3974
        %v3976 = vlaneseq
        %v3977 = vshrl.u32 %v3976, 7
        %v3978 = vsub.s32 0, %v3977
        %v3979 = vrot.slane %v3794, %v3978
        %v3980 = vlaneseq
        %v3981 = vshrl.u32 %v3980, 7
        %v3982 = vsub.s32 0, %v3981
        %v3983 = vrot.slane %v3795, %v3982
        %v3984 = vlaneseq
        %v3985 = vshrl.u32 %v3984, 7
        %v3986 = vsub.s32 0, %v3985
        %v3987 = vrot.slane %v3796, %v3986
        %v3988 = vlaneseq
        %v3989 = vshrl.u32 %v3988, 7
        %v3990 = vsub.s32 0, %v3989
        %v3991 = vrot.slane %v3797, %v3990
        %v3992 = vlaneseq
        %v3993 = vshrl.u32 %v3992, 7
        %v3994 = vsub.s32 0, %v3993
        %v3995 = vrot.slane %v3798, %v3994
        %v3996 = vlaneseq
        %v3997 = vshrl.u32 %v3996, 7
        %v3998 = vsub.s32 0, %v3997
        %v3999 = vrot.slane %v3799, %v3998
        %v4000 = vlaneseq
        %v4001 = vshrl.u32 %v4000, 7
        %v4002 = vsub.s32 0, %v4001
        %v4003 = vrot.slane %v3800, %v4002
        %v4004 = vlaneseq
        %v4005 = vshrl.u32 %v4004, 7
        %v4006 = vsub.s32 0, %v4005
        %v4007 = vrot.slane %v3801, %v4006
        %v4008 = vlaneseq
        %v4009 = vshrl.u32 %v4008, 7
        %v4010 = vsub.s32 0, %v4009
        %v4011 = vrot.slane %v3802, %v4010
        %v4012 = vlaneseq
        %v4013 = vshrl.u32 %v4012, 7
        %v4014 = vsub.s32 0, %v4013
        %v4015 = vrot.slane %v3803, %v4014
        %v4016 = vlaneseq
        %v4017 = vshrl.u32 %v4016, 7
        %v4018 = vsub.s32 0, %v4017
        %v4019 = vrot.slane %v3804, %v4018
        %v4020 = vlaneseq
        %v4021 = vshrl.u32 %v4020, 7
        %v4022 = vsub.s32 0, %v4021
        %v4023 = vrot.slane %v3805, %v4022
        %v4024 = vlaneseq
        %v4025 = vshrl.u32 %v4024, 7
        %v4026 = vsub.s32 0, %v4025
        %v4027 = vrot.slane %v3806, %v4026
        %v4028 = vlaneseq
        %v4029 = vshrl.u32 %v4028, 7
        %v4030 = vsub.s32 0, %v4029
        %v4031 = vrot.slane %v3807, %v4030
        %v4032 = vlaneseq
        %v4033 = vshrl.u32 %v4032, 7
        %v4034 = vsub.s32 0, %v4033
        %v4035 = vrot.slane %v3808, %v4034
        %v4036 = vlaneseq
        %v4037 = vshrl.u32 %v4036, 7
        %v4038 = vsub.s32 0, %v4037
        %v4039 = vrot.slane %v3809, %v4038
        %v4040 = vlaneseq
        %v4041 = vshrl.u32 %v4040, 7
        %v4042 = vsub.s32 0, %v4041
        %v4043 = vrot.slane %v3810, %v4042
        %v4044 = vlaneseq
        %v4045 = vshrl.u32 %v4044, 7
        %v4046 = vsub.s32 0, %v4045
        %v4047 = vrot.slane %v3811, %v4046
        %v4048 = vlaneseq
        %v4049 = vshrl.u32 %v4048, 7
        %v4050 = vsub.s32 0, %v4049
        %v4051 = vrot.slane %v3812, %v4050
        %v4052 = vlaneseq
        %v4053 = vshrl.u32 %v4052, 7
        %v4054 = vsub.s32 0, %v4053
        %v4055 = vrot.slane %v3813, %v4054
        %v4056 = vlaneseq
        %v4057 = vshrl.u32 %v4056, 7
        %v4058 = vsub.s32 0, %v4057
        %v4059 = vrot.slane %v3814, %v4058
        %v4060 = vlaneseq
        %v4061 = vshrl.u32 %v4060, 7
        %v4062 = vsub.s32 0, %v4061
        %v4063 = vrot.slane %v3815, %v4062
        %v4064 = vlaneseq
        %v4065 = vshrl.u32 %v4064, 7
        %v4066 = vsub.s32 0, %v4065
        %v4067 = vrot.slane %v3816, %v4066
        %v4068 = vlaneseq
        %v4069 = vshrl.u32 %v4068, 7
        %v4070 = vsub.s32 0, %v4069
        %v4071 = vrot.slane %v3817, %v4070
        %v4072 = vlaneseq
        %v4073 = vshrl.u32 %v4072, 7
        %v4074 = vsub.s32 0, %v4073
        %v4075 = vrot.slane %v3818, %v4074
        %v4076 = vlaneseq
        %v4077 = vshrl.u32 %v4076, 7
        %v4078 = vsub.s32 0, %v4077
        %v4079 = vrot.slane %v3819, %v4078
        %v4080 = vlaneseq
        %v4081 = vshrl.u32 %v4080, 7
        %v4082 = vsub.s32 0, %v4081
        %v4083 = vrot.slane %v3820, %v4082
        %v4084 = vlaneseq
        %v4085 = vshrl.u32 %v4084, 7
        %v4086 = vsub.s32 0, %v4085
        %v4087 = vrot.slane %v3821, %v4086
        %v4088 = vlaneseq
        %v4089 = vshrl.u32 %v4088, 7
        %v4090 = vsub.s32 0, %v4089
        %v4091 = vrot.slane %v3822, %v4090
        %v4092 = vlaneseq
        %v4093 = vshrl.u32 %v4092, 7
        %v4094 = vsub.s32 0, %v4093
        %v4095 = vrot.slane %v3823, %v4094
        %v4096 = vlaneseq
        %v4097 = vshrl.u32 %v4096, 7
        %v4098 = vsub.s32 0, %v4097
        %v4099 = vrot.slane %v3824, %v4098
        %v4100 = vlaneseq
        %v4101 = vshrl.u32 %v4100, 7
        %v4102 = vsub.s32 0, %v4101
        %v4103 = vrot.slane %v3825, %v4102
        %v4104 = vlaneseq
        %v4105 = vshrl.u32 %v4104, 7
        %v4106 = vsub.s32 0, %v4105
        %v4107 = vrot.slane %v3826, %v4106
        %v4108 = vlaneseq
        %v4109 = vshrl.u32 %v4108, 7
        %v4110 = vsub.s32 0, %v4109
        %v4111 = vrot.slane %v3827, %v4110
        %v4112 = vlaneseq
        %v4113 = vshrl.u32 %v4112, 7
        %v4114 = vsub.s32 0, %v4113
        %v4115 = vrot.slane %v3828, %v4114
        %v4116 = vlaneseq
        %v4117 = vshrl.u32 %v4116, 7
        %v4118 = vsub.s32 0, %v4117
        %v4119 = vrot.slane %v3829, %v4118
        %v4120 = vlaneseq
        %v4121 = vshrl.u32 %v4120, 7
        %v4122 = vsub.s32 0, %v4121
        %v4123 = vrot.slane %v3830, %v4122
        %v4124 = vlaneseq
        %v4125 = vshrl.u32 %v4124, 7
        %v4126 = vsub.s32 0, %v4125
        %v4127 = vrot.slane %v3831, %v4126
        %v4128 = vlaneseq
        %v4129 = vshrl.u32 %v4128, 7
        %v4130 = vsub.s32 0, %v4129
        %v4131 = vrot.slane %v3832, %v4130
        %v4132 = vlaneseq
        %v4133 = vshrl.u32 %v4132, 7
        %v4134 = vsub.s32 0, %v4133
        %v4135 = vrot.slane %v3833, %v4134
        %v4136 = vlaneseq
        %v4137 = vshrl.u32 %v4136, 7
        %v4138 = vsub.s32 0, %v4137
        %v4139 = vrot.slane %v3834, %v4138
        %v4140 = vlaneseq
        %v4141 = vshrl.u32 %v4140, 7
        %v4142 = vsub.s32 0, %v4141
        %v4143 = vrot.slane %v3835, %v4142
        %v4144 = vlaneseq
        %v4145 = vshrl.u32 %v4144, 7
        %v4146 = vsub.s32 0, %v4145
        %v4147 = vrot.slane %v3836, %v4146
        %v4148 = vlaneseq
        %v4149 = vshrl.u32 %v4148, 7
        %v4150 = vsub.s32 0, %v4149
        %v4151 = vrot.slane %v3837, %v4150
        %v4152 = vlaneseq
        %v4153 = vshrl.u32 %v4152, 7
        %v4154 = vsub.s32 0, %v4153
        %v4155 = vrot.slane %v3838, %v4154
        %v4156 = vlaneseq
        %v4157 = vshrl.u32 %v4156, 7
        %v4158 = vsub.s32 0, %v4157
        %v4159 = vrot.slane %v3839, %v4158
        %vm4160 = vcmask 1041409
        %v4161 = vsel %vm4160, %v3911, %v3907
        %vm4162 = vcmask 1042434
        %v4163 = vsel %vm4162, %v3915, %v4161
        %vm4164 = vcmask 1043459
        %v4165 = vsel %vm4164, %v3919, %v4163
        %vm4166 = vcmask 1044484
        %v4167 = vsel %vm4166, %v3923, %v4165
        %vm4168 = vcmask 1045509
        %v4169 = vsel %vm4168, %v3927, %v4167
        %vm4170 = vcmask 1046534
        %v4171 = vsel %vm4170, %v3931, %v4169
        %vm4172 = vcmask 1047559
        %v4173 = vsel %vm4172, %v3935, %v4171
        %v4174 = vsel %vm4160, %v3943, %v3939
        %v4175 = vsel %vm4162, %v3947, %v4174
        %v4176 = vsel %vm4164, %v3951, %v4175
        %v4177 = vsel %vm4166, %v3955, %v4176
        %v4178 = vsel %vm4168, %v3959, %v4177
        %v4179 = vsel %vm4170, %v3963, %v4178
        %v4180 = vsel %vm4172, %v3967, %v4179
        %v4181 = vsel %vm4160, %v3975, %v3971
        %v4182 = vsel %vm4162, %v3979, %v4181
        %v4183 = vsel %vm4164, %v3983, %v4182
        %v4184 = vsel %vm4166, %v3987, %v4183
        %v4185 = vsel %vm4168, %v3991, %v4184
        %v4186 = vsel %vm4170, %v3995, %v4185
        %v4187 = vsel %vm4172, %v3999, %v4186
        %v4188 = vsel %vm4160, %v4007, %v4003
        %v4189 = vsel %vm4162, %v4011, %v4188
        %v4190 = vsel %vm4164, %v4015, %v4189
        %v4191 = vsel %vm4166, %v4019, %v4190
        %v4192 = vsel %vm4168, %v4023, %v4191
        %v4193 = vsel %vm4170, %v4027, %v4192
        %v4194 = vsel %vm4172, %v4031, %v4193
        %v4195 = vsel %vm4160, %v4039, %v4035
        %v4196 = vsel %vm4162, %v4043, %v4195
        %v4197 = vsel %vm4164, %v4047, %v4196
        %v4198 = vsel %vm4166, %v4051, %v4197
        %v4199 = vsel %vm4168, %v4055, %v4198
        %v4200 = vsel %vm4170, %v4059, %v4199
        %v4201 = vsel %vm4172, %v4063, %v4200
        %v4202 = vsel %vm4160, %v4071, %v4067
        %v4203 = vsel %vm4162, %v4075, %v4202
        %v4204 = vsel %vm4164, %v4079, %v4203
        %v4205 = vsel %vm4166, %v4083, %v4204
        %v4206 = vsel %vm4168, %v4087, %v4205
        %v4207 = vsel %vm4170, %v4091, %v4206
        %v4208 = vsel %vm4172, %v4095, %v4207
        %v4209 = vsel %vm4160, %v4103, %v4099
        %v4210 = vsel %vm4162, %v4107, %v4209
        %v4211 = vsel %vm4164, %v4111, %v4210
        %v4212 = vsel %vm4166, %v4115, %v4211
        %v4213 = vsel %vm4168, %v4119, %v4212
        %v4214 = vsel %vm4170, %v4123, %v4213
        %v4215 = vsel %vm4172, %v4127, %v4214
        %v4216 = vsel %vm4160, %v4135, %v4131
        %v4217 = vsel %vm4162, %v4139, %v4216
        %v4218 = vsel %vm4164, %v4143, %v4217
        %v4219 = vsel %vm4166, %v4147, %v4218
        %v4220 = vsel %vm4168, %v4151, %v4219
        %v4221 = vsel %vm4170, %v4155, %v4220
        %v4222 = vsel %vm4172, %v4159, %v4221
        %4231 = vst.msk [vmem:[%s571] sm:$0xff] %vm3183, %v4173
        %4232 = vst.msk [vmem:[%s571 + $0x8] sm:$0xff] %vm3183, %v4180
        %4233 = vst.msk [vmem:[%s571 + $0x10] sm:$0xff] %vm3183, %v4187
        %4234 = vst.msk [vmem:[%s571 + $0x18] sm:$0xff] %vm3183, %v4194
        %4235 = vst.msk [vmem:[%s571 + $0x20] sm:$0xff] %vm3183, %v4201
        %4236 = vst.msk [vmem:[%s571 + $0x28] sm:$0xff] %vm3183, %v4208
        %4237 = vst.msk [vmem:[%s571 + $0x30] sm:$0xff] %vm3183, %v4215
        %4238 = vst.msk [vmem:[%s571 + $0x38] sm:$0xff] %vm3183, %v4222
        %s4239 = sand.u32 %s282, 1
        %s4240 = scalar_lea.sflag [#allocation4], %s4239
        %s4241 = sand.u32 %s282, 1
        %s4242 = smul.addr %s4241, 256
        %s4243 = scalar_lea.vmem [#allocation20], %s4242
        %s4244 = sand.u32 %s308, 1
        %s4245 = scalar_lea.sflag [#allocation22], %s4244
        %s4246 = sand.u32 %s308, 1
        %s4247 = smul.addr %s4246, 64
        %s4248 = scalar_lea.vmem [#allocation21], %s4247
        // Predicated region
        $region109: #{_lambda_.1} parent=63 // pred_check
          %p4249 = pneg %p292
        $region110: #{_lambda_.1} parent=63 // pred_check_branch
          %4251 = sbr.rel (%p4249) target = $region112
        $region111: #{_lambda_.1} parent=63 // pred_region
          %s4253 = ssub.s32 4096, 4096
          %4254 = vsyncadd %s4240, %s4253
          %s4255 = smul.addr %s38, 32
          %s4256 = smul.addr %s4255, 128
          %s4257 = scalar_lea.hbm %s11, %s4256
          %s4258 = sshll.u32 %s4243, 4
          %s4259 = int_to_ptr.vmem [resolvable:$true] %s4258
          %4264 = dma.vmem_to_hbm [thread:$0]  %s4259, 4096, %s4257, %s4240, 128, 128, 8
        $region112: #{_lambda_.1} parent=63 // pred_fallthru
          _
        // Predicated region
        $region113: #{_lambda_.1} parent=63 // pred_check
          %p4265 = pneg %p318
        $region114: #{_lambda_.1} parent=63 // pred_check_branch
          %4267 = sbr.rel (%p4265) target = $region116
        $region115: #{_lambda_.1} parent=63 // pred_region
          %s4269 = ssub.s32 1024, 1024
          %4270 = vsyncadd %s4245, %s4269
          %s4271 = smul.addr %s38, 8
          %s4272 = smul.addr %s4271, 128
          %s4273 = scalar_lea.hbm %s12, %s4272
          %s4274 = sshll.u32 %s4248, 4
          %s4275 = int_to_ptr.vmem [resolvable:$true] %s4274
          %4280 = dma.vmem_to_hbm [thread:$0]  %s4275, 1024, %s4273, %s4245, 128, 128, 8
        $region116: #{_lambda_.1} parent=63 // pred_fallthru
          _
      $region64: #{_lambda_.1} parent=5 // pred_fallthru
        _
      %p4281 = scmp.le.s32.totalorder 2, %s33
      // Predicated region
      $region117: #{_lambda_.1} parent=5 // pred_check
        %p4282 = pneg %p4281
      $region118: #{_lambda_.1} parent=5 // pred_check_branch
        %4284 = sbr.rel (%p4282) target = $region120
      $region119: #{_lambda_.1} parent=5 // pred_region
        %s4285 = ssub.s32 %s33, 2
        // Predicated region
        $region121: #{_lambda_.1} parent=119 // pred_check
          %p4286 = pneg %p298
        $region122: #{_lambda_.1} parent=119 // pred_check_branch
          %4288 = sbr.rel (%p4286) target = $region124
        $region123: #{_lambda_.1} parent=119 // pred_region
          %s4289 = sand.u32 %s283, 1
          %s4290 = scalar_lea.sflag [#allocation4], %s4289
          %s4291 = sand.u32 %s283, 1
          %s4292 = smul.addr %s4291, 256
          %s4293 = scalar_lea.vmem [#allocation20], %s4292
          %4294 = dma.done %s4290, 4096
        $region124: #{_lambda_.1} parent=119 // pred_fallthru
          _
        // Predicated region
        $region125: #{_lambda_.1} parent=119 // pred_check
          %p4295 = pneg %p324
        $region126: #{_lambda_.1} parent=119 // pred_check_branch
          %4297 = sbr.rel (%p4295) target = $region128
        $region127: #{_lambda_.1} parent=119 // pred_region
          %s4298 = sand.u32 %s309, 1
          %s4299 = scalar_lea.sflag [#allocation22], %s4298
          %s4300 = sand.u32 %s309, 1
          %s4301 = smul.addr %s4300, 64
          %s4302 = scalar_lea.vmem [#allocation21], %s4301
          %4303 = dma.done %s4299, 1024
        $region128: #{_lambda_.1} parent=119 // pred_fallthru
          _
      $region120: #{_lambda_.1} parent=5 // pred_fallthru
        _
    $region6: #{_lambda_.1} parent=1 // loop_footer
      %s37 = sadd.s32 1, %s33
    $region7: #{_lambda_.1} parent=1 // loop_footer_branch
      %32 = sbr.rel target = $region3
    $region8: #{_lambda_.1} parent=1 // loop_exit
      _
    %4304 = vsyncpa [#allocation3], 1
    %s4305 = scalar_lea.sflag [#allocation3], 1
    %4306 = vsyncpa %s4305, 1
    %4307 = vsyncpa [#allocation6], 1
    %4308 = vsyncpa [#allocation9], 1
    %4309 = vsyncpa [#allocation12], 1
    %4310 = vsyncpa [#allocation15], 1
    %4311 = vsyncpa [#allocation18], 1
    %4312 = vsyncpa [#allocation4], 1
    %s4313 = scalar_lea.sflag [#allocation4], 1
    %4314 = vsyncpa %s4313, 1
    %4315 = vsyncpa [#allocation22], 1
    %s4316 = scalar_lea.sflag [#allocation22], 1
    %4317 = vsyncpa %s4316, 1

</llo_original>
